<compile_context>
chip_gen: v7x
topology: tpu7x:2x2x1
jax: 0.10.0
libtpu: 0.0.40
codegen_flags: <defaults>
</compile_context>

<pallas_src>
import functools

import jax
import jax.numpy as jnp
import numpy as np
from jax import lax
from jax.experimental import pallas as pl
from jax.experimental.pallas import tpu as pltpu

LN_EPS = 1e-5


# --------------------------- small helpers -----------------------------------

def _pick_tile(dim, target):
    return target if dim % target == 0 else dim


def _mlp_tile(intermediate):
    return _pick_tile(intermediate, 256)


def _vmem_limit_bytes():
    # Size the scoped-VMEM limit from the actual chip (128 MiB on v5e/v6e,
    # 64 MiB on v7x), leaving headroom for double-buffering.
    try:
        cap = pltpu.get_tpu_info().vmem_capacity_bytes
    except Exception:
        cap = 64 * 1024 * 1024
    return int(cap * 3 // 4)


def _cparams(dimension_semantics):
    return pltpu.CompilerParams(dimension_semantics=dimension_semantics,
                                vmem_limit_bytes=_vmem_limit_bytes())


# --------------------------- Pallas kernels ----------------------------------

def _ln_rope_kernel(x_ref, lnw_ref, lnb_ref, cos_ref, sin_ref, perm_ref, rot_ref,
                    *, num_heads, head_dim):
    # LayerNorm (f32) + interleaved rotary, S-tiled; output in bf16.
    x = x_ref[0].astype(jnp.float32)                       # (tS, H)
    mean = jnp.mean(x, axis=-1, keepdims=True)
    var = jnp.mean(jnp.square(x - mean), axis=-1, keepdims=True)
    y = (x - mean) * lax.rsqrt(var + LN_EPS)
    y = y * lnw_ref[...] + lnb_ref[...]
    cos = cos_ref[...]                                     # (tS, hd)
    sin = sin_ref[...]                                     # (tS, hd), sign folded (-sin,+sin)
    perm = perm_ref[...]                                   # (hd, hd) adjacent-pair swap
    # Interleaved RoPE per head:
    #   out[2i]   = y[2i]*cos_i - y[2i+1]*sin_i
    #   out[2i+1] = y[2i+1]*cos_i + y[2i]*sin_i
    # The pair swap y[c] -> y[c^1] is a tiny (hd,hd) 0/1 matmul per head: exact,
    # num_heads x fewer FLOPs than the old full (H,H) perm matmul, and it runs on
    # the otherwise-idle MXU of this memory-bound stage (effectively free).
    for h in range(num_heads):
        sl = slice(h * head_dim, (h + 1) * head_dim)
        y_h = y[:, sl]                                     # (tS, hd)
        y_sw = jnp.dot(y_h, perm, preferred_element_type=jnp.float32)
        rot_ref[0, :, sl] = (y_h * cos + y_sw * sin).astype(rot_ref.dtype)


def _matmul_kernel(a_ref, b_ref, o_ref, acc_ref):
    # Standard tiled matmul: f32 accumulator, single finalize store (v5e-friendly).
    @pl.when(pl.program_id(2) == 0)
    def _():
        acc_ref[...] = jnp.zeros(acc_ref.shape, acc_ref.dtype)

    acc_ref[...] += jnp.dot(a_ref[...], b_ref[...],
                            preferred_element_type=jnp.float32)

    @pl.when(pl.program_id(2) == pl.num_programs(2) - 1)
    def _():
        o_ref[...] = acc_ref[...].astype(o_ref.dtype)


def _flash_attn_kernel(q_ref, kv_ref, o_ref, m_ref, l_ref, acc_ref, *, head_dim):
    # Online-softmax attention over KV tiles; q/k/v sliced out of the qkv block.
    kvi = pl.program_id(3)

    @pl.when(kvi == 0)
    def _():
        m_ref[...] = jnp.full(m_ref.shape, -jnp.inf, m_ref.dtype)
        l_ref[...] = jnp.zeros(l_ref.shape, l_ref.dtype)
        acc_ref[...] = jnp.zeros(acc_ref.shape, acc_ref.dtype)

    q = q_ref[0, 0, :, :head_dim]                          # (tQ, hd) bf16
    k = kv_ref[0, 0, :, head_dim:2 * head_dim]             # (tKV, hd) bf16
    v = kv_ref[0, 0, :, 2 * head_dim:]                     # (tKV, hd) bf16
    s = lax.dot_general(q, k, (((1,), (1,)), ((), ())),    # q @ k^T, f32 acc
                        preferred_element_type=jnp.float32)
    s = s * (1.0 / head_dim ** 0.5)
    m_prev = m_ref[...]
    m_new = jnp.maximum(m_prev, jnp.max(s, axis=-1, keepdims=True))
    alpha = jnp.exp(m_prev - m_new)
    p = jnp.exp(s - m_new)
    l_ref[...] = alpha * l_ref[...] + jnp.sum(p, axis=-1, keepdims=True)
    acc_ref[...] = alpha * acc_ref[...] + jnp.dot(
        p.astype(jnp.bfloat16), v, preferred_element_type=jnp.float32)
    m_ref[...] = m_new

    @pl.when(kvi == pl.num_programs(3) - 1)
    def _():
        o_ref[0, 0] = (acc_ref[...] *
                       pl.reciprocal(l_ref[...], approx=True)).astype(o_ref.dtype)
    # TODO(synk): optional attention-mask / causal-mask path (mask != None) not
    # implemented (module default is mask=None).


def _oproj_mlp_kernel(attn_ref, res_ref, wo_ref, wgu_ref, wdown_ref, out_ref,
                      t_ref, acc_ref, *, tile_i):
    # o_proj once per (b, s-tile), then I-tiled gate/up (single wide dot per tile,
    # columns pre-interleaved) -> silu*up -> down_proj accumulated in f32.
    it = pl.program_id(2)

    @pl.when(it == 0)
    def _():
        t = jnp.dot(attn_ref[0], wo_ref[...], preferred_element_type=jnp.float32)
        t_ref[...] = t.astype(t_ref.dtype)
        acc_ref[...] = jnp.zeros(acc_ref.shape, acc_ref.dtype)

    gu = jnp.dot(t_ref[...], wgu_ref[...], preferred_element_type=jnp.float32)
    gate = gu[:, :tile_i]
    up = gu[:, tile_i:]
    glu = gate * (1.0 / (1.0 + jnp.exp(-gate))) * up       # silu(gate) * up in f32
    acc_ref[...] += jnp.dot(glu.astype(jnp.bfloat16), wdown_ref[...],
                            preferred_element_type=jnp.float32)

    @pl.when(it == pl.num_programs(2) - 1)
    def _():
        out_ref[0] = (acc_ref[...] + res_ref[0]).astype(out_ref.dtype)
    # TODO(synk): at production H, split o_proj out into its own K/N-tiled matmul
    # instead of holding the full (H, H) w_o block in VMEM.


# --------------------------- wrappers -----------------------------------------

def _tiled_matmul(a, b, out_dtype, *, tm, tn, tk):
    M, K = a.shape
    _, N = b.shape
    return pl.pallas_call(
        _matmul_kernel,
        out_shape=jax.ShapeDtypeStruct((M, N), out_dtype),
        grid_spec=pltpu.PrefetchScalarGridSpec(
            num_scalar_prefetch=0,
            grid=(M // tm, N // tn, K // tk),
            in_specs=[pl.BlockSpec((tm, tk), lambda i, j, k: (i, k)),
                      pl.BlockSpec((tk, tn), lambda i, j, k: (k, j))],
            out_specs=pl.BlockSpec((tm, tn), lambda i, j, k: (i, j)),
            scratch_shapes=[pltpu.VMEM((tm, tn), jnp.float32)]),
        compiler_params=_cparams(("parallel", "parallel", "arbitrary")),
    )(a, b)


def llama_decoder_layer(x, params, num_heads):
    B, S, H = x.shape
    hd = H // num_heads
    I = params["w_down"].shape[0]
    bf16 = jnp.bfloat16

    ts = _pick_tile(S, 64)              # sequence tile for LN/RoPE and MLP stages
    tq = _pick_tile(S, 128)             # attention query tile
    tkv = _pick_tile(S, 64)             # attention KV tile (online-softmax steps)
    tm = _pick_tile(B * S, 128)         # qkv matmul tiles
    tn = _pick_tile(3 * H, 256)
    tk = _pick_tile(H, 128)
    ti = _mlp_tile(I)                   # MLP intermediate tile

    # ---- Stage A: LayerNorm + interleaved rotary (bf16 out) ------------------
    rot = pl.pallas_call(
        functools.partial(_ln_rope_kernel, num_heads=num_heads, head_dim=hd),
        out_shape=jax.ShapeDtypeStruct((B, S, H), bf16),
        grid_spec=pltpu.PrefetchScalarGridSpec(
            num_scalar_prefetch=0,
            grid=(B, S // ts),
            in_specs=[
                pl.BlockSpec((1, ts, H), lambda b, si: (b, si, 0)),
                pl.BlockSpec((1, H), lambda b, si: (0, 0)),
                pl.BlockSpec((1, H), lambda b, si: (0, 0)),
                pl.BlockSpec((ts, hd), lambda b, si: (si, 0)),
                pl.BlockSpec((ts, hd), lambda b, si: (si, 0)),
                pl.BlockSpec((hd, hd), lambda b, si: (0, 0)),
            ],
            out_specs=pl.BlockSpec((1, ts, H), lambda b, si: (b, si, 0)),
        ),
        compiler_params=_cparams(("parallel", "parallel")),
    )(x, params["ln_w"], params["ln_b"], params["rope_cos"],
      params["rope_sin"], params["rope_perm_hd"])

    # ---- Stage B: qkv projection as an M/N/K-tiled bf16 matmul ---------------
    qkv = _tiled_matmul(rot.reshape(B * S, H), params["w_qkv"], bf16,
                        tm=tm, tn=tn, tk=tk)

    # Free row-major reinterpretation, identical to torch's .view(B, nh, S, 3*hd);
    # no q/k/v slices are materialized in HBM (the kernel slices them in VMEM).
    qkv_h = qkv.reshape(B, num_heads, S, 3 * hd)

    # ---- Stage C: flash-style attention over KV tiles ------------------------
    attn = pl.pallas_call(
        functools.partial(_flash_attn_kernel, head_dim=hd),
        out_shape=jax.ShapeDtypeStruct((B, num_heads, S, hd), bf16),
        grid_spec=pltpu.PrefetchScalarGridSpec(
            num_scalar_prefetch=0,
            grid=(B, num_heads, S // tq, S // tkv),
            in_specs=[
                pl.BlockSpec((1, 1, tq, 3 * hd),
                             lambda b, h, qi, ki: (b, h, qi, 0)),
                pl.BlockSpec((1, 1, tkv, 3 * hd),
                             lambda b, h, qi, ki: (b, h, ki, 0)),
            ],
            out_specs=pl.BlockSpec((1, 1, tq, hd),
                                   lambda b, h, qi, ki: (b, h, qi, 0)),
            scratch_shapes=[pltpu.VMEM((tq, 1), jnp.float32),
                            pltpu.VMEM((tq, 1), jnp.float32),
                            pltpu.VMEM((tq, hd), jnp.float32)]),
        compiler_params=_cparams(("parallel", "parallel", "parallel", "arbitrary")),
    )(qkv_h, qkv_h)

    attn_flat = attn.reshape(B, S, H)   # free reinterpretation (torch .reshape)

    # ---- Stage D: o_proj + fused gate/up + silu*up + down_proj + residual ----
    out = pl.pallas_call(
        functools.partial(_oproj_mlp_kernel, tile_i=ti),
        out_shape=jax.ShapeDtypeStruct((B, S, H), jnp.float32),
        grid_spec=pltpu.PrefetchScalarGridSpec(
            num_scalar_prefetch=0,
            grid=(B, S // ts, I // ti),
            in_specs=[
                pl.BlockSpec((1, ts, H), lambda b, si, it: (b, si, 0)),
                pl.BlockSpec((1, ts, H), lambda b, si, it: (b, si, 0)),
                pl.BlockSpec((H, H), lambda b, si, it: (0, 0)),
                pl.BlockSpec((H, 2 * ti), lambda b, si, it: (0, it)),
                pl.BlockSpec((ti, H), lambda b, si, it: (it, 0)),
            ],
            out_specs=pl.BlockSpec((1, ts, H), lambda b, si, it: (b, si, 0)),
            scratch_shapes=[pltpu.VMEM((ts, H), bf16),
                            pltpu.VMEM((ts, H), jnp.float32)]),
        compiler_params=_cparams(("parallel", "parallel", "arbitrary")),
    )(attn_flat, x, params["w_o"], params["w_gu_tiled"], params["w_down"])
    return out


# --------------------------- params / rotary tables ---------------------------

def init_params(key, H, I, num_heads, S, theta=10000.0):
    hd = H // num_heads
    ks = jax.random.split(key, 4)
    bf16 = jnp.bfloat16
    w_qkv = (jax.random.normal(ks[0], (H, 3 * H), jnp.float32) * H ** -0.5).astype(bf16)
    w_o = (jax.random.normal(ks[1], (H, H), jnp.float32) * H ** -0.5).astype(bf16)
    w_gu = (jax.random.normal(ks[2], (H, 2 * I), jnp.float32) * H ** -0.5).astype(bf16)
    w_down = (jax.random.normal(ks[3], (I, H), jnp.float32) * I ** -0.5).astype(bf16)
    w_gate, w_up = w_gu[:, :I], w_gu[:, I:]

    # Offline weight relayout: interleave per-I-tile [gate_t | up_t] column blocks
    # so the MLP kernel does a single wide dot per tile and splits in-register.
    ti = _mlp_tile(I)
    ng = I // ti
    w_gu_tiled = jnp.concatenate(
        [w_gate.reshape(H, ng, ti), w_up.reshape(H, ng, ti)], axis=-1
    ).reshape(H, 2 * I)

    ln_w = jnp.ones((1, H), jnp.float32)    # torch LayerNorm default init
    ln_b = jnp.zeros((1, H), jnp.float32)

    # RotaryEmbedding(dim=hidden_size): freqs derived from hidden_size; forward
    # uses only the first head_dim//2 of them (exactly as the torch module does).
    inv_freq = 1.0 / (theta ** (jnp.arange(0, H, 2, dtype=jnp.float32) / H))
    f = inv_freq[: hd // 2]
    t = jnp.arange(S, dtype=jnp.float32)
    ang = jnp.outer(t, f)                              # (S, hd//2)
    cos_hd = jnp.cos(ang)
    sin_hd = jnp.sin(ang)
    rope_cos = jnp.repeat(cos_hd, 2, axis=-1)          # (S, hd) interleaved
    sign = jnp.tile(jnp.array([-1.0, 1.0], jnp.float32), hd // 2)
    rope_sin = jnp.repeat(sin_hd, 2, axis=-1) * sign   # (-sin, +sin) folded sign
    idx = jnp.arange(hd)
    # (x @ perm)[c] == x[c ^ 1]  (adjacent even/odd lane swap within one head)
    rope_perm_hd = (idx[None, :] == (idx[:, None] ^ 1)).astype(jnp.float32)

    return dict(ln_w=ln_w, ln_b=ln_b, w_qkv=w_qkv, w_o=w_o,
                w_gate=w_gate, w_up=w_up, w_gu_tiled=w_gu_tiled, w_down=w_down,
                rope_cos=rope_cos, rope_sin=rope_sin, rope_perm_hd=rope_perm_hd,
                cos_hd=cos_hd, sin_hd=sin_hd)


# --------------------------- pure-JAX reference --------------------------------

def reference(x, params, num_heads):
    B, S, H = x.shape
    hd = H // num_heads
    hp = lax.Precision.HIGHEST
    up32 = lambda w: w.astype(jnp.float32)
    mean = x.mean(-1, keepdims=True)
    var = ((x - mean) ** 2).mean(-1, keepdims=True)
    h = (x - mean) / jnp.sqrt(var + LN_EPS) * params["ln_w"][0] + params["ln_b"][0]
    h5 = h.reshape(B, S, num_heads, hd // 2, 2)
    xr, xi = h5[..., 0], h5[..., 1]
    fr = params["cos_hd"][None, :, None, :]
    fi = params["sin_hd"][None, :, None, :]
    rot = jnp.stack([xr * fr - xi * fi, xr * fi + xi * fr], axis=-1).reshape(B, S, H)
    qkv = jnp.matmul(rot, up32(params["w_qkv"]), precision=hp)
    qkv = qkv.reshape(B, num_heads, S, 3 * hd)
    q, k, v = qkv[..., :hd], qkv[..., hd:2 * hd], qkv[..., 2 * hd:]
    scores = jnp.einsum("bhqd,bhkd->bhqk", q, k, precision=hp) / hd ** 0.5
    probs = jax.nn.softmax(scores, axis=-1)
    ao = jnp.einsum("bhqk,bhkd->bhqd", probs, v, precision=hp).reshape(B, S, H)
    attn = jnp.matmul(ao, up32(params["w_o"]), precision=hp)
    gate = jnp.matmul(attn, up32(params["w_gate"]), precision=hp)
    up = jnp.matmul(attn, up32(params["w_up"]), precision=hp)
    glu = jax.nn.silu(gate) * up
    return jnp.matmul(glu, up32(params["w_down"]), precision=hp) + x


# --------------------------- main ----------------------------------------------

if __name__ == "__main__":
    # Small shapes consistent with the module: (B, S, H), H divisible by num_heads;
    # head_dim = 128 keeps the attention lane dim full-width.
    B, S, H, num_heads, I = 2, 128, 256, 2, 512
    key = jax.random.PRNGKey(0)
    kp, kx = jax.random.split(key)
    params = init_params(kp, H, I, num_heads, S)
    x = jax.random.normal(kx, (B, S, H), jnp.float32)

    fwd = jax.jit(functools.partial(llama_decoder_layer, num_heads=num_heads))
    out = jax.block_until_ready(fwd(x, params))

    ref = reference(x, params, num_heads)
    np.testing.assert_allclose(np.asarray(out), np.asarray(ref),
                               rtol=2e-2, atol=2e-2)
    print("KERNEL_OK")
</pallas_src>

<mosaic_0001>
module attributes {stable_mosaic.version = 11 : i64} {
  func.func @_matmul_kernel(%arg0: i32, %arg1: i32, %arg2: i32, %arg3: memref<128x128xbf16, #tpu.memory_space<vmem>>, %arg4: memref<128x256xbf16, #tpu.memory_space<vmem>>, %arg5: memref<128x256xbf16, #tpu.memory_space<vmem>>, %arg6: memref<128x256xf32, #tpu.memory_space<vmem>>) attributes {dimension_semantics = [#tpu.dimension_semantics<parallel>, #tpu.dimension_semantics<parallel>, #tpu.dimension_semantics<arbitrary>], iteration_bounds = array<i64: 2, 3, 2>, scalar_prefetch = 0 : i64, scratch_operands = 1 : i64, tpu.core_type = #tpu.core_type<tc>, window_params = [{transform_indices = @transform_0, window_bounds = array<i64: 128, 128>}, {transform_indices = @transform_1, window_bounds = array<i64: 128, 256>}, {transform_indices = @transform_2, window_bounds = array<i64: 128, 256>}]} {
    %c0_i32 = arith.constant 0 : i32
    %0 = arith.cmpi eq, %arg2, %c0_i32 : i32
    %1 = arith.extui %0 : i1 to i32
    %c0_i32_0 = arith.constant 0 : i32
    %2 = arith.cmpi ne, %1, %c0_i32_0 : i32
    scf.if %2 {
      %cst_9 = arith.constant 0.000000e+00 : f32
      %12 = vector.broadcast %cst_9 : f32 to vector<128x256xf32>
      %c0_10 = arith.constant 0 : index
      %c0_11 = arith.constant 0 : index
      %13 = vector.load %arg6[%c0_10, %c0_11] : memref<128x256xf32, #tpu.memory_space<vmem>>, vector<128x256xf32>
      tpu.vector_store %arg6[%c0_10, %c0_11], %12 {strides = array<i32>} : memref<128x256xf32, #tpu.memory_space<vmem>>, vector<128x256xf32>,
    } else {
    }
    %c0 = arith.constant 0 : index
    %c0_1 = arith.constant 0 : index
    %3 = vector.load %arg6[%c0, %c0_1] : memref<128x256xf32, #tpu.memory_space<vmem>>, vector<128x256xf32>
    %c0_2 = arith.constant 0 : index
    %c0_3 = arith.constant 0 : index
    %4 = vector.load %arg3[%c0_2, %c0_3] : memref<128x128xbf16, #tpu.memory_space<vmem>>, vector<128x128xbf16>
    %c0_4 = arith.constant 0 : index
    %c0_5 = arith.constant 0 : index
    %5 = vector.load %arg4[%c0_4, %c0_5] : memref<128x256xbf16, #tpu.memory_space<vmem>>, vector<128x256xbf16>
    %cst = arith.constant dense<0.000000e+00> : vector<128x256xf32>
    %6 = tpu.matmul %4, %5, %cst {dimension_numbers = #tpu.dot_dimension_numbers<[1], [0], [0], [1], [0, 0, 1, 1], [], []>} : vector<128x128xbf16>, vector<128x256xbf16>, vector<128x256xf32> -> vector<128x256xf32>
    %7 = arith.addf %3, %6 : vector<128x256xf32>
    %c0_6 = arith.constant 0 : index
    %c0_7 = arith.constant 0 : index
    %8 = vector.load %arg6[%c0_6, %c0_7] : memref<128x256xf32, #tpu.memory_space<vmem>>, vector<128x256xf32>
    tpu.vector_store %arg6[%c0_6, %c0_7], %7 {strides = array<i32>} : memref<128x256xf32, #tpu.memory_space<vmem>>, vector<128x256xf32>,
    %c1_i32 = arith.constant 1 : i32
    %9 = arith.cmpi eq, %arg2, %c1_i32 : i32
    %10 = arith.extui %9 : i1 to i32
    %c0_i32_8 = arith.constant 0 : i32
    %11 = arith.cmpi ne, %10, %c0_i32_8 : i32
    scf.if %11 {
      %c0_9 = arith.constant 0 : index
      %c0_10 = arith.constant 0 : index
      %12 = vector.load %arg6[%c0_9, %c0_10] : memref<128x256xf32, #tpu.memory_space<vmem>>, vector<128x256xf32>
      %13 = arith.truncf %12 : vector<128x256xf32> to vector<128x256xbf16>
      %c0_11 = arith.constant 0 : index
      %c0_12 = arith.constant 0 : index
      %14 = vector.load %arg5[%c0_11, %c0_12] : memref<128x256xbf16, #tpu.memory_space<vmem>>, vector<128x256xbf16>
      tpu.vector_store %arg5[%c0_11, %c0_12], %13 {strides = array<i32>} : memref<128x256xbf16, #tpu.memory_space<vmem>>, vector<128x256xbf16>,
    } else {
    }
    return
  }
  func.func @transform_0(%arg0: i32, %arg1: i32, %arg2: i32) -> (i32, i32) {
    %c0_i32 = arith.constant 0 : i32
    return %arg0, %arg2 : i32, i32
  }
  func.func @transform_1(%arg0: i32, %arg1: i32, %arg2: i32) -> (i32, i32) {
    %c0_i32 = arith.constant 0 : i32
    return %arg2, %arg1 : i32, i32
  }
  func.func @transform_2(%arg0: i32, %arg1: i32, %arg2: i32) -> (i32, i32) {
    %c0_i32 = arith.constant 0 : i32
    return %arg0, %arg1 : i32, i32
  }
}

module attributes {stable_mosaic.version = 11 : i64} {
  func.func @_flash_attn_kernel(%arg0: i32, %arg1: i32, %arg2: i32, %arg3: i32, %arg4: memref<1x1x128x384xbf16, #tpu.memory_space<vmem>>, %arg5: memref<1x1x64x384xbf16, #tpu.memory_space<vmem>>, %arg6: memref<1x1x128x128xbf16, #tpu.memory_space<vmem>>, %arg7: memref<128x1xf32, #tpu.memory_space<vmem>>, %arg8: memref<128x1xf32, #tpu.memory_space<vmem>>, %arg9: memref<128x128xf32, #tpu.memory_space<vmem>>) attributes {dimension_semantics = [#tpu.dimension_semantics<parallel>, #tpu.dimension_semantics<parallel>, #tpu.dimension_semantics<parallel>, #tpu.dimension_semantics<arbitrary>], iteration_bounds = array<i64: 2, 2, 1, 2>, scalar_prefetch = 0 : i64, scratch_operands = 3 : i64, tpu.core_type = #tpu.core_type<tc>, window_params = [{transform_indices = @transform_0, window_bounds = array<i64: 1, 1, 128, 384>}, {transform_indices = @transform_1, window_bounds = array<i64: 1, 1, 64, 384>}, {transform_indices = @transform_2, window_bounds = array<i64: 1, 1, 128, 128>}]} {
    %c0_i32 = arith.constant 0 : i32
    %0 = arith.cmpi eq, %arg3, %c0_i32 : i32
    %1 = arith.extui %0 : i1 to i32
    %c0_i32_0 = arith.constant 0 : i32
    %2 = arith.cmpi ne, %1, %c0_i32_0 : i32
    scf.if %2 {
      %cst_27 = arith.constant 0xFF800000 : f32
      %38 = vector.broadcast %cst_27 : f32 to vector<128x1xf32>
      %c0_28 = arith.constant 0 : index
      %c0_29 = arith.constant 0 : index
      %39 = vector.load %arg7[%c0_28, %c0_29] : memref<128x1xf32, #tpu.memory_space<vmem>>, vector<128x1xf32>
      tpu.vector_store %arg7[%c0_28, %c0_29], %38 {strides = array<i32>} : memref<128x1xf32, #tpu.memory_space<vmem>>, vector<128x1xf32>,
      %cst_30 = arith.constant 0.000000e+00 : f32
      %40 = vector.broadcast %cst_30 : f32 to vector<128x1xf32>
      %c0_31 = arith.constant 0 : index
      %c0_32 = arith.constant 0 : index
      %41 = vector.load %arg8[%c0_31, %c0_32] : memref<128x1xf32, #tpu.memory_space<vmem>>, vector<128x1xf32>
      tpu.vector_store %arg8[%c0_31, %c0_32], %40 {strides = array<i32>} : memref<128x1xf32, #tpu.memory_space<vmem>>, vector<128x1xf32>,
      %cst_33 = arith.constant 0.000000e+00 : f32
      %42 = vector.broadcast %cst_33 : f32 to vector<128x128xf32>
      %c0_34 = arith.constant 0 : index
      %c0_35 = arith.constant 0 : index
      %43 = vector.load %arg9[%c0_34, %c0_35] : memref<128x128xf32, #tpu.memory_space<vmem>>, vector<128x128xf32>
      tpu.vector_store %arg9[%c0_34, %c0_35], %42 {strides = array<i32>} : memref<128x128xf32, #tpu.memory_space<vmem>>, vector<128x128xf32>,
    } else {
    }
    %c0 = arith.constant 0 : index
    %c0_1 = arith.constant 0 : index
    %c0_2 = arith.constant 0 : index
    %c0_3 = arith.constant 0 : index
    %3 = vector.load %arg4[%c0, %c0_1, %c0_2, %c0_3] : memref<1x1x128x384xbf16, #tpu.memory_space<vmem>>, vector<1x1x128x128xbf16>
    %4 = vector.shape_cast %3 : vector<1x1x128x128xbf16> to vector<128x128xbf16>
    %c0_4 = arith.constant 0 : index
    %c0_5 = arith.constant 0 : index
    %c0_6 = arith.constant 0 : index
    %c128 = arith.constant 128 : index
    %5 = vector.load %arg5[%c0_4, %c0_5, %c0_6, %c128] : memref<1x1x64x384xbf16, #tpu.memory_space<vmem>>, vector<1x1x64x128xbf16>
    %6 = vector.shape_cast %5 : vector<1x1x64x128xbf16> to vector<64x128xbf16>
    %c0_7 = arith.constant 0 : index
    %c0_8 = arith.constant 0 : index
    %c0_9 = arith.constant 0 : index
    %c256 = arith.constant 256 : index
    %7 = vector.load %arg5[%c0_7, %c0_8, %c0_9, %c256] : memref<1x1x64x384xbf16, #tpu.memory_space<vmem>>, vector<1x1x64x128xbf16>
    %8 = vector.shape_cast %7 : vector<1x1x64x128xbf16> to vector<64x128xbf16>
    %cst = arith.constant dense<0.000000e+00> : vector<128x64xf32>
    %9 = tpu.matmul %4, %6, %cst {dimension_numbers = #tpu.dot_dimension_numbers<[1], [1], [0], [0], [0, 0, 1, 0], [], []>} : vector<128x128xbf16>, vector<64x128xbf16>, vector<128x64xf32> -> vector<128x64xf32>
    %cst_10 = arith.constant 0.0883883461 : f32
    %10 = vector.broadcast %cst_10 : f32 to vector<128x64xf32>
    %11 = arith.mulf %9, %10 : vector<128x64xf32>
    %c0_11 = arith.constant 0 : index
    %c0_12 = arith.constant 0 : index
    %12 = vector.load %arg7[%c0_11, %c0_12] : memref<128x1xf32, #tpu.memory_space<vmem>>, vector<128x1xf32>
    %cst_13 = arith.constant dense<0xFF800000> : vector<128xf32>
    %13 = vector.multi_reduction <maximumf>, %11, %cst_13 [1] : vector<128x64xf32> to vector<128xf32>
    %14 = vector.shape_cast %13 : vector<128xf32> to vector<128x1xf32>
    %15 = arith.maximumf %12, %14 : vector<128x1xf32>
    %16 = arith.subf %12, %15 : vector<128x1xf32>
    %17 = math.exp %16 : vector<128x1xf32>
    %18 = vector.broadcast %15 : vector<128x1xf32> to vector<128x64xf32>
    %19 = arith.subf %11, %18 : vector<128x64xf32>
    %20 = math.exp %19 : vector<128x64xf32>
    %c0_14 = arith.constant 0 : index
    %c0_15 = arith.constant 0 : index
    %21 = vector.load %arg8[%c0_14, %c0_15] : memref<128x1xf32, #tpu.memory_space<vmem>>, vector<128x1xf32>
    %22 = arith.mulf %17, %21 : vector<128x1xf32>
    %cst_16 = arith.constant dense<0.000000e+00> : vector<128xf32>
    %23 = vector.multi_reduction <add>, %20, %cst_16 [1] : vector<128x64xf32> to vector<128xf32>
    %24 = vector.shape_cast %23 : vector<128xf32> to vector<128x1xf32>
    %25 = arith.addf %22, %24 : vector<128x1xf32>
    %c0_17 = arith.constant 0 : index
    %c0_18 = arith.constant 0 : index
    %26 = vector.load %arg8[%c0_17, %c0_18] : memref<128x1xf32, #tpu.memory_space<vmem>>, vector<128x1xf32>
    tpu.vector_store %arg8[%c0_17, %c0_18], %25 {strides = array<i32>} : memref<128x1xf32, #tpu.memory_space<vmem>>, vector<128x1xf32>,
    %c0_19 = arith.constant 0 : index
    %c0_20 = arith.constant 0 : index
    %27 = vector.load %arg9[%c0_19, %c0_20] : memref<128x128xf32, #tpu.memory_space<vmem>>, vector<128x128xf32>
    %28 = vector.broadcast %17 : vector<128x1xf32> to vector<128x128xf32>
    %29 = arith.mulf %28, %27 : vector<128x128xf32>
    %30 = arith.truncf %20 : vector<128x64xf32> to vector<128x64xbf16>
    %cst_21 = arith.constant dense<0.000000e+00> : vector<128x128xf32>
    %31 = tpu.matmul %30, %8, %cst_21 {dimension_numbers = #tpu.dot_dimension_numbers<[1], [0], [0], [1], [0, 0, 1, 1], [], []>} : vector<128x64xbf16>, vector<64x128xbf16>, vector<128x128xf32> -> vector<128x128xf32>
    %32 = arith.addf %29, %31 : vector<128x128xf32>
    %c0_22 = arith.constant 0 : index
    %c0_23 = arith.constant 0 : index
    %33 = vector.load %arg9[%c0_22, %c0_23] : memref<128x128xf32, #tpu.memory_space<vmem>>, vector<128x128xf32>
    tpu.vector_store %arg9[%c0_22, %c0_23], %32 {strides = array<i32>} : memref<128x128xf32, #tpu.memory_space<vmem>>, vector<128x128xf32>,
    %c0_24 = arith.constant 0 : index
    %c0_25 = arith.constant 0 : index
    %34 = vector.load %arg7[%c0_24, %c0_25] : memref<128x1xf32, #tpu.memory_space<vmem>>, vector<128x1xf32>
    tpu.vector_store %arg7[%c0_24, %c0_25], %15 {strides = array<i32>} : memref<128x1xf32, #tpu.memory_space<vmem>>, vector<128x1xf32>,
    %c1_i32 = arith.constant 1 : i32
    %35 = arith.cmpi eq, %arg3, %c1_i32 : i32
    %36 = arith.extui %35 : i1 to i32
    %c0_i32_26 = arith.constant 0 : i32
    %37 = arith.cmpi ne, %36, %c0_i32_26 : i32
    scf.if %37 {
      %c0_27 = arith.constant 0 : index
      %c0_28 = arith.constant 0 : index
      %38 = vector.load %arg9[%c0_27, %c0_28] : memref<128x128xf32, #tpu.memory_space<vmem>>, vector<128x128xf32>
      %c0_29 = arith.constant 0 : index
      %c0_30 = arith.constant 0 : index
      %39 = vector.load %arg8[%c0_29, %c0_30] : memref<128x1xf32, #tpu.memory_space<vmem>>, vector<128x1xf32>
      %40 = tpu.reciprocal %39 {approx = true} : vector<128x1xf32> -> vector<128x1xf32>
      %41 = vector.broadcast %40 : vector<128x1xf32> to vector<128x128xf32>
      %42 = arith.mulf %38, %41 : vector<128x128xf32>
      %43 = arith.truncf %42 : vector<128x128xf32> to vector<128x128xbf16>
      %c0_31 = arith.constant 0 : index
      %c0_32 = arith.constant 0 : index
      %c0_33 = arith.constant 0 : index
      %c0_34 = arith.constant 0 : index
      %44 = vector.load %arg6[%c0_31, %c0_32, %c0_33, %c0_34] : memref<1x1x128x128xbf16, #tpu.memory_space<vmem>>, vector<1x1x128x128xbf16>
      %45 = vector.shape_cast %44 : vector<1x1x128x128xbf16> to vector<128x128xbf16>
      %46 = vector.shape_cast %43 : vector<128x128xbf16> to vector<1x1x128x128xbf16>
      tpu.vector_store %arg6[%c0_31, %c0_32, %c0_33, %c0_34], %46 {strides = array<i32>} : memref<1x1x128x128xbf16, #tpu.memory_space<vmem>>, vector<1x1x128x128xbf16>,
    } else {
    }
    return
  }
  func.func @transform_0(%arg0: i32, %arg1: i32, %arg2: i32, %arg3: i32) -> (i32, i32, i32, i32) {
    %c0_i32 = arith.constant 0 : i32
    %c0_i32_0 = arith.constant 0 : i32
    return %arg0, %arg1, %arg2, %c0_i32 : i32, i32, i32, i32
  }
  func.func @transform_1(%arg0: i32, %arg1: i32, %arg2: i32, %arg3: i32) -> (i32, i32, i32, i32) {
    %c0_i32 = arith.constant 0 : i32
    %c0_i32_0 = arith.constant 0 : i32
    return %arg0, %arg1, %arg3, %c0_i32 : i32, i32, i32, i32
  }
  func.func @transform_2(%arg0: i32, %arg1: i32, %arg2: i32, %arg3: i32) -> (i32, i32, i32, i32) {
    %c0_i32 = arith.constant 0 : i32
    %c0_i32_0 = arith.constant 0 : i32
    return %arg0, %arg1, %arg2, %c0_i32 : i32, i32, i32, i32
  }
}

module attributes {stable_mosaic.version = 11 : i64} {
  func.func @_ln_rope_kernel(%arg0: i32, %arg1: i32, %arg2: memref<1x64x256xf32, #tpu.memory_space<vmem>>, %arg3: memref<1x256xf32, #tpu.memory_space<vmem>>, %arg4: memref<1x256xf32, #tpu.memory_space<vmem>>, %arg5: memref<64x128xf32, #tpu.memory_space<vmem>>, %arg6: memref<64x128xf32, #tpu.memory_space<vmem>>, %arg7: memref<128x128xf32, #tpu.memory_space<vmem>>, %arg8: memref<1x64x256xbf16, #tpu.memory_space<vmem>>) attributes {dimension_semantics = [#tpu.dimension_semantics<parallel>, #tpu.dimension_semantics<parallel>], iteration_bounds = array<i64: 2, 2>, scalar_prefetch = 0 : i64, scratch_operands = 0 : i64, tpu.core_type = #tpu.core_type<tc>, window_params = [{transform_indices = @transform_0, window_bounds = array<i64: 1, 64, 256>}, {pipeline_mode = #tpu.pipeline_mode<synchronous>, transform_indices = @transform_1, window_bounds = array<i64: 1, 256>}, {pipeline_mode = #tpu.pipeline_mode<synchronous>, transform_indices = @transform_2, window_bounds = array<i64: 1, 256>}, {transform_indices = @transform_3, window_bounds = array<i64: 64, 128>}, {transform_indices = @transform_4, window_bounds = array<i64: 64, 128>}, {pipeline_mode = #tpu.pipeline_mode<synchronous>, transform_indices = @transform_5, window_bounds = array<i64: 128, 128>}, {transform_indices = @transform_6, window_bounds = array<i64: 1, 64, 256>}]} {
    %c0 = arith.constant 0 : index
    %c0_0 = arith.constant 0 : index
    %c0_1 = arith.constant 0 : index
    %0 = vector.load %arg2[%c0, %c0_0, %c0_1] : memref<1x64x256xf32, #tpu.memory_space<vmem>>, vector<1x64x256xf32>
    %1 = vector.shape_cast %0 : vector<1x64x256xf32> to vector<64x256xf32>
    %cst = arith.constant dense<0.000000e+00> : vector<64xf32>
    %2 = vector.multi_reduction <add>, %1, %cst [1] : vector<64x256xf32> to vector<64xf32>
    %3 = vector.shape_cast %2 : vector<64xf32> to vector<64x1xf32>
    %cst_2 = arith.constant 2.560000e+02 : f32
    %4 = vector.broadcast %cst_2 : f32 to vector<64x1xf32>
    %5 = arith.divf %3, %4 : vector<64x1xf32>
    %6 = vector.broadcast %5 : vector<64x1xf32> to vector<64x256xf32>
    %7 = arith.subf %1, %6 : vector<64x256xf32>
    %8 = arith.mulf %7, %7 : vector<64x256xf32>
    %cst_3 = arith.constant dense<0.000000e+00> : vector<64xf32>
    %9 = vector.multi_reduction <add>, %8, %cst_3 [1] : vector<64x256xf32> to vector<64xf32>
    %10 = vector.shape_cast %9 : vector<64xf32> to vector<64x1xf32>
    %cst_4 = arith.constant 2.560000e+02 : f32
    %11 = vector.broadcast %cst_4 : f32 to vector<64x1xf32>
    %12 = arith.divf %10, %11 : vector<64x1xf32>
    %13 = vector.broadcast %5 : vector<64x1xf32> to vector<64x256xf32>
    %14 = arith.subf %1, %13 : vector<64x256xf32>
    %cst_5 = arith.constant 9.99999974E-6 : f32
    %15 = vector.broadcast %cst_5 : f32 to vector<64x1xf32>
    %16 = arith.addf %12, %15 : vector<64x1xf32>
    %17 = math.rsqrt %16 : vector<64x1xf32>
    %18 = vector.broadcast %17 : vector<64x1xf32> to vector<64x256xf32>
    %19 = arith.mulf %14, %18 : vector<64x256xf32>
    %c0_6 = arith.constant 0 : index
    %c0_7 = arith.constant 0 : index
    %20 = vector.load %arg3[%c0_6, %c0_7] : memref<1x256xf32, #tpu.memory_space<vmem>>, vector<1x256xf32>
    %21 = vector.broadcast %20 : vector<1x256xf32> to vector<64x256xf32>
    %22 = arith.mulf %19, %21 : vector<64x256xf32>
    %c0_8 = arith.constant 0 : index
    %c0_9 = arith.constant 0 : index
    %23 = vector.load %arg4[%c0_8, %c0_9] : memref<1x256xf32, #tpu.memory_space<vmem>>, vector<1x256xf32>
    %24 = vector.broadcast %23 : vector<1x256xf32> to vector<64x256xf32>
    %25 = arith.addf %22, %24 : vector<64x256xf32>
    %c0_10 = arith.constant 0 : index
    %c0_11 = arith.constant 0 : index
    %26 = vector.load %arg5[%c0_10, %c0_11] : memref<64x128xf32, #tpu.memory_space<vmem>>, vector<64x128xf32>
    %c0_12 = arith.constant 0 : index
    %c0_13 = arith.constant 0 : index
    %27 = vector.load %arg6[%c0_12, %c0_13] : memref<64x128xf32, #tpu.memory_space<vmem>>, vector<64x128xf32>
    %c0_14 = arith.constant 0 : index
    %c0_15 = arith.constant 0 : index
    %28 = vector.load %arg7[%c0_14, %c0_15] : memref<128x128xf32, #tpu.memory_space<vmem>>, vector<128x128xf32>
    %29 = vector.extract_strided_slice %25 {offsets = [0, 0], sizes = [64, 128], strides = [1, 1]} : vector<64x256xf32> to vector<64x128xf32>
    %cst_16 = arith.constant dense<0.000000e+00> : vector<64x128xf32>
    %30 = tpu.matmul %29, %28, %cst_16 {dimension_numbers = #tpu.dot_dimension_numbers<[1], [0], [0], [1], [0, 0, 1, 1], [], []>} : vector<64x128xf32>, vector<128x128xf32>, vector<64x128xf32> -> vector<64x128xf32>
    %31 = arith.mulf %29, %26 : vector<64x128xf32>
    %32 = arith.mulf %30, %27 : vector<64x128xf32>
    %33 = arith.addf %31, %32 : vector<64x128xf32>
    %34 = arith.truncf %33 : vector<64x128xf32> to vector<64x128xbf16>
    %c0_17 = arith.constant 0 : index
    %c0_18 = arith.constant 0 : index
    %c0_19 = arith.constant 0 : index
    %35 = vector.load %arg8[%c0_17, %c0_18, %c0_19] : memref<1x64x256xbf16, #tpu.memory_space<vmem>>, vector<1x64x128xbf16>
    %36 = vector.shape_cast %35 : vector<1x64x128xbf16> to vector<64x128xbf16>
    %37 = vector.shape_cast %34 : vector<64x128xbf16> to vector<1x64x128xbf16>
    tpu.vector_store %arg8[%c0_17, %c0_18, %c0_19], %37 {strides = array<i32>} : memref<1x64x256xbf16, #tpu.memory_space<vmem>>, vector<1x64x128xbf16>,
    %38 = vector.extract_strided_slice %25 {offsets = [0, 128], sizes = [64, 128], strides = [1, 1]} : vector<64x256xf32> to vector<64x128xf32>
    %cst_20 = arith.constant dense<0.000000e+00> : vector<64x128xf32>
    %39 = tpu.matmul %38, %28, %cst_20 {dimension_numbers = #tpu.dot_dimension_numbers<[1], [0], [0], [1], [0, 0, 1, 1], [], []>} : vector<64x128xf32>, vector<128x128xf32>, vector<64x128xf32> -> vector<64x128xf32>
    %40 = arith.mulf %38, %26 : vector<64x128xf32>
    %41 = arith.mulf %39, %27 : vector<64x128xf32>
    %42 = arith.addf %40, %41 : vector<64x128xf32>
    %43 = arith.truncf %42 : vector<64x128xf32> to vector<64x128xbf16>
    %c0_21 = arith.constant 0 : index
    %c0_22 = arith.constant 0 : index
    %c128 = arith.constant 128 : index
    %44 = vector.load %arg8[%c0_21, %c0_22, %c128] : memref<1x64x256xbf16, #tpu.memory_space<vmem>>, vector<1x64x128xbf16>
    %45 = vector.shape_cast %44 : vector<1x64x128xbf16> to vector<64x128xbf16>
    %46 = vector.shape_cast %43 : vector<64x128xbf16> to vector<1x64x128xbf16>
    tpu.vector_store %arg8[%c0_21, %c0_22, %c128], %46 {strides = array<i32>} : memref<1x64x256xbf16, #tpu.memory_space<vmem>>, vector<1x64x128xbf16>,
    return
  }
  func.func @transform_0(%arg0: i32, %arg1: i32) -> (i32, i32, i32) {
    %c0_i32 = arith.constant 0 : i32
    %c0_i32_0 = arith.constant 0 : i32
    return %arg0, %arg1, %c0_i32 : i32, i32, i32
  }
  func.func @transform_1(%arg0: i32, %arg1: i32) -> (i32, i32) {
    %c0_i32 = arith.constant 0 : i32
    %c0_i32_0 = arith.constant 0 : i32
    %c0_i32_1 = arith.constant 0 : i32
    return %c0_i32, %c0_i32_0 : i32, i32
  }
  func.func @transform_2(%arg0: i32, %arg1: i32) -> (i32, i32) {
    %c0_i32 = arith.constant 0 : i32
    %c0_i32_0 = arith.constant 0 : i32
    %c0_i32_1 = arith.constant 0 : i32
    return %c0_i32, %c0_i32_0 : i32, i32
  }
  func.func @transform_3(%arg0: i32, %arg1: i32) -> (i32, i32) {
    %c0_i32 = arith.constant 0 : i32
    %c0_i32_0 = arith.constant 0 : i32
    return %arg1, %c0_i32 : i32, i32
  }
  func.func @transform_4(%arg0: i32, %arg1: i32) -> (i32, i32) {
    %c0_i32 = arith.constant 0 : i32
    %c0_i32_0 = arith.constant 0 : i32
    return %arg1, %c0_i32 : i32, i32
  }
  func.func @transform_5(%arg0: i32, %arg1: i32) -> (i32, i32) {
    %c0_i32 = arith.constant 0 : i32
    %c0_i32_0 = arith.constant 0 : i32
    %c0_i32_1 = arith.constant 0 : i32
    return %c0_i32, %c0_i32_0 : i32, i32
  }
  func.func @transform_6(%arg0: i32, %arg1: i32) -> (i32, i32, i32) {
    %c0_i32 = arith.constant 0 : i32
    %c0_i32_0 = arith.constant 0 : i32
    return %arg0, %arg1, %c0_i32 : i32, i32, i32
  }
}

module attributes {stable_mosaic.version = 11 : i64} {
  func.func @_oproj_mlp_kernel(%arg0: i32, %arg1: i32, %arg2: i32, %arg3: memref<1x64x256xbf16, #tpu.memory_space<vmem>>, %arg4: memref<1x64x256xf32, #tpu.memory_space<vmem>>, %arg5: memref<256x256xbf16, #tpu.memory_space<vmem>>, %arg6: memref<256x512xbf16, #tpu.memory_space<vmem>>, %arg7: memref<256x256xbf16, #tpu.memory_space<vmem>>, %arg8: memref<1x64x256xf32, #tpu.memory_space<vmem>>, %arg9: memref<64x256xbf16, #tpu.memory_space<vmem>>, %arg10: memref<64x256xf32, #tpu.memory_space<vmem>>) attributes {dimension_semantics = [#tpu.dimension_semantics<parallel>, #tpu.dimension_semantics<parallel>, #tpu.dimension_semantics<arbitrary>], iteration_bounds = array<i64: 2, 2, 2>, scalar_prefetch = 0 : i64, scratch_operands = 2 : i64, tpu.core_type = #tpu.core_type<tc>, window_params = [{transform_indices = @transform_0, window_bounds = array<i64: 1, 64, 256>}, {transform_indices = @transform_1, window_bounds = array<i64: 1, 64, 256>}, {pipeline_mode = #tpu.pipeline_mode<synchronous>, transform_indices = @transform_2, window_bounds = array<i64: 256, 256>}, {transform_indices = @transform_3, window_bounds = array<i64: 256, 512>}, {transform_indices = @transform_4, window_bounds = array<i64: 256, 256>}, {transform_indices = @transform_5, window_bounds = array<i64: 1, 64, 256>}]} {
    %c0_i32 = arith.constant 0 : i32
    %0 = arith.cmpi eq, %arg2, %c0_i32 : i32
    %1 = arith.extui %0 : i1 to i32
    %c0_i32_0 = arith.constant 0 : i32
    %2 = arith.cmpi ne, %1, %c0_i32_0 : i32
    scf.if %2 {
      %c0_15 = arith.constant 0 : index
      %c0_16 = arith.constant 0 : index
      %c0_17 = arith.constant 0 : index
      %26 = vector.load %arg3[%c0_15, %c0_16, %c0_17] : memref<1x64x256xbf16, #tpu.memory_space<vmem>>, vector<1x64x256xbf16>
      %27 = vector.shape_cast %26 : vector<1x64x256xbf16> to vector<64x256xbf16>
      %c0_18 = arith.constant 0 : index
      %c0_19 = arith.constant 0 : index
      %28 = vector.load %arg5[%c0_18, %c0_19] : memref<256x256xbf16, #tpu.memory_space<vmem>>, vector<256x256xbf16>
      %cst_20 = arith.constant dense<0.000000e+00> : vector<64x256xf32>
      %29 = tpu.matmul %27, %28, %cst_20 {dimension_numbers = #tpu.dot_dimension_numbers<[1], [0], [0], [1], [0, 0, 1, 1], [], []>} : vector<64x256xbf16>, vector<256x256xbf16>, vector<64x256xf32> -> vector<64x256xf32>
      %30 = arith.truncf %29 : vector<64x256xf32> to vector<64x256xbf16>
      %c0_21 = arith.constant 0 : index
      %c0_22 = arith.constant 0 : index
      %31 = vector.load %arg9[%c0_21, %c0_22] : memref<64x256xbf16, #tpu.memory_space<vmem>>, vector<64x256xbf16>
      tpu.vector_store %arg9[%c0_21, %c0_22], %30 {strides = array<i32>} : memref<64x256xbf16, #tpu.memory_space<vmem>>, vector<64x256xbf16>,
      %cst_23 = arith.constant 0.000000e+00 : f32
      %32 = vector.broadcast %cst_23 : f32 to vector<64x256xf32>
      %c0_24 = arith.constant 0 : index
      %c0_25 = arith.constant 0 : index
      %33 = vector.load %arg10[%c0_24, %c0_25] : memref<64x256xf32, #tpu.memory_space<vmem>>, vector<64x256xf32>
      tpu.vector_store %arg10[%c0_24, %c0_25], %32 {strides = array<i32>} : memref<64x256xf32, #tpu.memory_space<vmem>>, vector<64x256xf32>,
    } else {
    }
    %c0 = arith.constant 0 : index
    %c0_1 = arith.constant 0 : index
    %3 = vector.load %arg9[%c0, %c0_1] : memref<64x256xbf16, #tpu.memory_space<vmem>>, vector<64x256xbf16>
    %c0_2 = arith.constant 0 : index
    %c0_3 = arith.constant 0 : index
    %4 = vector.load %arg6[%c0_2, %c0_3] : memref<256x512xbf16, #tpu.memory_space<vmem>>, vector<256x512xbf16>
    %cst = arith.constant dense<0.000000e+00> : vector<64x512xf32>
    %5 = tpu.matmul %3, %4, %cst {dimension_numbers = #tpu.dot_dimension_numbers<[1], [0], [0], [1], [0, 0, 1, 1], [], []>} : vector<64x256xbf16>, vector<256x512xbf16>, vector<64x512xf32> -> vector<64x512xf32>
    %6 = vector.extract_strided_slice %5 {offsets = [0, 0], sizes = [64, 256], strides = [1, 1]} : vector<64x512xf32> to vector<64x256xf32>
    %7 = vector.extract_strided_slice %5 {offsets = [0, 256], sizes = [64, 256], strides = [1, 1]} : vector<64x512xf32> to vector<64x256xf32>
    %cst_4 = arith.constant 0.000000e+00 : f32
    %8 = vector.broadcast %cst_4 : f32 to vector<64x256xf32>
    %9 = arith.subf %8, %6 : vector<64x256xf32>
    %10 = math.exp %9 : vector<64x256xf32>
    %cst_5 = arith.constant 1.000000e+00 : f32
    %11 = vector.broadcast %cst_5 : f32 to vector<64x256xf32>
    %12 = arith.addf %11, %10 : vector<64x256xf32>
    %cst_6 = arith.constant 1.000000e+00 : f32
    %13 = vector.broadcast %cst_6 : f32 to vector<64x256xf32>
    %14 = arith.divf %13, %12 : vector<64x256xf32>
    %15 = arith.mulf %6, %14 : vector<64x256xf32>
    %16 = arith.mulf %15, %7 : vector<64x256xf32>
    %c0_7 = arith.constant 0 : index
    %c0_8 = arith.constant 0 : index
    %17 = vector.load %arg10[%c0_7, %c0_8] : memref<64x256xf32, #tpu.memory_space<vmem>>, vector<64x256xf32>
    %18 = arith.truncf %16 : vector<64x256xf32> to vector<64x256xbf16>
    %c0_9 = arith.constant 0 : index
    %c0_10 = arith.constant 0 : index
    %19 = vector.load %arg7[%c0_9, %c0_10] : memref<256x256xbf16, #tpu.memory_space<vmem>>, vector<256x256xbf16>
    %cst_11 = arith.constant dense<0.000000e+00> : vector<64x256xf32>
    %20 = tpu.matmul %18, %19, %cst_11 {dimension_numbers = #tpu.dot_dimension_numbers<[1], [0], [0], [1], [0, 0, 1, 1], [], []>} : vector<64x256xbf16>, vector<256x256xbf16>, vector<64x256xf32> -> vector<64x256xf32>
    %21 = arith.addf %17, %20 : vector<64x256xf32>
    %c0_12 = arith.constant 0 : index
    %c0_13 = arith.constant 0 : index
    %22 = vector.load %arg10[%c0_12, %c0_13] : memref<64x256xf32, #tpu.memory_space<vmem>>, vector<64x256xf32>
    tpu.vector_store %arg10[%c0_12, %c0_13], %21 {strides = array<i32>} : memref<64x256xf32, #tpu.memory_space<vmem>>, vector<64x256xf32>,
    %c1_i32 = arith.constant 1 : i32
    %23 = arith.cmpi eq, %arg2, %c1_i32 : i32
    %24 = arith.extui %23 : i1 to i32
    %c0_i32_14 = arith.constant 0 : i32
    %25 = arith.cmpi ne, %24, %c0_i32_14 : i32
    scf.if %25 {
      %c0_15 = arith.constant 0 : index
      %c0_16 = arith.constant 0 : index
      %26 = vector.load %arg10[%c0_15, %c0_16] : memref<64x256xf32, #tpu.memory_space<vmem>>, vector<64x256xf32>
      %c0_17 = arith.constant 0 : index
      %c0_18 = arith.constant 0 : index
      %c0_19 = arith.constant 0 : index
      %27 = vector.load %arg4[%c0_17, %c0_18, %c0_19] : memref<1x64x256xf32, #tpu.memory_space<vmem>>, vector<1x64x256xf32>
      %28 = vector.shape_cast %27 : vector<1x64x256xf32> to vector<64x256xf32>
      %29 = arith.addf %26, %28 : vector<64x256xf32>
      %c0_20 = arith.constant 0 : index
      %c0_21 = arith.constant 0 : index
      %c0_22 = arith.constant 0 : index
      %30 = vector.load %arg8[%c0_20, %c0_21, %c0_22] : memref<1x64x256xf32, #tpu.memory_space<vmem>>, vector<1x64x256xf32>
      %31 = vector.shape_cast %30 : vector<1x64x256xf32> to vector<64x256xf32>
      %32 = vector.shape_cast %29 : vector<64x256xf32> to vector<1x64x256xf32>
      tpu.vector_store %arg8[%c0_20, %c0_21, %c0_22], %32 {strides = array<i32>} : memref<1x64x256xf32, #tpu.memory_space<vmem>>, vector<1x64x256xf32>,
    } else {
    }
    return
  }
  func.func @transform_0(%arg0: i32, %arg1: i32, %arg2: i32) -> (i32, i32, i32) {
    %c0_i32 = arith.constant 0 : i32
    %c0_i32_0 = arith.constant 0 : i32
    return %arg0, %arg1, %c0_i32 : i32, i32, i32
  }
  func.func @transform_1(%arg0: i32, %arg1: i32, %arg2: i32) -> (i32, i32, i32) {
    %c0_i32 = arith.constant 0 : i32
    %c0_i32_0 = arith.constant 0 : i32
    return %arg0, %arg1, %c0_i32 : i32, i32, i32
  }
  func.func @transform_2(%arg0: i32, %arg1: i32, %arg2: i32) -> (i32, i32) {
    %c0_i32 = arith.constant 0 : i32
    %c0_i32_0 = arith.constant 0 : i32
    %c0_i32_1 = arith.constant 0 : i32
    return %c0_i32, %c0_i32_0 : i32, i32
  }
  func.func @transform_3(%arg0: i32, %arg1: i32, %arg2: i32) -> (i32, i32) {
    %c0_i32 = arith.constant 0 : i32
    %c0_i32_0 = arith.constant 0 : i32
    return %c0_i32, %arg2 : i32, i32
  }
  func.func @transform_4(%arg0: i32, %arg1: i32, %arg2: i32) -> (i32, i32) {
    %c0_i32 = arith.constant 0 : i32
    %c0_i32_0 = arith.constant 0 : i32
    return %arg2, %c0_i32 : i32, i32
  }
  func.func @transform_5(%arg0: i32, %arg1: i32, %arg2: i32) -> (i32, i32, i32) {
    %c0_i32 = arith.constant 0 : i32
    %c0_i32_0 = arith.constant 0 : i32
    return %arg0, %arg1, %c0_i32 : i32, i32, i32
  }
}

</mosaic_0001>

<llo_original>
// kernel: llama_decoder_layer.4
$region0: #{llama_decoder_layer.4}
  #allocation0 [shape = 'u32[]', space=smem, size = 0x4, offset = 0x4, fixed_abs, tag = 'smem constant byte address 0x4 - core index']
  #allocation1 [shape = 'u32[144,128]{1,0:T(1,128)}', space=vmem, size = 0x12000, scoped, tag = 'internal scratch']
  %s0 = inlined_call_operand.hbm [shape: f32[2,128,256], index: 0, kind: input, shape index: {}]
  %s1 = inlined_call_operand.hbm [shape: f32[1,256], index: 1, kind: input, shape index: {}]
  %s2 = inlined_call_operand.hbm [shape: f32[1,256], index: 2, kind: input, shape index: {}]
  %s3 = inlined_call_operand.hbm [shape: f32[128,128], index: 3, kind: input, shape index: {}]
  %s4 = inlined_call_operand.hbm [shape: f32[128,128], index: 4, kind: input, shape index: {}]
  %s5 = inlined_call_operand.hbm [shape: f32[128,128], index: 5, kind: input, shape index: {}]
  %s6 = inlined_call_operand.vmem [shape: bf16[2,128,256], index: 6, kind: output, shape index: {}]
  %s7 = sld [smem:[#allocation0]]
  $region81: #{llama_decoder_layer.4} parent=0
    _
  %s9 = ssub.s32 1, %s7
  %s10 = scalar_select 0, %s9, %s7
  $region1: #{llama_decoder_layer.4} parent=0
    #allocation2 [shape = 'u8[131072]{0}', space=vmem, size = 0x20000, scoped, tag = 'input window, operand 0']
    #allocation3 [shape = 's32[2]{0}', space=sflag, size = 0x8, scoped, tag = 'scoped memory for llama_decoder_layer.4']
    #allocation4 [shape = 'u8[1024]{0}', space=vmem, size = 0x400, scoped, tag = 'input window, operand 1, single buffered']
    #allocation5 [shape = 's32[1]{0}', space=sflag, size = 0x4, scoped, tag = 'scoped memory for llama_decoder_layer.4']
    #allocation6 [shape = 'u8[1024]{0}', space=vmem, size = 0x400, scoped, tag = 'input window, operand 2, single buffered']
    #allocation7 [shape = 'u8[65536]{0}', space=vmem, size = 0x10000, scoped, tag = 'input window, operand 3']
    #allocation8 [shape = 's32[2]{0}', space=sflag, size = 0x8, scoped, tag = 'scoped memory for llama_decoder_layer.4']
    #allocation9 [shape = 'u8[65536]{0}', space=vmem, size = 0x10000, scoped, tag = 'input window, operand 4']
    #allocation10 [shape = 'u8[65536]{0}', space=vmem, size = 0x10000, scoped, tag = 'input window, operand 5, single buffered']
    #allocation11 [shape = 's32[1]{0}', space=sflag, size = 0x4, scoped, tag = 'scoped memory for llama_decoder_layer.4']
    %11 = vsyncpa [#allocation3], 0
    %s12 = scalar_lea.sflag [#allocation3], 1
    %13 = vsyncpa %s12, 0
    %14 = vsyncpa [#allocation5], 0
    %15 = vsyncpa [#allocation8], 0
    %s16 = scalar_lea.sflag [#allocation8], 1
    %17 = vsyncpa %s16, 0
    %18 = vsyncpa [#allocation11], 0
    loop: start=0, step=1, limit=6
    $region2: #{llama_decoder_layer.4} parent=1 // loop_pre_header
      _
    $region3: #{llama_decoder_layer.4} parent=1 // loop_header
      %s20 = sphi 0, %s24
      %p21 = scmp.ge.s32.totalorder %s20, 6
      %s27 = sphi 0, %s39
      %s28 = sphi 0, %s35
      %s29 = sphi 0, %s27
      %s30 = sphi 0, %s28
      %s31 = sphi 0, %s29
      %s32 = sphi 0, %s30
      %s44 = sphi 0, %s46
      %s47 = sphi 0, %s44
      %s48 = sphi 0, %s47
      %s64 = sphi 0, %s48
      %s68 = sphi 0, %s68
      %s70 = sphi 0, %s68
      %s71 = sphi 0, %s70
      %s85 = sphi 0, %s71
      %s89 = sphi 0, %s89
      %s91 = sphi 0, %s89
      %s92 = sphi 0, %s91
      %s106 = sphi 0, %s92
      %s112 = sphi 0, %s114
      %s115 = sphi 0, %s112
      %s116 = sphi 0, %s115
      %s132 = sphi 0, %s116
      %s138 = sphi 0, %s140
      %s141 = sphi 0, %s138
      %s142 = sphi 0, %s141
      %s158 = sphi 0, %s142
      %s162 = sphi 0, %s162
      %s164 = sphi 0, %s162
      %s165 = sphi 0, %s164
      %s179 = sphi 0, %s165
      %s187 = sphi 0, %s189
      %s190 = sphi 0, %s187
      %s191 = sphi 0, %s190
      %s207 = sphi 0, %s191
    $region4: #{llama_decoder_layer.4} parent=1 // loop_header_branch
      %23 = sbr.rel (%p21) target = $region8
    $region5: #{llama_decoder_layer.4} parent=1 // loop_body
      %s25 = ssub.s32 %s20, 1
      %s26 = ssub.s32 %s20, 2
      %s33 = sadd.s32 1, %s28
      %p34 = scmp.ge.s32.totalorder %s33, 2
      %s35 = scalar_select %p34, 0, %s33
      %s36 = sadd.s32 1, %s27
      %s37 = scalar_select %p34, %s36, %s27
      %p38 = scmp.ge.s32.totalorder %s37, 2
      %s39 = scalar_select %p38, 0, %s37
      %s40 = ssub.s32 %s27, %s39
      %s41 = ssub.s32 %s28, %s35
      %s42 = sor.u32 %s40, %s41
      %p43 = scmp.eq.s32.totalorder %s42, 0
      %s45 = sadd.s32 %s44, 1
      %s46 = scalar_select %p43, %s44, %s45
      %p49 = pneg %p43
      %p50 = scmp.eq.s32.totalorder %s20, 3
      %p51 = por %p49, %p50
      %p52 = scmp.ne.s32.totalorder %s44, %s47
      %p53 = scmp.eq.s32.totalorder %s20, 0
      %p54 = por %p52, %p53
      %p55 = scmp.ne.s32.totalorder %s44, %s47
      %p56 = scmp.eq.s32.totalorder %s25, 3
      %p57 = por %p55, %p56
      %p58 = scmp.ne.s32.totalorder %s47, %s48
      %p59 = scmp.eq.s32.totalorder %s25, 0
      %p60 = por %p58, %p59
      %p61 = scmp.ne.s32.totalorder %s47, %s48
      %p62 = scmp.eq.s32.totalorder %s26, 3
      %p63 = por %p61, %p62
      %p65 = scmp.ne.s32.totalorder %s48, %s64
      %p66 = scmp.eq.s32.totalorder %s26, 0
      %p67 = por %p65, %p66
      %s69 = sadd.s32 %s68, 1
      %p72 = scmp.eq.s32.totalorder %s20, 3
      %p73 = scmp.ne.s32.totalorder %s68, %s70
      %p74 = scmp.eq.s32.totalorder %s20, 0
      %p75 = por %p73, %p74
      %p76 = scmp.ne.s32.totalorder %s68, %s70
      %p77 = scmp.eq.s32.totalorder %s25, 3
      %p78 = por %p76, %p77
      %p79 = scmp.ne.s32.totalorder %s70, %s71
      %p80 = scmp.eq.s32.totalorder %s25, 0
      %p81 = por %p79, %p80
      %p82 = scmp.ne.s32.totalorder %s70, %s71
      %p83 = scmp.eq.s32.totalorder %s26, 3
      %p84 = por %p82, %p83
      %p86 = scmp.ne.s32.totalorder %s71, %s85
      %p87 = scmp.eq.s32.totalorder %s26, 0
      %p88 = por %p86, %p87
      %s90 = sadd.s32 %s89, 1
      %p93 = scmp.eq.s32.totalorder %s20, 3
      %p94 = scmp.ne.s32.totalorder %s89, %s91
      %p95 = scmp.eq.s32.totalorder %s20, 0
      %p96 = por %p94, %p95
      %p97 = scmp.ne.s32.totalorder %s89, %s91
      %p98 = scmp.eq.s32.totalorder %s25, 3
      %p99 = por %p97, %p98
      %p100 = scmp.ne.s32.totalorder %s91, %s92
      %p101 = scmp.eq.s32.totalorder %s25, 0
      %p102 = por %p100, %p101
      %p103 = scmp.ne.s32.totalorder %s91, %s92
      %p104 = scmp.eq.s32.totalorder %s26, 3
      %p105 = por %p103, %p104
      %p107 = scmp.ne.s32.totalorder %s92, %s106
      %p108 = scmp.eq.s32.totalorder %s26, 0
      %p109 = por %p107, %p108
      %s110 = ssub.s32 %s28, %s35
      %p111 = scmp.eq.s32.totalorder %s110, 0
      %s113 = sadd.s32 %s112, 1
      %s114 = scalar_select %p111, %s112, %s113
      %p117 = pneg %p111
      %p118 = scmp.eq.s32.totalorder %s20, 3
      %p119 = por %p117, %p118
      %p120 = scmp.ne.s32.totalorder %s112, %s115
      %p121 = scmp.eq.s32.totalorder %s20, 0
      %p122 = por %p120, %p121
      %p123 = scmp.ne.s32.totalorder %s112, %s115
      %p124 = scmp.eq.s32.totalorder %s25, 3
      %p125 = por %p123, %p124
      %p126 = scmp.ne.s32.totalorder %s115, %s116
      %p127 = scmp.eq.s32.totalorder %s25, 0
      %p128 = por %p126, %p127
      %p129 = scmp.ne.s32.totalorder %s115, %s116
      %p130 = scmp.eq.s32.totalorder %s26, 3
      %p131 = por %p129, %p130
      %p133 = scmp.ne.s32.totalorder %s116, %s132
      %p134 = scmp.eq.s32.totalorder %s26, 0
      %p135 = por %p133, %p134
      %s136 = ssub.s32 %s28, %s35
      %p137 = scmp.eq.s32.totalorder %s136, 0
      %s139 = sadd.s32 %s138, 1
      %s140 = scalar_select %p137, %s138, %s139
      %p143 = pneg %p137
      %p144 = scmp.eq.s32.totalorder %s20, 3
      %p145 = por %p143, %p144
      %p146 = scmp.ne.s32.totalorder %s138, %s141
      %p147 = scmp.eq.s32.totalorder %s20, 0
      %p148 = por %p146, %p147
      %p149 = scmp.ne.s32.totalorder %s138, %s141
      %p150 = scmp.eq.s32.totalorder %s25, 3
      %p151 = por %p149, %p150
      %p152 = scmp.ne.s32.totalorder %s141, %s142
      %p153 = scmp.eq.s32.totalorder %s25, 0
      %p154 = por %p152, %p153
      %p155 = scmp.ne.s32.totalorder %s141, %s142
      %p156 = scmp.eq.s32.totalorder %s26, 3
      %p157 = por %p155, %p156
      %p159 = scmp.ne.s32.totalorder %s142, %s158
      %p160 = scmp.eq.s32.totalorder %s26, 0
      %p161 = por %p159, %p160
      %s163 = sadd.s32 %s162, 1
      %p166 = scmp.eq.s32.totalorder %s20, 3
      %p167 = scmp.ne.s32.totalorder %s162, %s164
      %p168 = scmp.eq.s32.totalorder %s20, 0
      %p169 = por %p167, %p168
      %p170 = scmp.ne.s32.totalorder %s162, %s164
      %p171 = scmp.eq.s32.totalorder %s25, 3
      %p172 = por %p170, %p171
      %p173 = scmp.ne.s32.totalorder %s164, %s165
      %p174 = scmp.eq.s32.totalorder %s25, 0
      %p175 = por %p173, %p174
      %p176 = scmp.ne.s32.totalorder %s164, %s165
      %p177 = scmp.eq.s32.totalorder %s26, 3
      %p178 = por %p176, %p177
      %p180 = scmp.ne.s32.totalorder %s165, %s179
      %p181 = scmp.eq.s32.totalorder %s26, 0
      %p182 = por %p180, %p181
      %s183 = ssub.s32 %s27, %s39
      %s184 = ssub.s32 %s28, %s35
      %s185 = sor.u32 %s183, %s184
      %p186 = scmp.eq.s32.totalorder %s185, 0
      %s188 = sadd.s32 %s187, 1
      %s189 = scalar_select %p186, %s187, %s188
      %p192 = pneg %p186
      %p193 = scmp.eq.s32.totalorder %s20, 3
      %p194 = por %p192, %p193
      %p195 = scmp.ne.s32.totalorder %s187, %s190
      %p196 = scmp.eq.s32.totalorder %s20, 0
      %p197 = por %p195, %p196
      %p198 = scmp.ne.s32.totalorder %s187, %s190
      %p199 = scmp.eq.s32.totalorder %s25, 3
      %p200 = por %p198, %p199
      %p201 = scmp.ne.s32.totalorder %s190, %s191
      %p202 = scmp.eq.s32.totalorder %s25, 0
      %p203 = por %p201, %p202
      %p204 = scmp.ne.s32.totalorder %s190, %s191
      %p205 = scmp.eq.s32.totalorder %s26, 3
      %p206 = por %p204, %p205
      %p208 = scmp.ne.s32.totalorder %s191, %s207
      %p209 = scmp.eq.s32.totalorder %s26, 0
      %p210 = por %p208, %p209
      %p211 = scmp.le.s32.totalorder 1, %s20
      %p212 = scmp.lt.s32.totalorder %s20, 5
      %p213 = pnand %p211, %p212
      %p214 = pneg %p213
      // Predicated region
      $region9: #{llama_decoder_layer.4} parent=5 // pred_check
        _
      $region10: #{llama_decoder_layer.4} parent=5 // pred_check_branch
        %216 = sbr.rel (%p213) target = $region12
      $region11: #{llama_decoder_layer.4} parent=5 // pred_region
        %s217 = ssub.s32 %s20, 1
        // Predicated region
        $region13: #{llama_decoder_layer.4} parent=11 // pred_check
          %p218 = pneg %p81
        $region14: #{llama_decoder_layer.4} parent=11 // pred_check_branch
          %220 = sbr.rel (%p218) target = $region16
        $region15: #{llama_decoder_layer.4} parent=11 // pred_region
          %s222 = ssub.s32 32, 32
          %223 = vsyncadd [#allocation5], %s222
          %s225 = sshll.u32 [#allocation4], 4
          %s226 = int_to_ptr.vmem [resolvable:$true] %s225
          %228 = dma.hbm_to_vmem [thread:$0]  %s1, 32, %s226, [#allocation5]
        $region16: #{llama_decoder_layer.4} parent=11 // pred_fallthru
          _
        // Predicated region
        $region17: #{llama_decoder_layer.4} parent=11 // pred_check
          %p229 = pneg %p102
        $region18: #{llama_decoder_layer.4} parent=11 // pred_check_branch
          %231 = sbr.rel (%p229) target = $region20
        $region19: #{llama_decoder_layer.4} parent=11 // pred_region
          %s233 = ssub.s32 32, 32
          %234 = vsyncadd [#allocation5], %s233
          %s236 = sshll.u32 [#allocation6], 4
          %s237 = int_to_ptr.vmem [resolvable:$true] %s236
          %239 = dma.hbm_to_vmem [thread:$0]  %s2, 32, %s237, [#allocation5]
        $region20: #{llama_decoder_layer.4} parent=11 // pred_fallthru
          _
        // Predicated region
        $region21: #{llama_decoder_layer.4} parent=11 // pred_check
          %p240 = pneg %p175
        $region22: #{llama_decoder_layer.4} parent=11 // pred_check_branch
          %242 = sbr.rel (%p240) target = $region24
        $region23: #{llama_decoder_layer.4} parent=11 // pred_region
          %s244 = ssub.s32 2048, 2048
          %245 = vsyncadd [#allocation11], %s244
          %s246 = sshll.u32 [#allocation10], 4
          %s247 = int_to_ptr.vmem [resolvable:$true] %s246
          %252 = dma.hbm_to_vmem [thread:$0]  %s5, 2048, %s247, [#allocation11], 128, 128, 8
        $region24: #{llama_decoder_layer.4} parent=11 // pred_fallthru
          _
      $region12: #{llama_decoder_layer.4} parent=5 // pred_fallthru
        _
      %p253 = scmp.lt.s32.totalorder %s20, 4
      // Predicated region
      $region25: #{llama_decoder_layer.4} parent=5 // pred_check
        %p254 = pneg %p253
      $region26: #{llama_decoder_layer.4} parent=5 // pred_check_branch
        %256 = sbr.rel (%p254) target = $region28
      $region27: #{llama_decoder_layer.4} parent=5 // pred_region
        // Predicated region
        $region29: #{llama_decoder_layer.4} parent=27 // pred_check
          %p257 = pneg %p54
        $region30: #{llama_decoder_layer.4} parent=27 // pred_check_branch
          %259 = sbr.rel (%p257) target = $region32
        $region31: #{llama_decoder_layer.4} parent=27 // pred_region
          %s260 = sand.u32 %s44, 1
          %s261 = scalar_lea.sflag [#allocation3], %s260
          %s262 = sand.u32 %s44, 1
          %s263 = smul.addr %s262, 128
          %s264 = scalar_lea.vmem [#allocation2], %s263
          %s265 = smul.u32 8, %s28
          %s267 = ssub.s32 2048, 2048
          %268 = vsyncadd %s261, %s267
          %s269 = smul.addr %s265, 2
          %s270 = smul.addr %s27, 32
          %s271 = sadd.s32 %s269, %s270
          %s272 = smul.addr %s271, 128
          %s273 = scalar_lea.hbm %s0, %s272
          %s274 = sshll.u32 %s264, 4
          %s275 = int_to_ptr.vmem [resolvable:$true] %s274
          %280 = dma.hbm_to_vmem [thread:$0]  %s273, 2048, %s275, %s261, 256, 256, 16
        $region32: #{llama_decoder_layer.4} parent=27 // pred_fallthru
          _
        // Predicated region
        $region33: #{llama_decoder_layer.4} parent=27 // pred_check
          %p281 = pneg %p122
        $region34: #{llama_decoder_layer.4} parent=27 // pred_check_branch
          %283 = sbr.rel (%p281) target = $region36
        $region35: #{llama_decoder_layer.4} parent=27 // pred_region
          %s284 = sand.u32 %s20, 1
          %s285 = scalar_lea.sflag [#allocation8], %s284
          %s286 = sand.u32 %s112, 1
          %s287 = smul.addr %s286, 64
          %s288 = scalar_lea.vmem [#allocation7], %s287
          %s289 = smul.u32 8, %s28
          %s291 = ssub.s32 1024, 1024
          %292 = vsyncadd %s285, %s291
          %s293 = smul.addr %s289, 128
          %s294 = scalar_lea.hbm %s3, %s293
          %s295 = sshll.u32 %s288, 4
          %s296 = int_to_ptr.vmem [resolvable:$true] %s295
          %301 = dma.hbm_to_vmem [thread:$0]  %s294, 1024, %s296, %s285, 128, 128, 8
        $region36: #{llama_decoder_layer.4} parent=27 // pred_fallthru
          _
        // Predicated region
        $region37: #{llama_decoder_layer.4} parent=27 // pred_check
          %p302 = pneg %p148
        $region38: #{llama_decoder_layer.4} parent=27 // pred_check_branch
          %304 = sbr.rel (%p302) target = $region40
        $region39: #{llama_decoder_layer.4} parent=27 // pred_region
          %s305 = sand.u32 %s20, 1
          %s306 = scalar_lea.sflag [#allocation8], %s305
          %s307 = sand.u32 %s138, 1
          %s308 = smul.addr %s307, 64
          %s309 = scalar_lea.vmem [#allocation9], %s308
          %s310 = smul.u32 8, %s28
          %s312 = ssub.s32 1024, 1024
          %313 = vsyncadd %s306, %s312
          %s314 = smul.addr %s310, 128
          %s315 = scalar_lea.hbm %s4, %s314
          %s316 = sshll.u32 %s309, 4
          %s317 = int_to_ptr.vmem [resolvable:$true] %s316
          %322 = dma.hbm_to_vmem [thread:$0]  %s315, 1024, %s317, %s306, 128, 128, 8
        $region40: #{llama_decoder_layer.4} parent=27 // pred_fallthru
          _
      $region28: #{llama_decoder_layer.4} parent=5 // pred_fallthru
        _
      %p323 = scmp.le.s32.totalorder 1, %s20
      %p324 = scmp.lt.s32.totalorder %s20, 5
      %p325 = pnand %p323, %p324
      %p326 = pneg %p325
      // Predicated region
      $region41: #{llama_decoder_layer.4} parent=5 // pred_check
        _
      $region42: #{llama_decoder_layer.4} parent=5 // pred_check_branch
        %328 = sbr.rel (%p325) target = $region44
      $region43: #{llama_decoder_layer.4} parent=5 // pred_region
        %s329 = ssub.s32 %s20, 1
        %s330 = sand.u32 %s47, 1
        %s331 = scalar_lea.sflag [#allocation3], %s330
        %s332 = sand.u32 %s47, 1
        %s333 = smul.addr %s332, 128
        %s334 = scalar_lea.vmem [#allocation2], %s333
        // Predicated region
        $region45: #{llama_decoder_layer.4} parent=43 // pred_check
          %p335 = pneg %p60
        $region46: #{llama_decoder_layer.4} parent=43 // pred_check_branch
          %337 = sbr.rel (%p335) target = $region48
        $region47: #{llama_decoder_layer.4} parent=43 // pred_region
          %338 = dma.done %s331, 2048
        $region48: #{llama_decoder_layer.4} parent=43 // pred_fallthru
          _
        // Predicated region
        $region49: #{llama_decoder_layer.4} parent=43 // pred_check
          %p339 = pneg %p81
        $region50: #{llama_decoder_layer.4} parent=43 // pred_check_branch
          %341 = sbr.rel (%p339) target = $region52
        $region51: #{llama_decoder_layer.4} parent=43 // pred_region
          %342 = dma.done [#allocation5], 32
        $region52: #{llama_decoder_layer.4} parent=43 // pred_fallthru
          _
        // Predicated region
        $region53: #{llama_decoder_layer.4} parent=43 // pred_check
          %p343 = pneg %p102
        $region54: #{llama_decoder_layer.4} parent=43 // pred_check_branch
          %345 = sbr.rel (%p343) target = $region56
        $region55: #{llama_decoder_layer.4} parent=43 // pred_region
          %346 = dma.done [#allocation5], 32
        $region56: #{llama_decoder_layer.4} parent=43 // pred_fallthru
          _
        %s347 = sand.u32 %s25, 1
        %s348 = scalar_lea.sflag [#allocation8], %s347
        %s349 = sand.u32 %s115, 1
        %s350 = smul.addr %s349, 64
        %s351 = scalar_lea.vmem [#allocation7], %s350
        // Predicated region
        $region57: #{llama_decoder_layer.4} parent=43 // pred_check
          %p352 = pneg %p128
        $region58: #{llama_decoder_layer.4} parent=43 // pred_check_branch
          %354 = sbr.rel (%p352) target = $region60
        $region59: #{llama_decoder_layer.4} parent=43 // pred_region
          %355 = dma.done %s348, 1024
        $region60: #{llama_decoder_layer.4} parent=43 // pred_fallthru
          _
        %s356 = sand.u32 %s25, 1
        %s357 = scalar_lea.sflag [#allocation8], %s356
        %s358 = sand.u32 %s141, 1
        %s359 = smul.addr %s358, 64
        %s360 = scalar_lea.vmem [#allocation9], %s359
        // Predicated region
        $region61: #{llama_decoder_layer.4} parent=43 // pred_check
          %p361 = pneg %p154
        $region62: #{llama_decoder_layer.4} parent=43 // pred_check_branch
          %363 = sbr.rel (%p361) target = $region64
        $region63: #{llama_decoder_layer.4} parent=43 // pred_region
          %364 = dma.done %s357, 1024
        $region64: #{llama_decoder_layer.4} parent=43 // pred_fallthru
          _
        // Predicated region
        $region65: #{llama_decoder_layer.4} parent=43 // pred_check
          %p365 = pneg %p175
        $region66: #{llama_decoder_layer.4} parent=43 // pred_check_branch
          %367 = sbr.rel (%p365) target = $region68
        $region67: #{llama_decoder_layer.4} parent=43 // pred_region
          %368 = dma.done [#allocation11], 2048
        $region68: #{llama_decoder_layer.4} parent=43 // pred_fallthru
          _
        %s369 = sand.u32 %s47, 1
        %s370 = scalar_lea.sflag [#allocation3], %s369
        %s371 = sand.u32 %s47, 1
        %s372 = smul.addr %s371, 128
        %s373 = scalar_lea.vmem [#allocation2], %s372
        %p374 = pneg %p60
        %p375 = pneg %p57
        %p376 = pneg %p81
        %p377 = pneg %p78
        %p378 = pneg %p102
        %p379 = pneg %p99
        %s380 = sand.u32 %s25, 1
        %s381 = scalar_lea.sflag [#allocation8], %s380
        %s382 = sand.u32 %s115, 1
        %s383 = smul.addr %s382, 64
        %s384 = scalar_lea.vmem [#allocation7], %s383
        %p385 = pneg %p128
        %p386 = pneg %p125
        %s387 = sand.u32 %s25, 1
        %s388 = scalar_lea.sflag [#allocation8], %s387
        %s389 = sand.u32 %s141, 1
        %s390 = smul.addr %s389, 64
        %s391 = scalar_lea.vmem [#allocation9], %s390
        %p392 = pneg %p154
        %p393 = pneg %p151
        %p394 = pneg %p175
        %p395 = pneg %p172
        %p396 = pneg %p203
        %p397 = pneg %p200
        %s398 = smul.u32 8, %s30
        %p399 = scmp.lt.s32.totalorder %s29, 1
        %s400 = scalar_select %p399, %s29, 1
        %p401 = scmp.lt.s32.totalorder %s398, 15
        %s402 = scalar_select %p401, %s398, 15
        %s403 = smul.addr %s402, 2
        %s404 = smul.addr %s400, 32
        %s405 = sadd.s32 %s403, %s404
        %s406 = smul.addr %s405, 4
        %s407 = scalar_lea.vmem %s6, %s406
        %s408 = smul.u32 8, %s30
        %s409 = smul.u32 8, %s30
        %s410 = smul.u32 8, %s30
        %s411 = smul.u32 8, %s30
        %p412 = scmp.lt.s32.totalorder %s29, 1
        %s413 = scalar_select %p412, %s29, 1
        %p414 = scmp.lt.s32.totalorder %s411, 15
        %s415 = scalar_select %p414, %s411, 15
        %s416 = smul.addr %s415, 2
        %s417 = smul.addr %s413, 32
        %s418 = sadd.s32 %s416, %s417
        %s419 = smul.addr %s418, 4
        %s420 = scalar_lea.vmem %s6, %s419
        %s421 = smul.u32 8, %s30
        %v422 = vld [vmem:[%s334] sm:$0xff]
        %v423 = vld [vmem:[%s334 + $0x8] sm:$0xff]
        %v424 = vld [vmem:[%s334 + $0x10] sm:$0xff]
        %v425 = vld [vmem:[%s334 + $0x18] sm:$0xff]
        %v426 = vld [vmem:[%s334 + $0x20] sm:$0xff]
        %v427 = vld [vmem:[%s334 + $0x28] sm:$0xff]
        %v428 = vld [vmem:[%s334 + $0x30] sm:$0xff]
        %v429 = vld [vmem:[%s334 + $0x38] sm:$0xff]
        %v430 = vld [vmem:[%s334 + $0x40] sm:$0xff]
        %v431 = vld [vmem:[%s334 + $0x48] sm:$0xff]
        %v432 = vld [vmem:[%s334 + $0x50] sm:$0xff]
        %v433 = vld [vmem:[%s334 + $0x58] sm:$0xff]
        %v434 = vld [vmem:[%s334 + $0x60] sm:$0xff]
        %v435 = vld [vmem:[%s334 + $0x68] sm:$0xff]
        %v436 = vld [vmem:[%s334 + $0x70] sm:$0xff]
        %v437 = vld [vmem:[%s334 + $0x78] sm:$0xff]
        %v438 = vadd.f32 %v422, %v423
        %439 = vadd.xlane.f32.xlu0 %v438
        %v440 = vpop.xlane.xlu0 %439
        %v441 = vadd.f32 %v424, %v425
        %442 = vadd.xlane.f32.xlu0 %v441
        %v443 = vpop.xlane.xlu0 %442
        %v444 = vadd.f32 %v426, %v427
        %445 = vadd.xlane.f32.xlu0 %v444
        %v446 = vpop.xlane.xlu0 %445
        %v447 = vadd.f32 %v428, %v429
        %448 = vadd.xlane.f32.xlu0 %v447
        %v449 = vpop.xlane.xlu0 %448
        %v450 = vadd.f32 %v430, %v431
        %451 = vadd.xlane.f32.xlu0 %v450
        %v452 = vpop.xlane.xlu0 %451
        %v453 = vadd.f32 %v432, %v433
        %454 = vadd.xlane.f32.xlu0 %v453
        %v455 = vpop.xlane.xlu0 %454
        %v456 = vadd.f32 %v434, %v435
        %457 = vadd.xlane.f32.xlu0 %v456
        %v458 = vpop.xlane.xlu0 %457
        %v459 = vadd.f32 %v436, %v437
        %460 = vadd.xlane.f32.xlu0 %v459
        %v461 = vpop.xlane.xlu0 %460
        %v462 = vrcp.pop 256.0
        %v463 = vmul.f32 %v440, %v462
        %v464 = vmul.f32 %v443, %v462
        %v465 = vmul.f32 %v446, %v462
        %v466 = vmul.f32 %v449, %v462
        %v467 = vmul.f32 %v452, %v462
        %v468 = vmul.f32 %v455, %v462
        %v469 = vmul.f32 %v458, %v462
        %v470 = vmul.f32 %v461, %v462
        %v471 = vsub.f32 %v422, %v463
        %v472 = vsub.f32 %v423, %v463
        %v473 = vsub.f32 %v424, %v464
        %v474 = vsub.f32 %v425, %v464
        %v475 = vsub.f32 %v426, %v465
        %v476 = vsub.f32 %v427, %v465
        %v477 = vsub.f32 %v428, %v466
        %v478 = vsub.f32 %v429, %v466
        %v479 = vsub.f32 %v430, %v467
        %v480 = vsub.f32 %v431, %v467
        %v481 = vsub.f32 %v432, %v468
        %v482 = vsub.f32 %v433, %v468
        %v483 = vsub.f32 %v434, %v469
        %v484 = vsub.f32 %v435, %v469
        %v485 = vsub.f32 %v436, %v470
        %v486 = vsub.f32 %v437, %v470
        %v487 = vmul.f32 %v471, %v471
        %v488 = vmul.f32 %v472, %v472
        %v489 = vmul.f32 %v473, %v473
        %v490 = vmul.f32 %v474, %v474
        %v491 = vmul.f32 %v475, %v475
        %v492 = vmul.f32 %v476, %v476
        %v493 = vmul.f32 %v477, %v477
        %v494 = vmul.f32 %v478, %v478
        %v495 = vmul.f32 %v479, %v479
        %v496 = vmul.f32 %v480, %v480
        %v497 = vmul.f32 %v481, %v481
        %v498 = vmul.f32 %v482, %v482
        %v499 = vmul.f32 %v483, %v483
        %v500 = vmul.f32 %v484, %v484
        %v501 = vmul.f32 %v485, %v485
        %v502 = vmul.f32 %v486, %v486
        %v503 = vadd.f32 %v487, %v488
        %504 = vadd.xlane.f32.xlu0 %v503
        %v505 = vpop.xlane.xlu0 %504
        %v506 = vadd.f32 %v489, %v490
        %507 = vadd.xlane.f32.xlu0 %v506
        %v508 = vpop.xlane.xlu0 %507
        %v509 = vadd.f32 %v491, %v492
        %510 = vadd.xlane.f32.xlu0 %v509
        %v511 = vpop.xlane.xlu0 %510
        %v512 = vadd.f32 %v493, %v494
        %513 = vadd.xlane.f32.xlu0 %v512
        %v514 = vpop.xlane.xlu0 %513
        %v515 = vadd.f32 %v495, %v496
        %516 = vadd.xlane.f32.xlu0 %v515
        %v517 = vpop.xlane.xlu0 %516
        %v518 = vadd.f32 %v497, %v498
        %519 = vadd.xlane.f32.xlu0 %v518
        %v520 = vpop.xlane.xlu0 %519
        %v521 = vadd.f32 %v499, %v500
        %522 = vadd.xlane.f32.xlu0 %v521
        %v523 = vpop.xlane.xlu0 %522
        %v524 = vadd.f32 %v501, %v502
        %525 = vadd.xlane.f32.xlu0 %v524
        %v526 = vpop.xlane.xlu0 %525
        %v527 = vmul.f32 %v505, %v462
        %v528 = vmul.f32 %v508, %v462
        %v529 = vmul.f32 %v511, %v462
        %v530 = vmul.f32 %v514, %v462
        %v531 = vmul.f32 %v517, %v462
        %v532 = vmul.f32 %v520, %v462
        %v533 = vmul.f32 %v523, %v462
        %v534 = vmul.f32 %v526, %v462
        %v535 = vadd.f32 %v527, 1e-05
        %v536 = vadd.f32 %v528, 1e-05
        %v537 = vadd.f32 %v529, 1e-05
        %v538 = vadd.f32 %v530, 1e-05
        %v539 = vadd.f32 %v531, 1e-05
        %v540 = vadd.f32 %v532, 1e-05
        %v541 = vadd.f32 %v533, 1e-05
        %v542 = vadd.f32 %v534, 1e-05
        %v543 = vrsqrt.pop %v535
        %v544 = vrsqrt.pop %v536
        %v545 = vrsqrt.pop %v537
        %v546 = vrsqrt.pop %v538
        %v547 = vrsqrt.pop %v539
        %v548 = vrsqrt.pop %v540
        %v549 = vrsqrt.pop %v541
        %v550 = vrsqrt.pop %v542
        %v551 = vmul.f32 %v471, %v543
        %v552 = vmul.f32 %v472, %v543
        %v553 = vmul.f32 %v473, %v544
        %v554 = vmul.f32 %v474, %v544
        %v555 = vmul.f32 %v475, %v545
        %v556 = vmul.f32 %v476, %v545
        %v557 = vmul.f32 %v477, %v546
        %v558 = vmul.f32 %v478, %v546
        %v559 = vmul.f32 %v479, %v547
        %v560 = vmul.f32 %v480, %v547
        %v561 = vmul.f32 %v481, %v548
        %v562 = vmul.f32 %v482, %v548
        %v563 = vmul.f32 %v483, %v549
        %v564 = vmul.f32 %v484, %v549
        %v565 = vmul.f32 %v485, %v550
        %v566 = vmul.f32 %v486, %v550
        %v567 = vld [vmem:[#allocation4] sm:$0x3]
        %v569 = vlaneseq
        %v570 = vshrl.u32 %v569, 7
        %v571 = vsub.s32 0, %v570
        %v572 = vrot.slane %v567, %v571
        %v573 = vlaneseq
        %v574 = vshrl.u32 %v573, 7
        %v575 = vsub.s32 1, %v574
        %v576 = vrot.slane %v567, %v575
        %v579 = vmul.f32 %v551, %v572
        %v580 = vmul.f32 %v552, %v576
        %v581 = vmul.f32 %v553, %v572
        %v582 = vmul.f32 %v554, %v576
        %v583 = vmul.f32 %v555, %v572
        %v584 = vmul.f32 %v556, %v576
        %v585 = vmul.f32 %v557, %v572
        %v586 = vmul.f32 %v558, %v576
        %v587 = vmul.f32 %v559, %v572
        %v588 = vmul.f32 %v560, %v576
        %v589 = vmul.f32 %v561, %v572
        %v590 = vmul.f32 %v562, %v576
        %v591 = vmul.f32 %v563, %v572
        %v592 = vmul.f32 %v564, %v576
        %v593 = vmul.f32 %v565, %v572
        %v594 = vmul.f32 %v566, %v576
        %v595 = vld [vmem:[#allocation6] sm:$0x3]
        %v597 = vlaneseq
        %v598 = vshrl.u32 %v597, 7
        %v599 = vsub.s32 0, %v598
        %v600 = vrot.slane %v595, %v599
        %v601 = vlaneseq
        %v602 = vshrl.u32 %v601, 7
        %v603 = vsub.s32 1, %v602
        %v604 = vrot.slane %v595, %v603
        %v607 = vadd.f32 %v579, %v600
        %v608 = vadd.f32 %v580, %v604
        %v609 = vadd.f32 %v581, %v600
        %v610 = vadd.f32 %v582, %v604
        %v611 = vadd.f32 %v583, %v600
        %v612 = vadd.f32 %v584, %v604
        %v613 = vadd.f32 %v585, %v600
        %v614 = vadd.f32 %v586, %v604
        %v615 = vadd.f32 %v587, %v600
        %v616 = vadd.f32 %v588, %v604
        %v617 = vadd.f32 %v589, %v600
        %v618 = vadd.f32 %v590, %v604
        %v619 = vadd.f32 %v591, %v600
        %v620 = vadd.f32 %v592, %v604
        %v621 = vadd.f32 %v593, %v600
        %v622 = vadd.f32 %v594, %v604
        %v623 = vld [vmem:[%s351] sm:$0xff]
        %v624 = vld [vmem:[%s351 + $0x8] sm:$0xff]
        %v625 = vld [vmem:[%s351 + $0x10] sm:$0xff]
        %v626 = vld [vmem:[%s351 + $0x18] sm:$0xff]
        %v627 = vld [vmem:[%s351 + $0x20] sm:$0xff]
        %v628 = vld [vmem:[%s351 + $0x28] sm:$0xff]
        %v629 = vld [vmem:[%s351 + $0x30] sm:$0xff]
        %v630 = vld [vmem:[%s351 + $0x38] sm:$0xff]
        %v631 = vld [vmem:[%s360] sm:$0xff]
        %v632 = vld [vmem:[%s360 + $0x8] sm:$0xff]
        %v633 = vld [vmem:[%s360 + $0x10] sm:$0xff]
        %v634 = vld [vmem:[%s360 + $0x18] sm:$0xff]
        %v635 = vld [vmem:[%s360 + $0x20] sm:$0xff]
        %v636 = vld [vmem:[%s360 + $0x28] sm:$0xff]
        %v637 = vld [vmem:[%s360 + $0x30] sm:$0xff]
        %v638 = vld [vmem:[%s360 + $0x38] sm:$0xff]
        %v639 = vld [vmem:[#allocation10] sm:$0xff]
        %v640 = vld [vmem:[#allocation10 + $0x8] sm:$0xff]
        %v641 = vld [vmem:[#allocation10 + $0x10] sm:$0xff]
        %v642 = vld [vmem:[#allocation10 + $0x18] sm:$0xff]
        %v643 = vld [vmem:[#allocation10 + $0x20] sm:$0xff]
        %v644 = vld [vmem:[#allocation10 + $0x28] sm:$0xff]
        %v645 = vld [vmem:[#allocation10 + $0x30] sm:$0xff]
        %v646 = vld [vmem:[#allocation10 + $0x38] sm:$0xff]
        %v647 = vld [vmem:[#allocation10 + $0x40] sm:$0xff]
        %v648 = vld [vmem:[#allocation10 + $0x48] sm:$0xff]
        %v649 = vld [vmem:[#allocation10 + $0x50] sm:$0xff]
        %v650 = vld [vmem:[#allocation10 + $0x58] sm:$0xff]
        %v651 = vld [vmem:[#allocation10 + $0x60] sm:$0xff]
        %v652 = vld [vmem:[#allocation10 + $0x68] sm:$0xff]
        %v653 = vld [vmem:[#allocation10 + $0x70] sm:$0xff]
        %v654 = vld [vmem:[#allocation10 + $0x78] sm:$0xff]
        %655 = vmatprep.subr.mxu0 0.0
        %656 = vmatpush1.msra.mxu0 %v639
        %657 = vmatprep.subr.mxu0 0.0
        %658 = vmatpush1.msra.mxu0 %v640
        %659 = vmatprep.subr.mxu0 0.0
        %660 = vmatpush1.msra.mxu0 %v641
        %661 = vmatprep.subr.mxu0 0.0
        %662 = vmatpush1.msra.mxu0 %v642
        %663 = vmatprep.subr.mxu0 0.0
        %664 = vmatpush1.msra.mxu0 %v643
        %665 = vmatprep.subr.mxu0 0.0
        %666 = vmatpush1.msra.mxu0 %v644
        %667 = vmatprep.subr.mxu0 0.0
        %668 = vmatpush1.msra.mxu0 %v645
        %669 = vmatprep.subr.mxu0 0.0
        %670 = vmatpush1.msra.mxu0 %v646
        %671 = vmatprep.subr.mxu0 0.0
        %672 = vmatpush1.msra.mxu0 %v647
        %673 = vmatprep.subr.mxu0 0.0
        %674 = vmatpush1.msra.mxu0 %v648
        %675 = vmatprep.subr.mxu0 0.0
        %676 = vmatpush1.msra.mxu0 %v649
        %677 = vmatprep.subr.mxu0 0.0
        %678 = vmatpush1.msra.mxu0 %v650
        %679 = vmatprep.subr.mxu0 0.0
        %680 = vmatpush1.msra.mxu0 %v651
        %681 = vmatprep.subr.mxu0 0.0
        %682 = vmatpush1.msra.mxu0 %v652
        %683 = vmatprep.subr.mxu0 0.0
        %684 = vmatpush1.msra.mxu0 %v653
        %685 = vmatprep.subr.mxu0 0.0
        %686 = vmatpush1.msra.mxu0 %v654
        %687 = vmatprep.subr.mxu0 0.0
        %688 = vmatpush1.msra.mxu0 0.0
        %689 = vmatprep.subr.mxu0 0.0
        %690 = vmatpush1.msra.mxu0 0.0
        %691 = vmatprep.subr.mxu0 0.0
        %692 = vmatpush1.msra.mxu0 0.0
        %693 = vmatprep.subr.mxu0 0.0
        %694 = vmatpush1.msra.mxu0 0.0
        %695 = vmatprep.subr.mxu0 0.0
        %696 = vmatpush1.msra.mxu0 0.0
        %697 = vmatprep.subr.mxu0 0.0
        %698 = vmatpush1.msra.mxu0 0.0
        %699 = vmatprep.subr.mxu0 0.0
        %700 = vmatpush1.msra.mxu0 0.0
        %701 = vmatprep.subr.mxu0 0.0
        %702 = vmatpush1.msra.mxu0 0.0
        %703 = vmatprep.subr.mxu0 0.0
        %704 = vmatpush1.msra.mxu0 0.0
        %705 = vmatprep.subr.mxu0 0.0
        %706 = vmatpush1.msra.mxu0 0.0
        %707 = vmatprep.subr.mxu0 0.0
        %708 = vmatpush1.msra.mxu0 0.0
        %709 = vmatprep.subr.mxu0 0.0
        %710 = vmatpush1.msra.mxu0 0.0
        %711 = vmatprep.subr.mxu0 0.0
        %712 = vmatpush1.msra.mxu0 0.0
        %713 = vmatprep.subr.mxu0 0.0
        %714 = vmatpush1.msra.mxu0 0.0
        %715 = vmatprep.subr.mxu0 0.0
        %716 = vmatpush1.msra.mxu0 0.0
        %717 = vmatprep.subr.mxu0 0.0
        %718 = vmatpush1.msra.mxu0 0.0
        %719 = vmatprep.mubr.f32.mxu0 0.0
        %720 = vmatmul.mubr.f32.gmra.mrb[0].mxu0 %v607
        %v721 = vpop.f32.mrb[0].mxu0
        %v722 = vadd.f32 0.0, %v721
        %v723 = vpop.f32.mrb[0].mxu0
        %724 = vmatprep.mubr.f32.mxu0 0.0
        %725 = vmatmul.mubr.f32.gmra.mrb[0].mxu0 %v609
        %v726 = vpop.f32.mrb[0].mxu0
        %v727 = vadd.f32 0.0, %v726
        %v728 = vpop.f32.mrb[0].mxu0
        %729 = vmatprep.mubr.f32.mxu0 0.0
        %730 = vmatmul.mubr.f32.gmra.mrb[0].mxu0 %v611
        %v731 = vpop.f32.mrb[0].mxu0
        %v732 = vadd.f32 0.0, %v731
        %v733 = vpop.f32.mrb[0].mxu0
        %734 = vmatprep.mubr.f32.mxu0 0.0
        %735 = vmatmul.mubr.f32.gmra.mrb[0].mxu0 %v613
        %v736 = vpop.f32.mrb[0].mxu0
        %v737 = vadd.f32 0.0, %v736
        %v738 = vpop.f32.mrb[0].mxu0
        %739 = vmatprep.mubr.f32.mxu0 0.0
        %740 = vmatmul.mubr.f32.gmra.mrb[0].mxu0 %v615
        %v741 = vpop.f32.mrb[0].mxu0
        %v742 = vadd.f32 0.0, %v741
        %v743 = vpop.f32.mrb[0].mxu0
        %744 = vmatprep.mubr.f32.mxu0 0.0
        %745 = vmatmul.mubr.f32.gmra.mrb[0].mxu0 %v617
        %v746 = vpop.f32.mrb[0].mxu0
        %v747 = vadd.f32 0.0, %v746
        %v748 = vpop.f32.mrb[0].mxu0
        %749 = vmatprep.mubr.f32.mxu0 0.0
        %750 = vmatmul.mubr.f32.gmra.mrb[0].mxu0 %v619
        %v751 = vpop.f32.mrb[0].mxu0
        %v752 = vadd.f32 0.0, %v751
        %v753 = vpop.f32.mrb[0].mxu0
        %754 = vmatprep.mubr.f32.mxu0 0.0
        %755 = vmatmul.mubr.f32.gmra.mrb[0].mxu0 %v621
        %v756 = vpop.f32.mrb[0].mxu0
        %v757 = vadd.f32 0.0, %v756
        %v758 = vpop.f32.mrb[0].mxu0
        %759 = vdwg.mxu0
        %v760 = vmul.f32 %v607, %v623
        %v761 = vmul.f32 %v609, %v624
        %v762 = vmul.f32 %v611, %v625
        %v763 = vmul.f32 %v613, %v626
        %v764 = vmul.f32 %v615, %v627
        %v765 = vmul.f32 %v617, %v628
        %v766 = vmul.f32 %v619, %v629
        %v767 = vmul.f32 %v621, %v630
        %v768 = vmul.f32 %v722, %v631
        %v769 = vmul.f32 %v727, %v632
        %v770 = vmul.f32 %v732, %v633
        %v771 = vmul.f32 %v737, %v634
        %v772 = vmul.f32 %v742, %v635
        %v773 = vmul.f32 %v747, %v636
        %v774 = vmul.f32 %v752, %v637
        %v775 = vmul.f32 %v757, %v638
        %v776 = vadd.f32 %v760, %v768
        %v777 = vadd.f32 %v761, %v769
        %v778 = vadd.f32 %v762, %v770
        %v779 = vadd.f32 %v763, %v771
        %v780 = vadd.f32 %v764, %v772
        %v781 = vadd.f32 %v765, %v773
        %v782 = vadd.f32 %v766, %v774
        %v783 = vadd.f32 %v767, %v775
        %v784 = vpack.c.bf16 %v777, %v776
        %v785 = vpack.c.bf16 %v779, %v778
        %v786 = vpack.c.bf16 %v781, %v780
        %v787 = vpack.c.bf16 %v783, %v782
        %v792 = vunpack.c.l.b16 %v784
        %v793 = vunpack.c.h.b16 %v784
        %v794 = vunpack.c.l.b16 %v785
        %v795 = vunpack.c.h.b16 %v785
        %v796 = vunpack.c.l.b16 %v786
        %v797 = vunpack.c.h.b16 %v786
        %v798 = vunpack.c.l.b16 %v787
        %v799 = vunpack.c.h.b16 %v787
        %v800 = vpack.c.b16 %v792, %v792
        %v801 = vpack.c.b16 %v793, %v793
        %v802 = vpack.c.b16 %v794, %v794
        %v803 = vpack.c.b16 %v795, %v795
        %v804 = vpack.c.b16 %v796, %v796
        %v805 = vpack.c.b16 %v797, %v797
        %v806 = vpack.c.b16 %v798, %v798
        %v807 = vpack.c.b16 %v799, %v799
        %816 = vst [vmem:[%s420] sm:$0xf] %v800
        %817 = vst [vmem:[%s420 + $0x8] sm:$0xf] %v801
        %818 = vst [vmem:[%s420 + $0x10] sm:$0xf] %v802
        %819 = vst [vmem:[%s420 + $0x18] sm:$0xf] %v803
        %820 = vst [vmem:[%s420 + $0x20] sm:$0xf] %v804
        %821 = vst [vmem:[%s420 + $0x28] sm:$0xf] %v805
        %822 = vst [vmem:[%s420 + $0x30] sm:$0xf] %v806
        %823 = vst [vmem:[%s420 + $0x38] sm:$0xf] %v807
        %824 = vmatprep.subr.mxu0 0.0
        %825 = vmatpush1.msra.mxu0 %v639
        %826 = vmatprep.subr.mxu0 0.0
        %827 = vmatpush1.msra.mxu0 %v640
        %828 = vmatprep.subr.mxu0 0.0
        %829 = vmatpush1.msra.mxu0 %v641
        %830 = vmatprep.subr.mxu0 0.0
        %831 = vmatpush1.msra.mxu0 %v642
        %832 = vmatprep.subr.mxu0 0.0
        %833 = vmatpush1.msra.mxu0 %v643
        %834 = vmatprep.subr.mxu0 0.0
        %835 = vmatpush1.msra.mxu0 %v644
        %836 = vmatprep.subr.mxu0 0.0
        %837 = vmatpush1.msra.mxu0 %v645
        %838 = vmatprep.subr.mxu0 0.0
        %839 = vmatpush1.msra.mxu0 %v646
        %840 = vmatprep.subr.mxu0 0.0
        %841 = vmatpush1.msra.mxu0 %v647
        %842 = vmatprep.subr.mxu0 0.0
        %843 = vmatpush1.msra.mxu0 %v648
        %844 = vmatprep.subr.mxu0 0.0
        %845 = vmatpush1.msra.mxu0 %v649
        %846 = vmatprep.subr.mxu0 0.0
        %847 = vmatpush1.msra.mxu0 %v650
        %848 = vmatprep.subr.mxu0 0.0
        %849 = vmatpush1.msra.mxu0 %v651
        %850 = vmatprep.subr.mxu0 0.0
        %851 = vmatpush1.msra.mxu0 %v652
        %852 = vmatprep.subr.mxu0 0.0
        %853 = vmatpush1.msra.mxu0 %v653
        %854 = vmatprep.subr.mxu0 0.0
        %855 = vmatpush1.msra.mxu0 %v654
        %856 = vmatprep.subr.mxu0 0.0
        %857 = vmatpush1.msra.mxu0 0.0
        %858 = vmatprep.subr.mxu0 0.0
        %859 = vmatpush1.msra.mxu0 0.0
        %860 = vmatprep.subr.mxu0 0.0
        %861 = vmatpush1.msra.mxu0 0.0
        %862 = vmatprep.subr.mxu0 0.0
        %863 = vmatpush1.msra.mxu0 0.0
        %864 = vmatprep.subr.mxu0 0.0
        %865 = vmatpush1.msra.mxu0 0.0
        %866 = vmatprep.subr.mxu0 0.0
        %867 = vmatpush1.msra.mxu0 0.0
        %868 = vmatprep.subr.mxu0 0.0
        %869 = vmatpush1.msra.mxu0 0.0
        %870 = vmatprep.subr.mxu0 0.0
        %871 = vmatpush1.msra.mxu0 0.0
        %872 = vmatprep.subr.mxu0 0.0
        %873 = vmatpush1.msra.mxu0 0.0
        %874 = vmatprep.subr.mxu0 0.0
        %875 = vmatpush1.msra.mxu0 0.0
        %876 = vmatprep.subr.mxu0 0.0
        %877 = vmatpush1.msra.mxu0 0.0
        %878 = vmatprep.subr.mxu0 0.0
        %879 = vmatpush1.msra.mxu0 0.0
        %880 = vmatprep.subr.mxu0 0.0
        %881 = vmatpush1.msra.mxu0 0.0
        %882 = vmatprep.subr.mxu0 0.0
        %883 = vmatpush1.msra.mxu0 0.0
        %884 = vmatprep.subr.mxu0 0.0
        %885 = vmatpush1.msra.mxu0 0.0
        %886 = vmatprep.subr.mxu0 0.0
        %887 = vmatpush1.msra.mxu0 0.0
        %888 = vmatprep.mubr.f32.mxu0 0.0
        %889 = vmatmul.mubr.f32.gmra.mrb[0].mxu0 %v608
        %v890 = vpop.f32.mrb[0].mxu0
        %v891 = vadd.f32 0.0, %v890
        %v892 = vpop.f32.mrb[0].mxu0
        %893 = vmatprep.mubr.f32.mxu0 0.0
        %894 = vmatmul.mubr.f32.gmra.mrb[0].mxu0 %v610
        %v895 = vpop.f32.mrb[0].mxu0
        %v896 = vadd.f32 0.0, %v895
        %v897 = vpop.f32.mrb[0].mxu0
        %898 = vmatprep.mubr.f32.mxu0 0.0
        %899 = vmatmul.mubr.f32.gmra.mrb[0].mxu0 %v612
        %v900 = vpop.f32.mrb[0].mxu0
        %v901 = vadd.f32 0.0, %v900
        %v902 = vpop.f32.mrb[0].mxu0
        %903 = vmatprep.mubr.f32.mxu0 0.0
        %904 = vmatmul.mubr.f32.gmra.mrb[0].mxu0 %v614
        %v905 = vpop.f32.mrb[0].mxu0
        %v906 = vadd.f32 0.0, %v905
        %v907 = vpop.f32.mrb[0].mxu0
        %908 = vmatprep.mubr.f32.mxu0 0.0
        %909 = vmatmul.mubr.f32.gmra.mrb[0].mxu0 %v616
        %v910 = vpop.f32.mrb[0].mxu0
        %v911 = vadd.f32 0.0, %v910
        %v912 = vpop.f32.mrb[0].mxu0
        %913 = vmatprep.mubr.f32.mxu0 0.0
        %914 = vmatmul.mubr.f32.gmra.mrb[0].mxu0 %v618
        %v915 = vpop.f32.mrb[0].mxu0
        %v916 = vadd.f32 0.0, %v915
        %v917 = vpop.f32.mrb[0].mxu0
        %918 = vmatprep.mubr.f32.mxu0 0.0
        %919 = vmatmul.mubr.f32.gmra.mrb[0].mxu0 %v620
        %v920 = vpop.f32.mrb[0].mxu0
        %v921 = vadd.f32 0.0, %v920
        %v922 = vpop.f32.mrb[0].mxu0
        %923 = vmatprep.mubr.f32.mxu0 0.0
        %924 = vmatmul.mubr.f32.gmra.mrb[0].mxu0 %v622
        %v925 = vpop.f32.mrb[0].mxu0
        %v926 = vadd.f32 0.0, %v925
        %v927 = vpop.f32.mrb[0].mxu0
        %928 = vdwg.mxu0
        %v929 = vmul.f32 %v608, %v623
        %v930 = vmul.f32 %v610, %v624
        %v931 = vmul.f32 %v612, %v625
        %v932 = vmul.f32 %v614, %v626
        %v933 = vmul.f32 %v616, %v627
        %v934 = vmul.f32 %v618, %v628
        %v935 = vmul.f32 %v620, %v629
        %v936 = vmul.f32 %v622, %v630
        %v937 = vmul.f32 %v891, %v631
        %v938 = vmul.f32 %v896, %v632
        %v939 = vmul.f32 %v901, %v633
        %v940 = vmul.f32 %v906, %v634
        %v941 = vmul.f32 %v911, %v635
        %v942 = vmul.f32 %v916, %v636
        %v943 = vmul.f32 %v921, %v637
        %v944 = vmul.f32 %v926, %v638
        %v945 = vadd.f32 %v929, %v937
        %v946 = vadd.f32 %v930, %v938
        %v947 = vadd.f32 %v931, %v939
        %v948 = vadd.f32 %v932, %v940
        %v949 = vadd.f32 %v933, %v941
        %v950 = vadd.f32 %v934, %v942
        %v951 = vadd.f32 %v935, %v943
        %v952 = vadd.f32 %v936, %v944
        %v953 = vpack.c.bf16 %v946, %v945
        %v954 = vpack.c.bf16 %v948, %v947
        %v955 = vpack.c.bf16 %v950, %v949
        %v956 = vpack.c.bf16 %v952, %v951
        %v961 = vunpack.c.l.b16 %v953
        %v962 = vunpack.c.h.b16 %v953
        %v963 = vunpack.c.l.b16 %v954
        %v964 = vunpack.c.h.b16 %v954
        %v965 = vunpack.c.l.b16 %v955
        %v966 = vunpack.c.h.b16 %v955
        %v967 = vunpack.c.l.b16 %v956
        %v968 = vunpack.c.h.b16 %v956
        %v969 = vpack.c.b16 %v961, %v961
        %v970 = vpack.c.b16 %v962, %v962
        %v971 = vpack.c.b16 %v963, %v963
        %v972 = vpack.c.b16 %v964, %v964
        %v973 = vpack.c.b16 %v965, %v965
        %v974 = vpack.c.b16 %v966, %v966
        %v975 = vpack.c.b16 %v967, %v967
        %v976 = vpack.c.b16 %v968, %v968
        %985 = vst [vmem:[%s420 + $0x4] sm:$0xf] %v969
        %986 = vst [vmem:[%s420 + $0xc] sm:$0xf] %v970
        %987 = vst [vmem:[%s420 + $0x14] sm:$0xf] %v971
        %988 = vst [vmem:[%s420 + $0x1c] sm:$0xf] %v972
        %989 = vst [vmem:[%s420 + $0x24] sm:$0xf] %v973
        %990 = vst [vmem:[%s420 + $0x2c] sm:$0xf] %v974
        %991 = vst [vmem:[%s420 + $0x34] sm:$0xf] %v975
        %992 = vst [vmem:[%s420 + $0x3c] sm:$0xf] %v976
        %s993 = smul.u32 8, %s30
        %p994 = scmp.lt.s32.totalorder %s29, 1
        %s995 = scalar_select %p994, %s29, 1
        %p996 = scmp.lt.s32.totalorder %s993, 15
        %s997 = scalar_select %p996, %s993, 15
        %s998 = smul.addr %s997, 2
        %s999 = smul.addr %s995, 32
        %s1000 = sadd.s32 %s998, %s999
        %s1001 = smul.addr %s1000, 4
        %s1002 = scalar_lea.vmem %s6, %s1001
        // Predicated region
        $region69: #{llama_decoder_layer.4} parent=43 // pred_check
          %p1003 = pneg %p200
        $region70: #{llama_decoder_layer.4} parent=43 // pred_check_branch
          %1005 = sbr.rel (%p1003) target = $region72
        $region71: #{llama_decoder_layer.4} parent=43 // pred_region
          %s1006 = smul.u32 8, %s30
        $region72: #{llama_decoder_layer.4} parent=43 // pred_fallthru
          _
      $region44: #{llama_decoder_layer.4} parent=5 // pred_fallthru
        _
      %p1007 = scmp.le.s32.totalorder 2, %s20
      // Predicated region
      $region73: #{llama_decoder_layer.4} parent=5 // pred_check
        %p1008 = pneg %p1007
      $region74: #{llama_decoder_layer.4} parent=5 // pred_check_branch
        %1010 = sbr.rel (%p1008) target = $region76
      $region75: #{llama_decoder_layer.4} parent=5 // pred_region
        %s1011 = ssub.s32 %s20, 2
        // Predicated region
        $region77: #{llama_decoder_layer.4} parent=75 // pred_check
          %p1012 = pneg %p206
        $region78: #{llama_decoder_layer.4} parent=75 // pred_check_branch
          %1014 = sbr.rel (%p1012) target = $region80
        $region79: #{llama_decoder_layer.4} parent=75 // pred_region
          %s1015 = smul.u32 8, %s32
          %p1016 = scmp.lt.s32.totalorder %s31, 1
          %s1017 = scalar_select %p1016, %s31, 1
          %p1018 = scmp.lt.s32.totalorder %s1015, 15
          %s1019 = scalar_select %p1018, %s1015, 15
          %s1020 = smul.addr %s1019, 2
          %s1021 = smul.addr %s1017, 32
          %s1022 = sadd.s32 %s1020, %s1021
          %s1023 = smul.addr %s1022, 4
          %s1024 = scalar_lea.vmem %s6, %s1023
        $region80: #{llama_decoder_layer.4} parent=75 // pred_fallthru
          _
      $region76: #{llama_decoder_layer.4} parent=5 // pred_fallthru
        _
    $region6: #{llama_decoder_layer.4} parent=1 // loop_footer
      %s24 = sadd.s32 1, %s20
    $region7: #{llama_decoder_layer.4} parent=1 // loop_footer_branch
      %19 = sbr.rel target = $region3
    $region8: #{llama_decoder_layer.4} parent=1 // loop_exit
      _
    %1025 = vsyncpa [#allocation3], 1
    %s1026 = scalar_lea.sflag [#allocation3], 1
    %1027 = vsyncpa %s1026, 1
    %1028 = vsyncpa [#allocation5], 1
    %1029 = vsyncpa [#allocation8], 1
    %s1030 = scalar_lea.sflag [#allocation8], 1
    %1031 = vsyncpa %s1030, 1
    %1032 = vsyncpa [#allocation11], 1

// kernel: llama_decoder_layer.5
$region0: #{llama_decoder_layer.5}
  #allocation0 [shape = 'u32[]', space=smem, size = 0x4, offset = 0x4, fixed_abs, tag = 'smem constant byte address 0x4 - core index']
  #allocation1 [shape = 'u32[144,128]{1,0:T(1,128)}', space=vmem, size = 0x12000, scoped, tag = 'internal scratch']
  #allocation2 [shape = 'f32[128,256]{1,0:T(8,128)}', space=vmem, size = 0x20000, scoped, tag = 'scratch operand']
  %s0 = inlined_call_operand.vmem [shape: bf16[256,256], index: 0, kind: input, shape index: {}]
  %s1 = inlined_call_operand.vmem [shape: bf16[256,768], index: 1, kind: input, shape index: {}]
  %s2 = inlined_call_operand.vmem [shape: bf16[256,768], index: 2, kind: output, shape index: {}]
  %s3 = sld [smem:[#allocation0]]
  $region162: #{llama_decoder_layer.5} parent=0
    _
  %s5 = ssub.s32 1, %s3
  %s6 = scalar_select 0, %s5, %s3
  $region1: #{llama_decoder_layer.5} parent=0
    #allocation3 [shape = 'u8[65536]{0}', space=vmem, size = 0x10000, scoped, tag = 'input window, operand 0']
    #allocation4 [shape = 'u8[131072]{0}', space=vmem, size = 0x20000, scoped, tag = 'input window, operand 1']
    #allocation5 [shape = 'u8[131072]{0}', space=vmem, size = 0x20000, scoped, tag = 'output window, operand 0']
    loop: start=0, step=1, limit=14
    $region2: #{llama_decoder_layer.5} parent=1 // loop_pre_header
      _
    $region3: #{llama_decoder_layer.5} parent=1 // loop_header
      %s8 = sphi 0, %s12
      %p9 = scmp.ge.s32.totalorder %s8, 14
      %s15 = sphi 0, %s34
      %s16 = sphi 0, %s30
      %s17 = sphi 0, %s26
      %s18 = sphi 0, %s15
      %s19 = sphi 0, %s16
      %s20 = sphi 0, %s17
      %s21 = sphi 0, %s18
      %s22 = sphi 0, %s19
      %s23 = sphi 0, %s20
      %s39 = sphi 0, %s41
      %s42 = sphi 0, %s39
      %s43 = sphi 0, %s42
      %s59 = sphi 0, %s43
      %s67 = sphi 0, %s69
      %s70 = sphi 0, %s67
      %s71 = sphi 0, %s70
      %s87 = sphi 0, %s71
      %s95 = sphi 0, %s97
      %s98 = sphi 0, %s95
      %s99 = sphi 0, %s98
      %s115 = sphi 0, %s99
    $region4: #{llama_decoder_layer.5} parent=1 // loop_header_branch
      %11 = sbr.rel (%p9) target = $region8
    $region5: #{llama_decoder_layer.5} parent=1 // loop_body
      %s13 = ssub.s32 %s8, 1
      %s14 = ssub.s32 %s8, 2
      %s24 = sadd.s32 1, %s17
      %p25 = scmp.ge.s32.totalorder %s24, 2
      %s26 = scalar_select %p25, 0, %s24
      %s27 = sadd.s32 1, %s16
      %s28 = scalar_select %p25, %s27, %s16
      %p29 = scmp.ge.s32.totalorder %s28, 3
      %s30 = scalar_select %p29, 0, %s28
      %s31 = sadd.s32 1, %s15
      %s32 = scalar_select %p29, %s31, %s15
      %p33 = scmp.ge.s32.totalorder %s32, 2
      %s34 = scalar_select %p33, 0, %s32
      %s35 = ssub.s32 %s15, %s34
      %s36 = ssub.s32 %s17, %s26
      %s37 = sor.u32 %s35, %s36
      %p38 = scmp.eq.s32.totalorder %s37, 0
      %s40 = sadd.s32 %s39, 1
      %s41 = scalar_select %p38, %s39, %s40
      %p44 = pneg %p38
      %p45 = scmp.eq.s32.totalorder %s8, 11
      %p46 = por %p44, %p45
      %p47 = scmp.ne.s32.totalorder %s39, %s42
      %p48 = scmp.eq.s32.totalorder %s8, 0
      %p49 = por %p47, %p48
      %p50 = scmp.ne.s32.totalorder %s39, %s42
      %p51 = scmp.eq.s32.totalorder %s13, 11
      %p52 = por %p50, %p51
      %p53 = scmp.ne.s32.totalorder %s42, %s43
      %p54 = scmp.eq.s32.totalorder %s13, 0
      %p55 = por %p53, %p54
      %p56 = scmp.ne.s32.totalorder %s42, %s43
      %p57 = scmp.eq.s32.totalorder %s14, 11
      %p58 = por %p56, %p57
      %p60 = scmp.ne.s32.totalorder %s43, %s59
      %p61 = scmp.eq.s32.totalorder %s14, 0
      %p62 = por %p60, %p61
      %s63 = ssub.s32 %s17, %s26
      %s64 = ssub.s32 %s16, %s30
      %s65 = sor.u32 %s63, %s64
      %p66 = scmp.eq.s32.totalorder %s65, 0
      %s68 = sadd.s32 %s67, 1
      %s69 = scalar_select %p66, %s67, %s68
      %p72 = pneg %p66
      %p73 = scmp.eq.s32.totalorder %s8, 11
      %p74 = por %p72, %p73
      %p75 = scmp.ne.s32.totalorder %s67, %s70
      %p76 = scmp.eq.s32.totalorder %s8, 0
      %p77 = por %p75, %p76
      %p78 = scmp.ne.s32.totalorder %s67, %s70
      %p79 = scmp.eq.s32.totalorder %s13, 11
      %p80 = por %p78, %p79
      %p81 = scmp.ne.s32.totalorder %s70, %s71
      %p82 = scmp.eq.s32.totalorder %s13, 0
      %p83 = por %p81, %p82
      %p84 = scmp.ne.s32.totalorder %s70, %s71
      %p85 = scmp.eq.s32.totalorder %s14, 11
      %p86 = por %p84, %p85
      %p88 = scmp.ne.s32.totalorder %s71, %s87
      %p89 = scmp.eq.s32.totalorder %s14, 0
      %p90 = por %p88, %p89
      %s91 = ssub.s32 %s15, %s34
      %s92 = ssub.s32 %s16, %s30
      %s93 = sor.u32 %s91, %s92
      %p94 = scmp.eq.s32.totalorder %s93, 0
      %s96 = sadd.s32 %s95, 1
      %s97 = scalar_select %p94, %s95, %s96
      %p100 = pneg %p94
      %p101 = scmp.eq.s32.totalorder %s8, 11
      %p102 = por %p100, %p101
      %p103 = scmp.ne.s32.totalorder %s95, %s98
      %p104 = scmp.eq.s32.totalorder %s8, 0
      %p105 = por %p103, %p104
      %p106 = scmp.ne.s32.totalorder %s95, %s98
      %p107 = scmp.eq.s32.totalorder %s13, 11
      %p108 = por %p106, %p107
      %p109 = scmp.ne.s32.totalorder %s98, %s99
      %p110 = scmp.eq.s32.totalorder %s13, 0
      %p111 = por %p109, %p110
      %p112 = scmp.ne.s32.totalorder %s98, %s99
      %p113 = scmp.eq.s32.totalorder %s14, 11
      %p114 = por %p112, %p113
      %p116 = scmp.ne.s32.totalorder %s99, %s115
      %p117 = scmp.eq.s32.totalorder %s14, 0
      %p118 = por %p116, %p117
      %p119 = scmp.le.s32.totalorder 1, %s8
      %p120 = scmp.lt.s32.totalorder %s8, 13
      %p121 = pnand %p119, %p120
      %p122 = pneg %p121
      // Predicated region
      $region9: #{llama_decoder_layer.5} parent=5 // pred_check
        _
      $region10: #{llama_decoder_layer.5} parent=5 // pred_check_branch
        %124 = sbr.rel (%p121) target = $region12
      $region11: #{llama_decoder_layer.5} parent=5 // pred_region
        %s125 = ssub.s32 %s8, 1
      $region12: #{llama_decoder_layer.5} parent=5 // pred_fallthru
        _
      %p126 = scmp.lt.s32.totalorder %s8, 12
      // Predicated region
      $region13: #{llama_decoder_layer.5} parent=5 // pred_check
        %p127 = pneg %p126
      $region14: #{llama_decoder_layer.5} parent=5 // pred_check_branch
        %129 = sbr.rel (%p127) target = $region16
      $region15: #{llama_decoder_layer.5} parent=5 // pred_region
        // Predicated region
        $region17: #{llama_decoder_layer.5} parent=15 // pred_check
          %p130 = pneg %p49
        $region18: #{llama_decoder_layer.5} parent=15 // pred_check_branch
          %132 = sbr.rel (%p130) target = $region20
        $region19: #{llama_decoder_layer.5} parent=15 // pred_region
          %s133 = sand.u32 %s39, 1
          %s134 = sand.u32 %s39, 1
          %s135 = smul.addr %s134, 64
          %s136 = scalar_lea.vmem [#allocation3], %s135
          %s137 = smul.u32 16, %s15
          %s138 = smul.addr %s137, 2
          %s139 = sadd.s32 %s17, %s138
          %s140 = smul.addr %s139, 4
          %s141 = scalar_lea.vmem %s0, %s140
          // Predicated region
          $region21: #{llama_decoder_layer.5} parent=19 // pred_check
            _
          $region22: #{llama_decoder_layer.5} parent=19 // pred_check_branch
            %143 = sbr.rel (0) target = $region24
          $region23: #{llama_decoder_layer.5} parent=19 // pred_region
            // Predicated region
            $region25: #{llama_decoder_layer.5} parent=23 // pred_check
              _
            $region26: #{llama_decoder_layer.5} parent=23 // pred_check_branch
              %145 = sbr.rel target = $region28
            $region27: #{llama_decoder_layer.5} parent=23 // pred_region
              // Predicated region
              $region40: #{llama_decoder_layer.5} parent=27 // pred_check
                _
              $region41: #{llama_decoder_layer.5} parent=27 // pred_check_branch
                %190 = sbr.rel (0) target = $region43
              $region42: #{llama_decoder_layer.5} parent=27 // pred_region
                loop: start=0, step=1, limit=1
                $region44: #{llama_decoder_layer.5} parent=42 // loop_pre_header
                  _
                $region45: #{llama_decoder_layer.5} parent=42 // loop_header
                  %s192 = sphi 0, %s196
                  %p193 = scmp.ge.s32.totalorder %s192, 1
                  %s197 = sphi %s141, %s141
                  %s198 = sphi %s136, %s136
                $region46: #{llama_decoder_layer.5} parent=42 // loop_header_branch
                  %195 = sbr.rel (%p193) target = $region50
                $region47: #{llama_decoder_layer.5} parent=42 // loop_body
                  _
                $region48: #{llama_decoder_layer.5} parent=42 // loop_footer
                  %s196 = sadd.s32 1, %s192
                $region49: #{llama_decoder_layer.5} parent=42 // loop_footer_branch
                  %191 = sbr.rel target = $region45
                $region50: #{llama_decoder_layer.5} parent=42 // loop_exit
                  _
                loop: start=0, step=1, limit=1
                $region51: #{llama_decoder_layer.5} parent=42 // loop_pre_header
                  _
                $region52: #{llama_decoder_layer.5} parent=42 // loop_header
                  %s201 = sphi 0, %s205
                  %p202 = scmp.ge.s32.totalorder %s201, 1
                  %s206 = sphi %s141, %s141
                  %s207 = sphi %s136, %s136
                $region53: #{llama_decoder_layer.5} parent=42 // loop_header_branch
                  %204 = sbr.rel (%p202) target = $region57
                $region54: #{llama_decoder_layer.5} parent=42 // loop_body
                  %v208 = vld [vmem:[%s206] sm:$0xf]
                  %209 = vst [vmem:[%s207] sm:$0xf] %v208
                  %v210 = vld [vmem:[%s206 + $0x8] sm:$0xf]
                  %211 = vst [vmem:[%s207 + $0x4] sm:$0xf] %v210
                  %v212 = vld [vmem:[%s206 + $0x10] sm:$0xf]
                  %213 = vst [vmem:[%s207 + $0x8] sm:$0xf] %v212
                  %v214 = vld [vmem:[%s206 + $0x18] sm:$0xf]
                  %215 = vst [vmem:[%s207 + $0xc] sm:$0xf] %v214
                  %v216 = vld [vmem:[%s206 + $0x20] sm:$0xf]
                  %217 = vst [vmem:[%s207 + $0x10] sm:$0xf] %v216
                  %v218 = vld [vmem:[%s206 + $0x28] sm:$0xf]
                  %219 = vst [vmem:[%s207 + $0x14] sm:$0xf] %v218
                  %v220 = vld [vmem:[%s206 + $0x30] sm:$0xf]
                  %221 = vst [vmem:[%s207 + $0x18] sm:$0xf] %v220
                  %v222 = vld [vmem:[%s206 + $0x38] sm:$0xf]
                  %223 = vst [vmem:[%s207 + $0x1c] sm:$0xf] %v222
                  %v224 = vld [vmem:[%s206 + $0x40] sm:$0xf]
                  %225 = vst [vmem:[%s207 + $0x20] sm:$0xf] %v224
                  %v226 = vld [vmem:[%s206 + $0x48] sm:$0xf]
                  %227 = vst [vmem:[%s207 + $0x24] sm:$0xf] %v226
                  %v228 = vld [vmem:[%s206 + $0x50] sm:$0xf]
                  %229 = vst [vmem:[%s207 + $0x28] sm:$0xf] %v228
                  %v230 = vld [vmem:[%s206 + $0x58] sm:$0xf]
                  %231 = vst [vmem:[%s207 + $0x2c] sm:$0xf] %v230
                  %v232 = vld [vmem:[%s206 + $0x60] sm:$0xf]
                  %233 = vst [vmem:[%s207 + $0x30] sm:$0xf] %v232
                  %v234 = vld [vmem:[%s206 + $0x68] sm:$0xf]
                  %235 = vst [vmem:[%s207 + $0x34] sm:$0xf] %v234
                  %v236 = vld [vmem:[%s206 + $0x70] sm:$0xf]
                  %237 = vst [vmem:[%s207 + $0x38] sm:$0xf] %v236
                  %v238 = vld [vmem:[%s206 + $0x78] sm:$0xf]
                  %239 = vst [vmem:[%s207 + $0x3c] sm:$0xf] %v238
                $region55: #{llama_decoder_layer.5} parent=42 // loop_footer
                  %s205 = sadd.s32 1, %s201
                $region56: #{llama_decoder_layer.5} parent=42 // loop_footer_branch
                  %200 = sbr.rel target = $region52
                $region57: #{llama_decoder_layer.5} parent=42 // loop_exit
                  _
              $region43: #{llama_decoder_layer.5} parent=27 // pred_fallthru
                _
            $region28: #{llama_decoder_layer.5} parent=23 // pred_fallthru
              _
            // Predicated region
            $region29: #{llama_decoder_layer.5} parent=23 // pred_check
              _
            $region30: #{llama_decoder_layer.5} parent=23 // pred_check_branch
              %147 = sbr.rel (0) target = $region32
            $region31: #{llama_decoder_layer.5} parent=23 // pred_region
              loop: start=0, step=1, limit=1
              $region33: #{llama_decoder_layer.5} parent=31 // loop_pre_header
                _
              $region34: #{llama_decoder_layer.5} parent=31 // loop_header
                %s150 = sphi 0, %s154
                %p151 = scmp.ge.s32.totalorder %s150, 1
                %s155 = sphi %s141, %s141
                %s156 = sphi %s136, %s136
              $region35: #{llama_decoder_layer.5} parent=31 // loop_header_branch
                %153 = sbr.rel (%p151) target = $region39
              $region36: #{llama_decoder_layer.5} parent=31 // loop_body
                %v157 = vld [vmem:[%s155] sm:$0xf]
                %158 = vst [vmem:[%s156] sm:$0xf] %v157
                %v159 = vld [vmem:[%s155 + $0x8] sm:$0xf]
                %160 = vst [vmem:[%s156 + $0x4] sm:$0xf] %v159
                %v161 = vld [vmem:[%s155 + $0x10] sm:$0xf]
                %162 = vst [vmem:[%s156 + $0x8] sm:$0xf] %v161
                %v163 = vld [vmem:[%s155 + $0x18] sm:$0xf]
                %164 = vst [vmem:[%s156 + $0xc] sm:$0xf] %v163
                %v165 = vld [vmem:[%s155 + $0x20] sm:$0xf]
                %166 = vst [vmem:[%s156 + $0x10] sm:$0xf] %v165
                %v167 = vld [vmem:[%s155 + $0x28] sm:$0xf]
                %168 = vst [vmem:[%s156 + $0x14] sm:$0xf] %v167
                %v169 = vld [vmem:[%s155 + $0x30] sm:$0xf]
                %170 = vst [vmem:[%s156 + $0x18] sm:$0xf] %v169
                %v171 = vld [vmem:[%s155 + $0x38] sm:$0xf]
                %172 = vst [vmem:[%s156 + $0x1c] sm:$0xf] %v171
                %v173 = vld [vmem:[%s155 + $0x40] sm:$0xf]
                %174 = vst [vmem:[%s156 + $0x20] sm:$0xf] %v173
                %v175 = vld [vmem:[%s155 + $0x48] sm:$0xf]
                %176 = vst [vmem:[%s156 + $0x24] sm:$0xf] %v175
                %v177 = vld [vmem:[%s155 + $0x50] sm:$0xf]
                %178 = vst [vmem:[%s156 + $0x28] sm:$0xf] %v177
                %v179 = vld [vmem:[%s155 + $0x58] sm:$0xf]
                %180 = vst [vmem:[%s156 + $0x2c] sm:$0xf] %v179
                %v181 = vld [vmem:[%s155 + $0x60] sm:$0xf]
                %182 = vst [vmem:[%s156 + $0x30] sm:$0xf] %v181
                %v183 = vld [vmem:[%s155 + $0x68] sm:$0xf]
                %184 = vst [vmem:[%s156 + $0x34] sm:$0xf] %v183
                %v185 = vld [vmem:[%s155 + $0x70] sm:$0xf]
                %186 = vst [vmem:[%s156 + $0x38] sm:$0xf] %v185
                %v187 = vld [vmem:[%s155 + $0x78] sm:$0xf]
                %188 = vst [vmem:[%s156 + $0x3c] sm:$0xf] %v187
              $region37: #{llama_decoder_layer.5} parent=31 // loop_footer
                %s154 = sadd.s32 1, %s150
              $region38: #{llama_decoder_layer.5} parent=31 // loop_footer_branch
                %149 = sbr.rel target = $region34
              $region39: #{llama_decoder_layer.5} parent=31 // loop_exit
                _
            $region32: #{llama_decoder_layer.5} parent=23 // pred_fallthru
              _
          $region24: #{llama_decoder_layer.5} parent=19 // pred_fallthru
            _
          %240 = vnop
        $region20: #{llama_decoder_layer.5} parent=15 // pred_fallthru
          _
        // Predicated region
        $region58: #{llama_decoder_layer.5} parent=15 // pred_check
          %p241 = pneg %p77
        $region59: #{llama_decoder_layer.5} parent=15 // pred_check_branch
          %243 = sbr.rel (%p241) target = $region61
        $region60: #{llama_decoder_layer.5} parent=15 // pred_region
          %s244 = sand.u32 %s67, 1
          %s245 = sand.u32 %s67, 1
          %s246 = smul.addr %s245, 128
          %s247 = scalar_lea.vmem [#allocation4], %s246
          %s248 = smul.u32 16, %s17
          %s249 = smul.u32 2, %s16
          %s250 = smul.addr %s248, 6
          %s251 = sadd.s32 %s249, %s250
          %s252 = smul.addr %s251, 4
          %s253 = scalar_lea.vmem %s1, %s252
          // Predicated region
          $region62: #{llama_decoder_layer.5} parent=60 // pred_check
            _
          $region63: #{llama_decoder_layer.5} parent=60 // pred_check_branch
            %255 = sbr.rel (0) target = $region65
          $region64: #{llama_decoder_layer.5} parent=60 // pred_region
            // Predicated region
            $region66: #{llama_decoder_layer.5} parent=64 // pred_check
              _
            $region67: #{llama_decoder_layer.5} parent=64 // pred_check_branch
              %257 = sbr.rel (0) target = $region69
            $region68: #{llama_decoder_layer.5} parent=64 // pred_region
              // Predicated region
              $region81: #{llama_decoder_layer.5} parent=68 // pred_check
                _
              $region82: #{llama_decoder_layer.5} parent=68 // pred_check_branch
                %302 = sbr.rel (0) target = $region84
              $region83: #{llama_decoder_layer.5} parent=68 // pred_region
                loop: start=0, step=1, limit=1
                $region85: #{llama_decoder_layer.5} parent=83 // loop_pre_header
                  _
                $region86: #{llama_decoder_layer.5} parent=83 // loop_header
                  %s304 = sphi 0, %s308
                  %p305 = scmp.ge.s32.totalorder %s304, 1
                  %s309 = sphi %s253, %s253
                  %s310 = sphi %s247, %s247
                $region87: #{llama_decoder_layer.5} parent=83 // loop_header_branch
                  %307 = sbr.rel (%p305) target = $region91
                $region88: #{llama_decoder_layer.5} parent=83 // loop_body
                  %v311 = vld [vmem:[%s309] sm:$0xff]
                  %312 = vst [vmem:[%s310] sm:$0xff] %v311
                  %v313 = vld [vmem:[%s309 + $0x18] sm:$0xff]
                  %314 = vst [vmem:[%s310 + $0x8] sm:$0xff] %v313
                  %v315 = vld [vmem:[%s309 + $0x30] sm:$0xff]
                  %316 = vst [vmem:[%s310 + $0x10] sm:$0xff] %v315
                  %v317 = vld [vmem:[%s309 + $0x48] sm:$0xff]
                  %318 = vst [vmem:[%s310 + $0x18] sm:$0xff] %v317
                  %v319 = vld [vmem:[%s309 + $0x60] sm:$0xff]
                  %320 = vst [vmem:[%s310 + $0x20] sm:$0xff] %v319
                  %v321 = vld [vmem:[%s309 + $0x78] sm:$0xff]
                  %322 = vst [vmem:[%s310 + $0x28] sm:$0xff] %v321
                  %v323 = vld [vmem:[%s309 + $0x90] sm:$0xff]
                  %324 = vst [vmem:[%s310 + $0x30] sm:$0xff] %v323
                  %v325 = vld [vmem:[%s309 + $0xa8] sm:$0xff]
                  %326 = vst [vmem:[%s310 + $0x38] sm:$0xff] %v325
                  %v327 = vld [vmem:[%s309 + $0xc0] sm:$0xff]
                  %328 = vst [vmem:[%s310 + $0x40] sm:$0xff] %v327
                  %v329 = vld [vmem:[%s309 + $0xd8] sm:$0xff]
                  %330 = vst [vmem:[%s310 + $0x48] sm:$0xff] %v329
                  %v331 = vld [vmem:[%s309 + $0xf0] sm:$0xff]
                  %332 = vst [vmem:[%s310 + $0x50] sm:$0xff] %v331
                  %v333 = vld [vmem:[%s309 + $0x108] sm:$0xff]
                  %334 = vst [vmem:[%s310 + $0x58] sm:$0xff] %v333
                  %v335 = vld [vmem:[%s309 + $0x120] sm:$0xff]
                  %336 = vst [vmem:[%s310 + $0x60] sm:$0xff] %v335
                  %v337 = vld [vmem:[%s309 + $0x138] sm:$0xff]
                  %338 = vst [vmem:[%s310 + $0x68] sm:$0xff] %v337
                  %v339 = vld [vmem:[%s309 + $0x150] sm:$0xff]
                  %340 = vst [vmem:[%s310 + $0x70] sm:$0xff] %v339
                  %v341 = vld [vmem:[%s309 + $0x168] sm:$0xff]
                  %342 = vst [vmem:[%s310 + $0x78] sm:$0xff] %v341
                $region89: #{llama_decoder_layer.5} parent=83 // loop_footer
                  %s308 = sadd.s32 1, %s304
                $region90: #{llama_decoder_layer.5} parent=83 // loop_footer_branch
                  %303 = sbr.rel target = $region86
                $region91: #{llama_decoder_layer.5} parent=83 // loop_exit
                  _
              $region84: #{llama_decoder_layer.5} parent=68 // pred_fallthru
                _
              // Predicated region
              $region92: #{llama_decoder_layer.5} parent=68 // pred_check
                _
              $region93: #{llama_decoder_layer.5} parent=68 // pred_check_branch
                %344 = sbr.rel target = $region95
              $region94: #{llama_decoder_layer.5} parent=68 // pred_region
                _
              $region95: #{llama_decoder_layer.5} parent=68 // pred_fallthru
                _
            $region69: #{llama_decoder_layer.5} parent=64 // pred_fallthru
              _
            // Predicated region
            $region70: #{llama_decoder_layer.5} parent=64 // pred_check
              _
            $region71: #{llama_decoder_layer.5} parent=64 // pred_check_branch
              %259 = sbr.rel target = $region73
            $region72: #{llama_decoder_layer.5} parent=64 // pred_region
              loop: start=0, step=1, limit=1
              $region74: #{llama_decoder_layer.5} parent=72 // loop_pre_header
                _
              $region75: #{llama_decoder_layer.5} parent=72 // loop_header
                %s262 = sphi 0, %s266
                %p263 = scmp.ge.s32.totalorder %s262, 1
                %s267 = sphi %s253, %s253
                %s268 = sphi %s247, %s247
              $region76: #{llama_decoder_layer.5} parent=72 // loop_header_branch
                %265 = sbr.rel (%p263) target = $region80
              $region77: #{llama_decoder_layer.5} parent=72 // loop_body
                %v269 = vld [vmem:[%s267] sm:$0xff]
                %270 = vst [vmem:[%s268] sm:$0xff] %v269
                %v271 = vld [vmem:[%s267 + $0x18] sm:$0xff]
                %272 = vst [vmem:[%s268 + $0x8] sm:$0xff] %v271
                %v273 = vld [vmem:[%s267 + $0x30] sm:$0xff]
                %274 = vst [vmem:[%s268 + $0x10] sm:$0xff] %v273
                %v275 = vld [vmem:[%s267 + $0x48] sm:$0xff]
                %276 = vst [vmem:[%s268 + $0x18] sm:$0xff] %v275
                %v277 = vld [vmem:[%s267 + $0x60] sm:$0xff]
                %278 = vst [vmem:[%s268 + $0x20] sm:$0xff] %v277
                %v279 = vld [vmem:[%s267 + $0x78] sm:$0xff]
                %280 = vst [vmem:[%s268 + $0x28] sm:$0xff] %v279
                %v281 = vld [vmem:[%s267 + $0x90] sm:$0xff]
                %282 = vst [vmem:[%s268 + $0x30] sm:$0xff] %v281
                %v283 = vld [vmem:[%s267 + $0xa8] sm:$0xff]
                %284 = vst [vmem:[%s268 + $0x38] sm:$0xff] %v283
                %v285 = vld [vmem:[%s267 + $0xc0] sm:$0xff]
                %286 = vst [vmem:[%s268 + $0x40] sm:$0xff] %v285
                %v287 = vld [vmem:[%s267 + $0xd8] sm:$0xff]
                %288 = vst [vmem:[%s268 + $0x48] sm:$0xff] %v287
                %v289 = vld [vmem:[%s267 + $0xf0] sm:$0xff]
                %290 = vst [vmem:[%s268 + $0x50] sm:$0xff] %v289
                %v291 = vld [vmem:[%s267 + $0x108] sm:$0xff]
                %292 = vst [vmem:[%s268 + $0x58] sm:$0xff] %v291
                %v293 = vld [vmem:[%s267 + $0x120] sm:$0xff]
                %294 = vst [vmem:[%s268 + $0x60] sm:$0xff] %v293
                %v295 = vld [vmem:[%s267 + $0x138] sm:$0xff]
                %296 = vst [vmem:[%s268 + $0x68] sm:$0xff] %v295
                %v297 = vld [vmem:[%s267 + $0x150] sm:$0xff]
                %298 = vst [vmem:[%s268 + $0x70] sm:$0xff] %v297
                %v299 = vld [vmem:[%s267 + $0x168] sm:$0xff]
                %300 = vst [vmem:[%s268 + $0x78] sm:$0xff] %v299
              $region78: #{llama_decoder_layer.5} parent=72 // loop_footer
                %s266 = sadd.s32 1, %s262
              $region79: #{llama_decoder_layer.5} parent=72 // loop_footer_branch
                %261 = sbr.rel target = $region75
              $region80: #{llama_decoder_layer.5} parent=72 // loop_exit
                _
            $region73: #{llama_decoder_layer.5} parent=64 // pred_fallthru
              _
          $region65: #{llama_decoder_layer.5} parent=60 // pred_fallthru
            _
          %345 = vnop
        $region61: #{llama_decoder_layer.5} parent=15 // pred_fallthru
          _
      $region16: #{llama_decoder_layer.5} parent=5 // pred_fallthru
        _
      %p346 = scmp.le.s32.totalorder 1, %s8
      %p347 = scmp.lt.s32.totalorder %s8, 13
      %p348 = pnand %p346, %p347
      %p349 = pneg %p348
      // Predicated region
      $region96: #{llama_decoder_layer.5} parent=5 // pred_check
        _
      $region97: #{llama_decoder_layer.5} parent=5 // pred_check_branch
        %351 = sbr.rel (%p348) target = $region99
      $region98: #{llama_decoder_layer.5} parent=5 // pred_region
        %s352 = ssub.s32 %s8, 1
        %s353 = sand.u32 %s42, 1
        %s354 = sand.u32 %s42, 1
        %s355 = smul.addr %s354, 64
        %s356 = scalar_lea.vmem [#allocation3], %s355
        // Predicated region
        $region100: #{llama_decoder_layer.5} parent=98 // pred_check
          %p357 = pneg %p55
        $region101: #{llama_decoder_layer.5} parent=98 // pred_check_branch
          %359 = sbr.rel (%p357) target = $region103
        $region102: #{llama_decoder_layer.5} parent=98 // pred_region
          _
        $region103: #{llama_decoder_layer.5} parent=98 // pred_fallthru
          _
        %s360 = sand.u32 %s70, 1
        %s361 = sand.u32 %s70, 1
        %s362 = smul.addr %s361, 128
        %s363 = scalar_lea.vmem [#allocation4], %s362
        // Predicated region
        $region104: #{llama_decoder_layer.5} parent=98 // pred_check
          %p364 = pneg %p83
        $region105: #{llama_decoder_layer.5} parent=98 // pred_check_branch
          %366 = sbr.rel (%p364) target = $region107
        $region106: #{llama_decoder_layer.5} parent=98 // pred_region
          _
        $region107: #{llama_decoder_layer.5} parent=98 // pred_fallthru
          _
        %s367 = sand.u32 %s42, 1
        %s368 = sand.u32 %s42, 1
        %s369 = smul.addr %s368, 64
        %s370 = scalar_lea.vmem [#allocation3], %s369
        %p371 = pneg %p55
        %p372 = pneg %p52
        %s373 = sand.u32 %s70, 1
        %s374 = sand.u32 %s70, 1
        %s375 = smul.addr %s374, 128
        %s376 = scalar_lea.vmem [#allocation4], %s375
        %p377 = pneg %p83
        %p378 = pneg %p80
        %p379 = pneg %p111
        %p380 = pneg %p108
        %s381 = sand.u32 %s98, 1
        %s382 = sand.u32 %s98, 1
        %s383 = smul.addr %s382, 128
        %s384 = scalar_lea.vmem [#allocation5], %s383
        %s385 = smul.u32 16, %s18
        %s386 = smul.u32 16, %s20
        %s387 = smul.u32 2, %s19
        %s388 = smul.u32 16, %s18
        %s389 = smul.u32 2, %s19
        %p391 = scmp.eq.s32.totalorder %s20, 0
        // Predicated region
        $region108: #{llama_decoder_layer.5} parent=98 // pred_check
          %p392 = pneg %p391
        $region109: #{llama_decoder_layer.5} parent=98 // pred_check_branch
          %394 = sbr.rel (%p392) target = $region111
        $region110: #{llama_decoder_layer.5} parent=98 // pred_region
          %395 = vst [vmem:[#allocation2] sm:$0xff] 0.0
          %396 = vst [vmem:[#allocation2 + $0x8] sm:$0xff] 0.0
          %397 = vst [vmem:[#allocation2 + $0x10] sm:$0xff] 0.0
          %398 = vst [vmem:[#allocation2 + $0x18] sm:$0xff] 0.0
          %399 = vst [vmem:[#allocation2 + $0x20] sm:$0xff] 0.0
          %400 = vst [vmem:[#allocation2 + $0x28] sm:$0xff] 0.0
          %401 = vst [vmem:[#allocation2 + $0x30] sm:$0xff] 0.0
          %402 = vst [vmem:[#allocation2 + $0x38] sm:$0xff] 0.0
          %403 = vst [vmem:[#allocation2 + $0x40] sm:$0xff] 0.0
          %404 = vst [vmem:[#allocation2 + $0x48] sm:$0xff] 0.0
          %405 = vst [vmem:[#allocation2 + $0x50] sm:$0xff] 0.0
          %406 = vst [vmem:[#allocation2 + $0x58] sm:$0xff] 0.0
          %407 = vst [vmem:[#allocation2 + $0x60] sm:$0xff] 0.0
          %408 = vst [vmem:[#allocation2 + $0x68] sm:$0xff] 0.0
          %409 = vst [vmem:[#allocation2 + $0x70] sm:$0xff] 0.0
          %410 = vst [vmem:[#allocation2 + $0x78] sm:$0xff] 0.0
          %411 = vst [vmem:[#allocation2 + $0x80] sm:$0xff] 0.0
          %412 = vst [vmem:[#allocation2 + $0x88] sm:$0xff] 0.0
          %413 = vst [vmem:[#allocation2 + $0x90] sm:$0xff] 0.0
          %414 = vst [vmem:[#allocation2 + $0x98] sm:$0xff] 0.0
          %415 = vst [vmem:[#allocation2 + $0xa0] sm:$0xff] 0.0
          %416 = vst [vmem:[#allocation2 + $0xa8] sm:$0xff] 0.0
          %417 = vst [vmem:[#allocation2 + $0xb0] sm:$0xff] 0.0
          %418 = vst [vmem:[#allocation2 + $0xb8] sm:$0xff] 0.0
          %419 = vst [vmem:[#allocation2 + $0xc0] sm:$0xff] 0.0
          %420 = vst [vmem:[#allocation2 + $0xc8] sm:$0xff] 0.0
          %421 = vst [vmem:[#allocation2 + $0xd0] sm:$0xff] 0.0
          %422 = vst [vmem:[#allocation2 + $0xd8] sm:$0xff] 0.0
          %423 = vst [vmem:[#allocation2 + $0xe0] sm:$0xff] 0.0
          %424 = vst [vmem:[#allocation2 + $0xe8] sm:$0xff] 0.0
          %425 = vst [vmem:[#allocation2 + $0xf0] sm:$0xff] 0.0
          %426 = vst [vmem:[#allocation2 + $0xf8] sm:$0xff] 0.0
        $region111: #{llama_decoder_layer.5} parent=98 // pred_fallthru
          _
        %v427 = vld [vmem:[#allocation2] sm:$0xff]
        %v428 = vld [vmem:[#allocation2 + $0x8] sm:$0xff]
        %v429 = vld [vmem:[#allocation2 + $0x10] sm:$0xff]
        %v430 = vld [vmem:[#allocation2 + $0x18] sm:$0xff]
        %v431 = vld [vmem:[#allocation2 + $0x20] sm:$0xff]
        %v432 = vld [vmem:[#allocation2 + $0x28] sm:$0xff]
        %v433 = vld [vmem:[#allocation2 + $0x30] sm:$0xff]
        %v434 = vld [vmem:[#allocation2 + $0x38] sm:$0xff]
        %v435 = vld [vmem:[#allocation2 + $0x40] sm:$0xff]
        %v436 = vld [vmem:[#allocation2 + $0x48] sm:$0xff]
        %v437 = vld [vmem:[#allocation2 + $0x50] sm:$0xff]
        %v438 = vld [vmem:[#allocation2 + $0x58] sm:$0xff]
        %v439 = vld [vmem:[#allocation2 + $0x60] sm:$0xff]
        %v440 = vld [vmem:[#allocation2 + $0x68] sm:$0xff]
        %v441 = vld [vmem:[#allocation2 + $0x70] sm:$0xff]
        %v442 = vld [vmem:[#allocation2 + $0x78] sm:$0xff]
        %v443 = vld [vmem:[#allocation2 + $0x80] sm:$0xff]
        %v444 = vld [vmem:[#allocation2 + $0x88] sm:$0xff]
        %v445 = vld [vmem:[#allocation2 + $0x90] sm:$0xff]
        %v446 = vld [vmem:[#allocation2 + $0x98] sm:$0xff]
        %v447 = vld [vmem:[#allocation2 + $0xa0] sm:$0xff]
        %v448 = vld [vmem:[#allocation2 + $0xa8] sm:$0xff]
        %v449 = vld [vmem:[#allocation2 + $0xb0] sm:$0xff]
        %v450 = vld [vmem:[#allocation2 + $0xb8] sm:$0xff]
        %v451 = vld [vmem:[#allocation2 + $0xc0] sm:$0xff]
        %v452 = vld [vmem:[#allocation2 + $0xc8] sm:$0xff]
        %v453 = vld [vmem:[#allocation2 + $0xd0] sm:$0xff]
        %v454 = vld [vmem:[#allocation2 + $0xd8] sm:$0xff]
        %v455 = vld [vmem:[#allocation2 + $0xe0] sm:$0xff]
        %v456 = vld [vmem:[#allocation2 + $0xe8] sm:$0xff]
        %v457 = vld [vmem:[#allocation2 + $0xf0] sm:$0xff]
        %v458 = vld [vmem:[#allocation2 + $0xf8] sm:$0xff]
        %v459 = vld [vmem:[%s356] sm:$0xf]
        %v460 = vld [vmem:[%s356 + $0x4] sm:$0xf]
        %v461 = vld [vmem:[%s356 + $0x8] sm:$0xf]
        %v462 = vld [vmem:[%s356 + $0xc] sm:$0xf]
        %v463 = vld [vmem:[%s356 + $0x10] sm:$0xf]
        %v464 = vld [vmem:[%s356 + $0x14] sm:$0xf]
        %v465 = vld [vmem:[%s356 + $0x18] sm:$0xf]
        %v466 = vld [vmem:[%s356 + $0x1c] sm:$0xf]
        %v467 = vld [vmem:[%s356 + $0x20] sm:$0xf]
        %v468 = vld [vmem:[%s356 + $0x24] sm:$0xf]
        %v469 = vld [vmem:[%s356 + $0x28] sm:$0xf]
        %v470 = vld [vmem:[%s356 + $0x2c] sm:$0xf]
        %v471 = vld [vmem:[%s356 + $0x30] sm:$0xf]
        %v472 = vld [vmem:[%s356 + $0x34] sm:$0xf]
        %v473 = vld [vmem:[%s356 + $0x38] sm:$0xf]
        %v474 = vld [vmem:[%s356 + $0x3c] sm:$0xf]
        %v475 = vld [vmem:[%s363] sm:$0xff]
        %v476 = vld [vmem:[%s363 + $0x8] sm:$0xff]
        %v477 = vld [vmem:[%s363 + $0x10] sm:$0xff]
        %v478 = vld [vmem:[%s363 + $0x18] sm:$0xff]
        %v479 = vld [vmem:[%s363 + $0x20] sm:$0xff]
        %v480 = vld [vmem:[%s363 + $0x28] sm:$0xff]
        %v481 = vld [vmem:[%s363 + $0x30] sm:$0xff]
        %v482 = vld [vmem:[%s363 + $0x38] sm:$0xff]
        %v483 = vld [vmem:[%s363 + $0x40] sm:$0xff]
        %v484 = vld [vmem:[%s363 + $0x48] sm:$0xff]
        %v485 = vld [vmem:[%s363 + $0x50] sm:$0xff]
        %v486 = vld [vmem:[%s363 + $0x58] sm:$0xff]
        %v487 = vld [vmem:[%s363 + $0x60] sm:$0xff]
        %v488 = vld [vmem:[%s363 + $0x68] sm:$0xff]
        %v489 = vld [vmem:[%s363 + $0x70] sm:$0xff]
        %v490 = vld [vmem:[%s363 + $0x78] sm:$0xff]
        %v507 = vunpack.c.l.b16 %v459
        %v508 = vunpack.c.l.b16 %v460
        %v509 = vunpack.c.l.b16 %v461
        %v510 = vunpack.c.l.b16 %v462
        %v511 = vunpack.c.l.b16 %v463
        %v512 = vunpack.c.l.b16 %v464
        %v513 = vunpack.c.l.b16 %v465
        %v514 = vunpack.c.l.b16 %v466
        %v515 = vunpack.c.l.b16 %v467
        %v516 = vunpack.c.l.b16 %v468
        %v517 = vunpack.c.l.b16 %v469
        %v518 = vunpack.c.l.b16 %v470
        %v519 = vunpack.c.l.b16 %v471
        %v520 = vunpack.c.l.b16 %v472
        %v521 = vunpack.c.l.b16 %v473
        %v522 = vunpack.c.l.b16 %v474
        %v523 = vpack.c.b16 %v508, %v507
        %v524 = vpack.c.b16 %v510, %v509
        %v525 = vpack.c.b16 %v512, %v511
        %v526 = vpack.c.b16 %v514, %v513
        %v527 = vpack.c.b16 %v516, %v515
        %v528 = vpack.c.b16 %v518, %v517
        %v529 = vpack.c.b16 %v520, %v519
        %v530 = vpack.c.b16 %v522, %v521
        %v555 = vunpack.c.l.b16 %v475
        %v556 = vunpack.c.h.b16 %v475
        %v557 = vunpack.c.l.b16 %v476
        %v558 = vunpack.c.h.b16 %v476
        %v559 = vunpack.c.l.b16 %v477
        %v560 = vunpack.c.h.b16 %v477
        %v561 = vunpack.c.l.b16 %v478
        %v562 = vunpack.c.h.b16 %v478
        %v563 = vunpack.c.l.b16 %v479
        %v564 = vunpack.c.h.b16 %v479
        %v565 = vunpack.c.l.b16 %v480
        %v566 = vunpack.c.h.b16 %v480
        %v567 = vunpack.c.l.b16 %v481
        %v568 = vunpack.c.h.b16 %v481
        %v569 = vunpack.c.l.b16 %v482
        %v570 = vunpack.c.h.b16 %v482
        %v571 = vunpack.c.l.b16 %v483
        %v572 = vunpack.c.h.b16 %v483
        %v573 = vunpack.c.l.b16 %v484
        %v574 = vunpack.c.h.b16 %v484
        %v575 = vunpack.c.l.b16 %v485
        %v576 = vunpack.c.h.b16 %v485
        %v577 = vunpack.c.l.b16 %v486
        %v578 = vunpack.c.h.b16 %v486
        %v579 = vunpack.c.l.b16 %v487
        %v580 = vunpack.c.h.b16 %v487
        %v581 = vunpack.c.l.b16 %v488
        %v582 = vunpack.c.h.b16 %v488
        %v583 = vunpack.c.l.b16 %v489
        %v584 = vunpack.c.h.b16 %v489
        %v585 = vunpack.c.l.b16 %v490
        %v586 = vunpack.c.h.b16 %v490
        %v587 = vpack.c.b16 %v557, %v555
        %v588 = vpack.c.b16 %v558, %v556
        %v589 = vpack.c.b16 %v561, %v559
        %v590 = vpack.c.b16 %v562, %v560
        %v591 = vpack.c.b16 %v565, %v563
        %v592 = vpack.c.b16 %v566, %v564
        %v593 = vpack.c.b16 %v569, %v567
        %v594 = vpack.c.b16 %v570, %v568
        %v595 = vpack.c.b16 %v573, %v571
        %v596 = vpack.c.b16 %v574, %v572
        %v597 = vpack.c.b16 %v577, %v575
        %v598 = vpack.c.b16 %v578, %v576
        %v599 = vpack.c.b16 %v581, %v579
        %v600 = vpack.c.b16 %v582, %v580
        %v601 = vpack.c.b16 %v585, %v583
        %v602 = vpack.c.b16 %v586, %v584
        %619 = vmatprep.subr.bf16.mxu0 %v588
        %620 = vmatpush1.bf16.msra.mxu0 %v587
        %621 = vmatprep.subr.bf16.mxu0 %v590
        %622 = vmatpush1.bf16.msra.mxu0 %v589
        %623 = vmatprep.subr.bf16.mxu0 %v592
        %624 = vmatpush1.bf16.msra.mxu0 %v591
        %625 = vmatprep.subr.bf16.mxu0 %v594
        %626 = vmatpush1.bf16.msra.mxu0 %v593
        %627 = vmatprep.subr.bf16.mxu0 %v596
        %628 = vmatpush1.bf16.msra.mxu0 %v595
        %629 = vmatprep.subr.bf16.mxu0 %v598
        %630 = vmatpush1.bf16.msra.mxu0 %v597
        %631 = vmatprep.subr.bf16.mxu0 %v600
        %632 = vmatpush1.bf16.msra.mxu0 %v599
        %633 = vmatprep.subr.bf16.mxu0 %v602
        %634 = vmatpush1.bf16.msra.mxu0 %v601
        %635 = vmatprep.subr.bf16.mxu0 0
        %636 = vmatpush1.bf16.msra.mxu0 0
        %637 = vmatprep.subr.bf16.mxu0 0
        %638 = vmatpush1.bf16.msra.mxu0 0
        %639 = vmatprep.subr.bf16.mxu0 0
        %640 = vmatpush1.bf16.msra.mxu0 0
        %641 = vmatprep.subr.bf16.mxu0 0
        %642 = vmatpush1.bf16.msra.mxu0 0
        %643 = vmatprep.subr.bf16.mxu0 0
        %644 = vmatpush1.bf16.msra.mxu0 0
        %645 = vmatprep.subr.bf16.mxu0 0
        %646 = vmatpush1.bf16.msra.mxu0 0
        %647 = vmatprep.subr.bf16.mxu0 0
        %648 = vmatpush1.bf16.msra.mxu0 0
        %649 = vmatprep.subr.bf16.mxu0 0
        %650 = vmatpush1.bf16.msra.mxu0 0
        %651 = vmatprep.mubr.bf16.mxu0 0
        %652 = vmatmul.mubr.bf16.gmra.mrb[0].mxu0 %v523
        %v653 = vpop.f32.mrb[0].mxu0
        %v654 = vadd.f32 0.0, %v653
        %v655 = vpop.f32.mrb[0].mxu0
        %v656 = vadd.f32 0.0, %v655
        %v657 = vpop.f32.mrb[0].mxu0
        %v658 = vadd.f32 0.0, %v657
        %v659 = vpop.f32.mrb[0].mxu0
        %v660 = vadd.f32 0.0, %v659
        %661 = vmatprep.mubr.bf16.mxu0 0
        %662 = vmatmul.mubr.bf16.gmra.mrb[0].mxu0 %v524
        %v663 = vpop.f32.mrb[0].mxu0
        %v664 = vadd.f32 0.0, %v663
        %v665 = vpop.f32.mrb[0].mxu0
        %v666 = vadd.f32 0.0, %v665
        %v667 = vpop.f32.mrb[0].mxu0
        %v668 = vadd.f32 0.0, %v667
        %v669 = vpop.f32.mrb[0].mxu0
        %v670 = vadd.f32 0.0, %v669
        %671 = vmatprep.mubr.bf16.mxu0 0
        %672 = vmatmul.mubr.bf16.gmra.mrb[0].mxu0 %v525
        %v673 = vpop.f32.mrb[0].mxu0
        %v674 = vadd.f32 0.0, %v673
        %v675 = vpop.f32.mrb[0].mxu0
        %v676 = vadd.f32 0.0, %v675
        %v677 = vpop.f32.mrb[0].mxu0
        %v678 = vadd.f32 0.0, %v677
        %v679 = vpop.f32.mrb[0].mxu0
        %v680 = vadd.f32 0.0, %v679
        %681 = vmatprep.mubr.bf16.mxu0 0
        %682 = vmatmul.mubr.bf16.gmra.mrb[0].mxu0 %v526
        %v683 = vpop.f32.mrb[0].mxu0
        %v684 = vadd.f32 0.0, %v683
        %v685 = vpop.f32.mrb[0].mxu0
        %v686 = vadd.f32 0.0, %v685
        %v687 = vpop.f32.mrb[0].mxu0
        %v688 = vadd.f32 0.0, %v687
        %v689 = vpop.f32.mrb[0].mxu0
        %v690 = vadd.f32 0.0, %v689
        %691 = vmatprep.mubr.bf16.mxu0 0
        %692 = vmatmul.mubr.bf16.gmra.mrb[0].mxu0 %v527
        %v693 = vpop.f32.mrb[0].mxu0
        %v694 = vadd.f32 0.0, %v693
        %v695 = vpop.f32.mrb[0].mxu0
        %v696 = vadd.f32 0.0, %v695
        %v697 = vpop.f32.mrb[0].mxu0
        %v698 = vadd.f32 0.0, %v697
        %v699 = vpop.f32.mrb[0].mxu0
        %v700 = vadd.f32 0.0, %v699
        %701 = vmatprep.mubr.bf16.mxu0 0
        %702 = vmatmul.mubr.bf16.gmra.mrb[0].mxu0 %v528
        %v703 = vpop.f32.mrb[0].mxu0
        %v704 = vadd.f32 0.0, %v703
        %v705 = vpop.f32.mrb[0].mxu0
        %v706 = vadd.f32 0.0, %v705
        %v707 = vpop.f32.mrb[0].mxu0
        %v708 = vadd.f32 0.0, %v707
        %v709 = vpop.f32.mrb[0].mxu0
        %v710 = vadd.f32 0.0, %v709
        %711 = vmatprep.mubr.bf16.mxu0 0
        %712 = vmatmul.mubr.bf16.gmra.mrb[0].mxu0 %v529
        %v713 = vpop.f32.mrb[0].mxu0
        %v714 = vadd.f32 0.0, %v713
        %v715 = vpop.f32.mrb[0].mxu0
        %v716 = vadd.f32 0.0, %v715
        %v717 = vpop.f32.mrb[0].mxu0
        %v718 = vadd.f32 0.0, %v717
        %v719 = vpop.f32.mrb[0].mxu0
        %v720 = vadd.f32 0.0, %v719
        %721 = vmatprep.mubr.bf16.mxu0 0
        %722 = vmatmul.mubr.bf16.gmra.mrb[0].mxu0 %v530
        %v723 = vpop.f32.mrb[0].mxu0
        %v724 = vadd.f32 0.0, %v723
        %v725 = vpop.f32.mrb[0].mxu0
        %v726 = vadd.f32 0.0, %v725
        %v727 = vpop.f32.mrb[0].mxu0
        %v728 = vadd.f32 0.0, %v727
        %v729 = vpop.f32.mrb[0].mxu0
        %v730 = vadd.f32 0.0, %v729
        %731 = vdwg.mxu0
        %v732 = vadd.f32 %v427, %v654
        %v733 = vadd.f32 %v428, %v656
        %v734 = vadd.f32 %v429, %v658
        %v735 = vadd.f32 %v430, %v660
        %v736 = vadd.f32 %v431, %v664
        %v737 = vadd.f32 %v432, %v666
        %v738 = vadd.f32 %v433, %v668
        %v739 = vadd.f32 %v434, %v670
        %v740 = vadd.f32 %v435, %v674
        %v741 = vadd.f32 %v436, %v676
        %v742 = vadd.f32 %v437, %v678
        %v743 = vadd.f32 %v438, %v680
        %v744 = vadd.f32 %v439, %v684
        %v745 = vadd.f32 %v440, %v686
        %v746 = vadd.f32 %v441, %v688
        %v747 = vadd.f32 %v442, %v690
        %v748 = vadd.f32 %v443, %v694
        %v749 = vadd.f32 %v444, %v696
        %v750 = vadd.f32 %v445, %v698
        %v751 = vadd.f32 %v446, %v700
        %v752 = vadd.f32 %v447, %v704
        %v753 = vadd.f32 %v448, %v706
        %v754 = vadd.f32 %v449, %v708
        %v755 = vadd.f32 %v450, %v710
        %v756 = vadd.f32 %v451, %v714
        %v757 = vadd.f32 %v452, %v716
        %v758 = vadd.f32 %v453, %v718
        %v759 = vadd.f32 %v454, %v720
        %v760 = vadd.f32 %v455, %v724
        %v761 = vadd.f32 %v456, %v726
        %v762 = vadd.f32 %v457, %v728
        %v763 = vadd.f32 %v458, %v730
        %764 = vst [vmem:[#allocation2] sm:$0xff] %v732
        %765 = vst [vmem:[#allocation2 + $0x8] sm:$0xff] %v733
        %766 = vst [vmem:[#allocation2 + $0x10] sm:$0xff] %v734
        %767 = vst [vmem:[#allocation2 + $0x18] sm:$0xff] %v735
        %768 = vst [vmem:[#allocation2 + $0x20] sm:$0xff] %v736
        %769 = vst [vmem:[#allocation2 + $0x28] sm:$0xff] %v737
        %770 = vst [vmem:[#allocation2 + $0x30] sm:$0xff] %v738
        %771 = vst [vmem:[#allocation2 + $0x38] sm:$0xff] %v739
        %772 = vst [vmem:[#allocation2 + $0x40] sm:$0xff] %v740
        %773 = vst [vmem:[#allocation2 + $0x48] sm:$0xff] %v741
        %774 = vst [vmem:[#allocation2 + $0x50] sm:$0xff] %v742
        %775 = vst [vmem:[#allocation2 + $0x58] sm:$0xff] %v743
        %776 = vst [vmem:[#allocation2 + $0x60] sm:$0xff] %v744
        %777 = vst [vmem:[#allocation2 + $0x68] sm:$0xff] %v745
        %778 = vst [vmem:[#allocation2 + $0x70] sm:$0xff] %v746
        %779 = vst [vmem:[#allocation2 + $0x78] sm:$0xff] %v747
        %780 = vst [vmem:[#allocation2 + $0x80] sm:$0xff] %v748
        %781 = vst [vmem:[#allocation2 + $0x88] sm:$0xff] %v749
        %782 = vst [vmem:[#allocation2 + $0x90] sm:$0xff] %v750
        %783 = vst [vmem:[#allocation2 + $0x98] sm:$0xff] %v751
        %784 = vst [vmem:[#allocation2 + $0xa0] sm:$0xff] %v752
        %785 = vst [vmem:[#allocation2 + $0xa8] sm:$0xff] %v753
        %786 = vst [vmem:[#allocation2 + $0xb0] sm:$0xff] %v754
        %787 = vst [vmem:[#allocation2 + $0xb8] sm:$0xff] %v755
        %788 = vst [vmem:[#allocation2 + $0xc0] sm:$0xff] %v756
        %789 = vst [vmem:[#allocation2 + $0xc8] sm:$0xff] %v757
        %790 = vst [vmem:[#allocation2 + $0xd0] sm:$0xff] %v758
        %791 = vst [vmem:[#allocation2 + $0xd8] sm:$0xff] %v759
        %792 = vst [vmem:[#allocation2 + $0xe0] sm:$0xff] %v760
        %793 = vst [vmem:[#allocation2 + $0xe8] sm:$0xff] %v761
        %794 = vst [vmem:[#allocation2 + $0xf0] sm:$0xff] %v762
        %795 = vst [vmem:[#allocation2 + $0xf8] sm:$0xff] %v763
        %p796 = scmp.eq.s32.totalorder %s20, 1
        // Predicated region
        $region112: #{llama_decoder_layer.5} parent=98 // pred_check
          %p797 = pneg %p796
        $region113: #{llama_decoder_layer.5} parent=98 // pred_check_branch
          %799 = sbr.rel (%p797) target = $region115
        $region114: #{llama_decoder_layer.5} parent=98 // pred_region
          %v800 = vld [vmem:[#allocation2] sm:$0xff]
          %v801 = vld [vmem:[#allocation2 + $0x8] sm:$0xff]
          %v802 = vld [vmem:[#allocation2 + $0x10] sm:$0xff]
          %v803 = vld [vmem:[#allocation2 + $0x18] sm:$0xff]
          %v804 = vld [vmem:[#allocation2 + $0x20] sm:$0xff]
          %v805 = vld [vmem:[#allocation2 + $0x28] sm:$0xff]
          %v806 = vld [vmem:[#allocation2 + $0x30] sm:$0xff]
          %v807 = vld [vmem:[#allocation2 + $0x38] sm:$0xff]
          %v808 = vld [vmem:[#allocation2 + $0x40] sm:$0xff]
          %v809 = vld [vmem:[#allocation2 + $0x48] sm:$0xff]
          %v810 = vld [vmem:[#allocation2 + $0x50] sm:$0xff]
          %v811 = vld [vmem:[#allocation2 + $0x58] sm:$0xff]
          %v812 = vld [vmem:[#allocation2 + $0x60] sm:$0xff]
          %v813 = vld [vmem:[#allocation2 + $0x68] sm:$0xff]
          %v814 = vld [vmem:[#allocation2 + $0x70] sm:$0xff]
          %v815 = vld [vmem:[#allocation2 + $0x78] sm:$0xff]
          %v816 = vld [vmem:[#allocation2 + $0x80] sm:$0xff]
          %v817 = vld [vmem:[#allocation2 + $0x88] sm:$0xff]
          %v818 = vld [vmem:[#allocation2 + $0x90] sm:$0xff]
          %v819 = vld [vmem:[#allocation2 + $0x98] sm:$0xff]
          %v820 = vld [vmem:[#allocation2 + $0xa0] sm:$0xff]
          %v821 = vld [vmem:[#allocation2 + $0xa8] sm:$0xff]
          %v822 = vld [vmem:[#allocation2 + $0xb0] sm:$0xff]
          %v823 = vld [vmem:[#allocation2 + $0xb8] sm:$0xff]
          %v824 = vld [vmem:[#allocation2 + $0xc0] sm:$0xff]
          %v825 = vld [vmem:[#allocation2 + $0xc8] sm:$0xff]
          %v826 = vld [vmem:[#allocation2 + $0xd0] sm:$0xff]
          %v827 = vld [vmem:[#allocation2 + $0xd8] sm:$0xff]
          %v828 = vld [vmem:[#allocation2 + $0xe0] sm:$0xff]
          %v829 = vld [vmem:[#allocation2 + $0xe8] sm:$0xff]
          %v830 = vld [vmem:[#allocation2 + $0xf0] sm:$0xff]
          %v831 = vld [vmem:[#allocation2 + $0xf8] sm:$0xff]
          %v832 = vpack.c.bf16 %v802, %v800
          %v833 = vpack.c.bf16 %v803, %v801
          %v834 = vpack.c.bf16 %v806, %v804
          %v835 = vpack.c.bf16 %v807, %v805
          %v836 = vpack.c.bf16 %v810, %v808
          %v837 = vpack.c.bf16 %v811, %v809
          %v838 = vpack.c.bf16 %v814, %v812
          %v839 = vpack.c.bf16 %v815, %v813
          %v840 = vpack.c.bf16 %v818, %v816
          %v841 = vpack.c.bf16 %v819, %v817
          %v842 = vpack.c.bf16 %v822, %v820
          %v843 = vpack.c.bf16 %v823, %v821
          %v844 = vpack.c.bf16 %v826, %v824
          %v845 = vpack.c.bf16 %v827, %v825
          %v846 = vpack.c.bf16 %v830, %v828
          %v847 = vpack.c.bf16 %v831, %v829
          %v864 = vunpack.c.l.b16 %v832
          %v865 = vunpack.c.l.b16 %v833
          %v866 = vunpack.c.h.b16 %v832
          %v867 = vunpack.c.h.b16 %v833
          %v868 = vunpack.c.l.b16 %v834
          %v869 = vunpack.c.l.b16 %v835
          %v870 = vunpack.c.h.b16 %v834
          %v871 = vunpack.c.h.b16 %v835
          %v872 = vunpack.c.l.b16 %v836
          %v873 = vunpack.c.l.b16 %v837
          %v874 = vunpack.c.h.b16 %v836
          %v875 = vunpack.c.h.b16 %v837
          %v876 = vunpack.c.l.b16 %v838
          %v877 = vunpack.c.l.b16 %v839
          %v878 = vunpack.c.h.b16 %v838
          %v879 = vunpack.c.h.b16 %v839
          %v880 = vunpack.c.l.b16 %v840
          %v881 = vunpack.c.l.b16 %v841
          %v882 = vunpack.c.h.b16 %v840
          %v883 = vunpack.c.h.b16 %v841
          %v884 = vunpack.c.l.b16 %v842
          %v885 = vunpack.c.l.b16 %v843
          %v886 = vunpack.c.h.b16 %v842
          %v887 = vunpack.c.h.b16 %v843
          %v888 = vunpack.c.l.b16 %v844
          %v889 = vunpack.c.l.b16 %v845
          %v890 = vunpack.c.h.b16 %v844
          %v891 = vunpack.c.h.b16 %v845
          %v892 = vunpack.c.l.b16 %v846
          %v893 = vunpack.c.l.b16 %v847
          %v894 = vunpack.c.h.b16 %v846
          %v895 = vunpack.c.h.b16 %v847
          %v896 = vpack.c.b16 %v865, %v864
          %v897 = vpack.c.b16 %v867, %v866
          %v898 = vpack.c.b16 %v869, %v868
          %v899 = vpack.c.b16 %v871, %v870
          %v900 = vpack.c.b16 %v873, %v872
          %v901 = vpack.c.b16 %v875, %v874
          %v902 = vpack.c.b16 %v877, %v876
          %v903 = vpack.c.b16 %v879, %v878
          %v904 = vpack.c.b16 %v881, %v880
          %v905 = vpack.c.b16 %v883, %v882
          %v906 = vpack.c.b16 %v885, %v884
          %v907 = vpack.c.b16 %v887, %v886
          %v908 = vpack.c.b16 %v889, %v888
          %v909 = vpack.c.b16 %v891, %v890
          %v910 = vpack.c.b16 %v893, %v892
          %v911 = vpack.c.b16 %v895, %v894
          %928 = vst [vmem:[%s384] sm:$0xff] %v896
          %929 = vst [vmem:[%s384 + $0x8] sm:$0xff] %v897
          %930 = vst [vmem:[%s384 + $0x10] sm:$0xff] %v898
          %931 = vst [vmem:[%s384 + $0x18] sm:$0xff] %v899
          %932 = vst [vmem:[%s384 + $0x20] sm:$0xff] %v900
          %933 = vst [vmem:[%s384 + $0x28] sm:$0xff] %v901
          %934 = vst [vmem:[%s384 + $0x30] sm:$0xff] %v902
          %935 = vst [vmem:[%s384 + $0x38] sm:$0xff] %v903
          %936 = vst [vmem:[%s384 + $0x40] sm:$0xff] %v904
          %937 = vst [vmem:[%s384 + $0x48] sm:$0xff] %v905
          %938 = vst [vmem:[%s384 + $0x50] sm:$0xff] %v906
          %939 = vst [vmem:[%s384 + $0x58] sm:$0xff] %v907
          %940 = vst [vmem:[%s384 + $0x60] sm:$0xff] %v908
          %941 = vst [vmem:[%s384 + $0x68] sm:$0xff] %v909
          %942 = vst [vmem:[%s384 + $0x70] sm:$0xff] %v910
          %943 = vst [vmem:[%s384 + $0x78] sm:$0xff] %v911
        $region115: #{llama_decoder_layer.5} parent=98 // pred_fallthru
          _
        %s944 = sand.u32 %s98, 1
        %s945 = sand.u32 %s98, 1
        %s946 = smul.addr %s945, 128
        %s947 = scalar_lea.vmem [#allocation5], %s946
        // Predicated region
        $region116: #{llama_decoder_layer.5} parent=98 // pred_check
          %p948 = pneg %p108
        $region117: #{llama_decoder_layer.5} parent=98 // pred_check_branch
          %950 = sbr.rel (%p948) target = $region119
        $region118: #{llama_decoder_layer.5} parent=98 // pred_region
          %s951 = smul.u32 16, %s18
          %s952 = smul.u32 2, %s19
          %s953 = smul.addr %s951, 6
          %s954 = sadd.s32 %s952, %s953
          %s955 = smul.addr %s954, 4
          %s956 = scalar_lea.vmem %s2, %s955
          // Predicated region
          $region120: #{llama_decoder_layer.5} parent=118 // pred_check
            _
          $region121: #{llama_decoder_layer.5} parent=118 // pred_check_branch
            %958 = sbr.rel (0) target = $region123
          $region122: #{llama_decoder_layer.5} parent=118 // pred_region
            // Predicated region
            $region124: #{llama_decoder_layer.5} parent=122 // pred_check
              _
            $region125: #{llama_decoder_layer.5} parent=122 // pred_check_branch
              %960 = sbr.rel (0) target = $region127
            $region126: #{llama_decoder_layer.5} parent=122 // pred_region
              // Predicated region
              $region139: #{llama_decoder_layer.5} parent=126 // pred_check
                _
              $region140: #{llama_decoder_layer.5} parent=126 // pred_check_branch
                %1005 = sbr.rel (0) target = $region142
              $region141: #{llama_decoder_layer.5} parent=126 // pred_region
                loop: start=0, step=1, limit=1
                $region143: #{llama_decoder_layer.5} parent=141 // loop_pre_header
                  _
                $region144: #{llama_decoder_layer.5} parent=141 // loop_header
                  %s1007 = sphi 0, %s1011
                  %p1008 = scmp.ge.s32.totalorder %s1007, 1
                  %s1012 = sphi %s947, %s947
                  %s1013 = sphi %s956, %s956
                $region145: #{llama_decoder_layer.5} parent=141 // loop_header_branch
                  %1010 = sbr.rel (%p1008) target = $region149
                $region146: #{llama_decoder_layer.5} parent=141 // loop_body
                  %v1014 = vld [vmem:[%s1012] sm:$0xff]
                  %1015 = vst [vmem:[%s1013] sm:$0xff] %v1014
                  %v1016 = vld [vmem:[%s1012 + $0x8] sm:$0xff]
                  %1017 = vst [vmem:[%s1013 + $0x18] sm:$0xff] %v1016
                  %v1018 = vld [vmem:[%s1012 + $0x10] sm:$0xff]
                  %1019 = vst [vmem:[%s1013 + $0x30] sm:$0xff] %v1018
                  %v1020 = vld [vmem:[%s1012 + $0x18] sm:$0xff]
                  %1021 = vst [vmem:[%s1013 + $0x48] sm:$0xff] %v1020
                  %v1022 = vld [vmem:[%s1012 + $0x20] sm:$0xff]
                  %1023 = vst [vmem:[%s1013 + $0x60] sm:$0xff] %v1022
                  %v1024 = vld [vmem:[%s1012 + $0x28] sm:$0xff]
                  %1025 = vst [vmem:[%s1013 + $0x78] sm:$0xff] %v1024
                  %v1026 = vld [vmem:[%s1012 + $0x30] sm:$0xff]
                  %1027 = vst [vmem:[%s1013 + $0x90] sm:$0xff] %v1026
                  %v1028 = vld [vmem:[%s1012 + $0x38] sm:$0xff]
                  %1029 = vst [vmem:[%s1013 + $0xa8] sm:$0xff] %v1028
                  %v1030 = vld [vmem:[%s1012 + $0x40] sm:$0xff]
                  %1031 = vst [vmem:[%s1013 + $0xc0] sm:$0xff] %v1030
                  %v1032 = vld [vmem:[%s1012 + $0x48] sm:$0xff]
                  %1033 = vst [vmem:[%s1013 + $0xd8] sm:$0xff] %v1032
                  %v1034 = vld [vmem:[%s1012 + $0x50] sm:$0xff]
                  %1035 = vst [vmem:[%s1013 + $0xf0] sm:$0xff] %v1034
                  %v1036 = vld [vmem:[%s1012 + $0x58] sm:$0xff]
                  %1037 = vst [vmem:[%s1013 + $0x108] sm:$0xff] %v1036
                  %v1038 = vld [vmem:[%s1012 + $0x60] sm:$0xff]
                  %1039 = vst [vmem:[%s1013 + $0x120] sm:$0xff] %v1038
                  %v1040 = vld [vmem:[%s1012 + $0x68] sm:$0xff]
                  %1041 = vst [vmem:[%s1013 + $0x138] sm:$0xff] %v1040
                  %v1042 = vld [vmem:[%s1012 + $0x70] sm:$0xff]
                  %1043 = vst [vmem:[%s1013 + $0x150] sm:$0xff] %v1042
                  %v1044 = vld [vmem:[%s1012 + $0x78] sm:$0xff]
                  %1045 = vst [vmem:[%s1013 + $0x168] sm:$0xff] %v1044
                $region147: #{llama_decoder_layer.5} parent=141 // loop_footer
                  %s1011 = sadd.s32 1, %s1007
                $region148: #{llama_decoder_layer.5} parent=141 // loop_footer_branch
                  %1006 = sbr.rel target = $region144
                $region149: #{llama_decoder_layer.5} parent=141 // loop_exit
                  _
              $region142: #{llama_decoder_layer.5} parent=126 // pred_fallthru
                _
              // Predicated region
              $region150: #{llama_decoder_layer.5} parent=126 // pred_check
                _
              $region151: #{llama_decoder_layer.5} parent=126 // pred_check_branch
                %1047 = sbr.rel target = $region153
              $region152: #{llama_decoder_layer.5} parent=126 // pred_region
                _
              $region153: #{llama_decoder_layer.5} parent=126 // pred_fallthru
                _
            $region127: #{llama_decoder_layer.5} parent=122 // pred_fallthru
              _
            // Predicated region
            $region128: #{llama_decoder_layer.5} parent=122 // pred_check
              _
            $region129: #{llama_decoder_layer.5} parent=122 // pred_check_branch
              %962 = sbr.rel target = $region131
            $region130: #{llama_decoder_layer.5} parent=122 // pred_region
              loop: start=0, step=1, limit=1
              $region132: #{llama_decoder_layer.5} parent=130 // loop_pre_header
                _
              $region133: #{llama_decoder_layer.5} parent=130 // loop_header
                %s965 = sphi 0, %s969
                %p966 = scmp.ge.s32.totalorder %s965, 1
                %s970 = sphi %s947, %s947
                %s971 = sphi %s956, %s956
              $region134: #{llama_decoder_layer.5} parent=130 // loop_header_branch
                %968 = sbr.rel (%p966) target = $region138
              $region135: #{llama_decoder_layer.5} parent=130 // loop_body
                %v972 = vld [vmem:[%s970] sm:$0xff]
                %973 = vst [vmem:[%s971] sm:$0xff] %v972
                %v974 = vld [vmem:[%s970 + $0x8] sm:$0xff]
                %975 = vst [vmem:[%s971 + $0x18] sm:$0xff] %v974
                %v976 = vld [vmem:[%s970 + $0x10] sm:$0xff]
                %977 = vst [vmem:[%s971 + $0x30] sm:$0xff] %v976
                %v978 = vld [vmem:[%s970 + $0x18] sm:$0xff]
                %979 = vst [vmem:[%s971 + $0x48] sm:$0xff] %v978
                %v980 = vld [vmem:[%s970 + $0x20] sm:$0xff]
                %981 = vst [vmem:[%s971 + $0x60] sm:$0xff] %v980
                %v982 = vld [vmem:[%s970 + $0x28] sm:$0xff]
                %983 = vst [vmem:[%s971 + $0x78] sm:$0xff] %v982
                %v984 = vld [vmem:[%s970 + $0x30] sm:$0xff]
                %985 = vst [vmem:[%s971 + $0x90] sm:$0xff] %v984
                %v986 = vld [vmem:[%s970 + $0x38] sm:$0xff]
                %987 = vst [vmem:[%s971 + $0xa8] sm:$0xff] %v986
                %v988 = vld [vmem:[%s970 + $0x40] sm:$0xff]
                %989 = vst [vmem:[%s971 + $0xc0] sm:$0xff] %v988
                %v990 = vld [vmem:[%s970 + $0x48] sm:$0xff]
                %991 = vst [vmem:[%s971 + $0xd8] sm:$0xff] %v990
                %v992 = vld [vmem:[%s970 + $0x50] sm:$0xff]
                %993 = vst [vmem:[%s971 + $0xf0] sm:$0xff] %v992
                %v994 = vld [vmem:[%s970 + $0x58] sm:$0xff]
                %995 = vst [vmem:[%s971 + $0x108] sm:$0xff] %v994
                %v996 = vld [vmem:[%s970 + $0x60] sm:$0xff]
                %997 = vst [vmem:[%s971 + $0x120] sm:$0xff] %v996
                %v998 = vld [vmem:[%s970 + $0x68] sm:$0xff]
                %999 = vst [vmem:[%s971 + $0x138] sm:$0xff] %v998
                %v1000 = vld [vmem:[%s970 + $0x70] sm:$0xff]
                %1001 = vst [vmem:[%s971 + $0x150] sm:$0xff] %v1000
                %v1002 = vld [vmem:[%s970 + $0x78] sm:$0xff]
                %1003 = vst [vmem:[%s971 + $0x168] sm:$0xff] %v1002
              $region136: #{llama_decoder_layer.5} parent=130 // loop_footer
                %s969 = sadd.s32 1, %s965
              $region137: #{llama_decoder_layer.5} parent=130 // loop_footer_branch
                %964 = sbr.rel target = $region133
              $region138: #{llama_decoder_layer.5} parent=130 // loop_exit
                _
            $region131: #{llama_decoder_layer.5} parent=122 // pred_fallthru
              _
          $region123: #{llama_decoder_layer.5} parent=118 // pred_fallthru
            _
          %1048 = vnop
        $region119: #{llama_decoder_layer.5} parent=98 // pred_fallthru
          _
      $region99: #{llama_decoder_layer.5} parent=5 // pred_fallthru
        _
      %p1049 = scmp.le.s32.totalorder 2, %s8
      // Predicated region
      $region154: #{llama_decoder_layer.5} parent=5 // pred_check
        %p1050 = pneg %p1049
      $region155: #{llama_decoder_layer.5} parent=5 // pred_check_branch
        %1052 = sbr.rel (%p1050) target = $region157
      $region156: #{llama_decoder_layer.5} parent=5 // pred_region
        %s1053 = ssub.s32 %s8, 2
        // Predicated region
        $region158: #{llama_decoder_layer.5} parent=156 // pred_check
          %p1054 = pneg %p114
        $region159: #{llama_decoder_layer.5} parent=156 // pred_check_branch
          %1056 = sbr.rel (%p1054) target = $region161
        $region160: #{llama_decoder_layer.5} parent=156 // pred_region
          %s1057 = sand.u32 %s99, 1
          %s1058 = sand.u32 %s99, 1
          %s1059 = smul.addr %s1058, 128
          %s1060 = scalar_lea.vmem [#allocation5], %s1059
        $region161: #{llama_decoder_layer.5} parent=156 // pred_fallthru
          _
      $region157: #{llama_decoder_layer.5} parent=5 // pred_fallthru
        _
    $region6: #{llama_decoder_layer.5} parent=1 // loop_footer
      %s12 = sadd.s32 1, %s8
    $region7: #{llama_decoder_layer.5} parent=1 // loop_footer_branch
      %7 = sbr.rel target = $region3
    $region8: #{llama_decoder_layer.5} parent=1 // loop_exit
      _

// kernel: llama_decoder_layer.6
$region0: #{llama_decoder_layer.6}
  #allocation0 [shape = 'u32[]', space=smem, size = 0x4, offset = 0x4, fixed_abs, tag = 'smem constant byte address 0x4 - core index']
  #allocation1 [shape = 'u32[144,128]{1,0:T(1,128)}', space=vmem, size = 0x12000, scoped, tag = 'internal scratch']
  #allocation2 [shape = 'f32[128,1]{1,0:T(8,128)}', space=vmem, size = 0x10000, scoped, tag = 'scratch operand']
  #allocation3 [shape = 'f32[128,1]{1,0:T(8,128)}', space=vmem, size = 0x10000, scoped, tag = 'scratch operand']
  #allocation4 [shape = 'f32[128,128]{1,0:T(8,128)}', space=vmem, size = 0x10000, scoped, tag = 'scratch operand']
  %s0 = inlined_call_operand.vmem [shape: bf16[2,2,128,384], index: 0, kind: input, shape index: {}, may-alias: {0,1}]
  %s1 = inlined_call_operand.vmem [shape: bf16[2,2,128,384], index: 1, kind: input, shape index: {}, may-alias: {0,1}]
  %s2 = inlined_call_operand.vmem [shape: bf16[2,2,128,128], index: 2, kind: output, shape index: {}]
  %s3 = sld [smem:[#allocation0]]
  $region49: #{llama_decoder_layer.6} parent=0
    _
  %s5 = ssub.s32 1, %s3
  %s6 = scalar_select 0, %s5, %s3
  loop: start=0, step=1, limit=10
  $region2: #{llama_decoder_layer.6} parent=0 // loop_pre_header
    _
  $region3: #{llama_decoder_layer.6} parent=0 // loop_header
    %s8 = sphi 0, %s12
    %p9 = scmp.ge.s32.totalorder %s8, 10
    %s15 = sphi 0, %s41
    %s16 = sphi 0, %s37
    %s17 = sphi 0, %s33
    %s18 = sphi 0, %s29
    %s19 = sphi 0, %s15
    %s20 = sphi 0, %s16
    %s21 = sphi 0, %s17
    %s22 = sphi 0, %s18
    %s23 = sphi 0, %s19
    %s24 = sphi 0, %s20
    %s25 = sphi 0, %s21
    %s26 = sphi 0, %s22
    %s48 = sphi 0, %s50
    %s51 = sphi 0, %s48
    %s52 = sphi 0, %s51
    %s68 = sphi 0, %s52
    %s78 = sphi 0, %s80
    %s81 = sphi 0, %s78
    %s82 = sphi 0, %s81
    %s98 = sphi 0, %s82
    %s108 = sphi 0, %s110
    %s111 = sphi 0, %s108
    %s112 = sphi 0, %s111
    %s128 = sphi 0, %s112
  $region4: #{llama_decoder_layer.6} parent=0 // loop_header_branch
    %11 = sbr.rel (%p9) target = $region8
  $region5: #{llama_decoder_layer.6} parent=0 // loop_body
    %s13 = ssub.s32 %s8, 1
    %s14 = ssub.s32 %s8, 2
    %s27 = sadd.s32 1, %s18
    %p28 = scmp.ge.s32.totalorder %s27, 2
    %s29 = scalar_select %p28, 0, %s27
    %s30 = sadd.s32 1, %s17
    %s31 = scalar_select %p28, %s30, %s17
    %p32 = scmp.ge.s32.totalorder %s31, 1
    %s33 = scalar_select %p32, 0, %s31
    %s34 = sadd.s32 1, %s16
    %s35 = scalar_select %p32, %s34, %s16
    %p36 = scmp.ge.s32.totalorder %s35, 2
    %s37 = scalar_select %p36, 0, %s35
    %s38 = sadd.s32 1, %s15
    %s39 = scalar_select %p36, %s38, %s15
    %p40 = scmp.ge.s32.totalorder %s39, 2
    %s41 = scalar_select %p40, 0, %s39
    %s42 = ssub.s32 %s15, %s41
    %s43 = ssub.s32 %s16, %s37
    %s44 = sor.u32 %s42, %s43
    %s45 = ssub.s32 %s17, %s33
    %s46 = sor.u32 %s44, %s45
    %p47 = scmp.eq.s32.totalorder %s46, 0
    %s49 = sadd.s32 %s48, 1
    %s50 = scalar_select %p47, %s48, %s49
    %p53 = pneg %p47
    %p54 = scmp.eq.s32.totalorder %s8, 7
    %p55 = por %p53, %p54
    %p56 = scmp.ne.s32.totalorder %s48, %s51
    %p57 = scmp.eq.s32.totalorder %s8, 0
    %p58 = por %p56, %p57
    %p59 = scmp.ne.s32.totalorder %s48, %s51
    %p60 = scmp.eq.s32.totalorder %s13, 7
    %p61 = por %p59, %p60
    %p62 = scmp.ne.s32.totalorder %s51, %s52
    %p63 = scmp.eq.s32.totalorder %s13, 0
    %p64 = por %p62, %p63
    %p65 = scmp.ne.s32.totalorder %s51, %s52
    %p66 = scmp.eq.s32.totalorder %s14, 7
    %p67 = por %p65, %p66
    %p69 = scmp.ne.s32.totalorder %s52, %s68
    %p70 = scmp.eq.s32.totalorder %s14, 0
    %p71 = por %p69, %p70
    %s72 = ssub.s32 %s15, %s41
    %s73 = ssub.s32 %s16, %s37
    %s74 = sor.u32 %s72, %s73
    %s75 = ssub.s32 %s18, %s29
    %s76 = sor.u32 %s74, %s75
    %p77 = scmp.eq.s32.totalorder %s76, 0
    %s79 = sadd.s32 %s78, 1
    %s80 = scalar_select %p77, %s78, %s79
    %p83 = pneg %p77
    %p84 = scmp.eq.s32.totalorder %s8, 7
    %p85 = por %p83, %p84
    %p86 = scmp.ne.s32.totalorder %s78, %s81
    %p87 = scmp.eq.s32.totalorder %s8, 0
    %p88 = por %p86, %p87
    %p89 = scmp.ne.s32.totalorder %s78, %s81
    %p90 = scmp.eq.s32.totalorder %s13, 7
    %p91 = por %p89, %p90
    %p92 = scmp.ne.s32.totalorder %s81, %s82
    %p93 = scmp.eq.s32.totalorder %s13, 0
    %p94 = por %p92, %p93
    %p95 = scmp.ne.s32.totalorder %s81, %s82
    %p96 = scmp.eq.s32.totalorder %s14, 7
    %p97 = por %p95, %p96
    %p99 = scmp.ne.s32.totalorder %s82, %s98
    %p100 = scmp.eq.s32.totalorder %s14, 0
    %p101 = por %p99, %p100
    %s102 = ssub.s32 %s15, %s41
    %s103 = ssub.s32 %s16, %s37
    %s104 = sor.u32 %s102, %s103
    %s105 = ssub.s32 %s17, %s33
    %s106 = sor.u32 %s104, %s105
    %p107 = scmp.eq.s32.totalorder %s106, 0
    %s109 = sadd.s32 %s108, 1
    %s110 = scalar_select %p107, %s108, %s109
    %p113 = pneg %p107
    %p114 = scmp.eq.s32.totalorder %s8, 7
    %p115 = por %p113, %p114
    %p116 = scmp.ne.s32.totalorder %s108, %s111
    %p117 = scmp.eq.s32.totalorder %s8, 0
    %p118 = por %p116, %p117
    %p119 = scmp.ne.s32.totalorder %s108, %s111
    %p120 = scmp.eq.s32.totalorder %s13, 7
    %p121 = por %p119, %p120
    %p122 = scmp.ne.s32.totalorder %s111, %s112
    %p123 = scmp.eq.s32.totalorder %s13, 0
    %p124 = por %p122, %p123
    %p125 = scmp.ne.s32.totalorder %s111, %s112
    %p126 = scmp.eq.s32.totalorder %s14, 7
    %p127 = por %p125, %p126
    %p129 = scmp.ne.s32.totalorder %s112, %s128
    %p130 = scmp.eq.s32.totalorder %s14, 0
    %p131 = por %p129, %p130
    %p132 = scmp.le.s32.totalorder 1, %s8
    %p133 = scmp.lt.s32.totalorder %s8, 9
    %p134 = pnand %p132, %p133
    %p135 = pneg %p134
    // Predicated region
    $region9: #{llama_decoder_layer.6} parent=5 // pred_check
      _
    $region10: #{llama_decoder_layer.6} parent=5 // pred_check_branch
      %137 = sbr.rel (%p134) target = $region12
    $region11: #{llama_decoder_layer.6} parent=5 // pred_region
      %s138 = ssub.s32 %s8, 1
    $region12: #{llama_decoder_layer.6} parent=5 // pred_fallthru
      _
    %p139 = scmp.lt.s32.totalorder %s8, 8
    // Predicated region
    $region13: #{llama_decoder_layer.6} parent=5 // pred_check
      %p140 = pneg %p139
    $region14: #{llama_decoder_layer.6} parent=5 // pred_check_branch
      %142 = sbr.rel (%p140) target = $region16
    $region15: #{llama_decoder_layer.6} parent=5 // pred_region
      // Predicated region
      $region17: #{llama_decoder_layer.6} parent=15 // pred_check
        %p143 = pneg %p58
      $region18: #{llama_decoder_layer.6} parent=15 // pred_check_branch
        %145 = sbr.rel (%p143) target = $region20
      $region19: #{llama_decoder_layer.6} parent=15 // pred_region
        %s146 = smul.u32 16, %s17
        %p147 = scmp.lt.s32.totalorder %s15, 1
        %s148 = scalar_select %p147, %s15, 1
        %p149 = scmp.lt.s32.totalorder %s16, 1
        %s150 = scalar_select %p149, %s16, 1
        %p151 = scmp.lt.s32.totalorder %s146, 15
        %s152 = scalar_select %p151, %s146, 15
        %s153 = smul.addr %s152, 3
        %s154 = smul.addr %s150, 48
        %s155 = sadd.s32 %s153, %s154
        %s156 = smul.addr %s148, 96
        %s157 = sadd.s32 %s155, %s156
        %s158 = smul.addr %s157, 4
        %s159 = scalar_lea.vmem %s0, %s158
        %s160 = smul.u32 16, %s17
      $region20: #{llama_decoder_layer.6} parent=15 // pred_fallthru
        _
      // Predicated region
      $region21: #{llama_decoder_layer.6} parent=15 // pred_check
        %p161 = pneg %p88
      $region22: #{llama_decoder_layer.6} parent=15 // pred_check_branch
        %163 = sbr.rel (%p161) target = $region24
      $region23: #{llama_decoder_layer.6} parent=15 // pred_region
        %s164 = smul.u32 8, %s18
        %p165 = scmp.lt.s32.totalorder %s15, 1
        %s166 = scalar_select %p165, %s15, 1
        %p167 = scmp.lt.s32.totalorder %s16, 1
        %s168 = scalar_select %p167, %s16, 1
        %p169 = scmp.lt.s32.totalorder %s164, 15
        %s170 = scalar_select %p169, %s164, 15
        %s171 = smul.addr %s170, 3
        %s172 = smul.addr %s168, 48
        %s173 = sadd.s32 %s171, %s172
        %s174 = smul.addr %s166, 96
        %s175 = sadd.s32 %s173, %s174
        %s176 = smul.addr %s175, 4
        %s177 = scalar_lea.vmem %s1, %s176
        %s178 = smul.u32 8, %s18
      $region24: #{llama_decoder_layer.6} parent=15 // pred_fallthru
        _
    $region16: #{llama_decoder_layer.6} parent=5 // pred_fallthru
      _
    %p179 = scmp.le.s32.totalorder 1, %s8
    %p180 = scmp.lt.s32.totalorder %s8, 9
    %p181 = pnand %p179, %p180
    %p182 = pneg %p181
    // Predicated region
    $region25: #{llama_decoder_layer.6} parent=5 // pred_check
      _
    $region26: #{llama_decoder_layer.6} parent=5 // pred_check_branch
      %184 = sbr.rel (%p181) target = $region28
    $region27: #{llama_decoder_layer.6} parent=5 // pred_region
      %s185 = ssub.s32 %s8, 1
      %s186 = smul.u32 16, %s21
      %p187 = scmp.lt.s32.totalorder %s19, 1
      %s188 = scalar_select %p187, %s19, 1
      %p189 = scmp.lt.s32.totalorder %s20, 1
      %s190 = scalar_select %p189, %s20, 1
      %p191 = scmp.lt.s32.totalorder %s186, 15
      %s192 = scalar_select %p191, %s186, 15
      %s193 = smul.addr %s192, 3
      %s194 = smul.addr %s190, 48
      %s195 = sadd.s32 %s193, %s194
      %s196 = smul.addr %s188, 96
      %s197 = sadd.s32 %s195, %s196
      %s198 = smul.addr %s197, 4
      %s199 = scalar_lea.vmem %s0, %s198
      %p200 = pneg %p64
      %p201 = pneg %p61
      %s202 = smul.u32 8, %s22
      %p203 = scmp.lt.s32.totalorder %s19, 1
      %s204 = scalar_select %p203, %s19, 1
      %p205 = scmp.lt.s32.totalorder %s20, 1
      %s206 = scalar_select %p205, %s20, 1
      %p207 = scmp.lt.s32.totalorder %s202, 15
      %s208 = scalar_select %p207, %s202, 15
      %s209 = smul.addr %s208, 3
      %s210 = smul.addr %s206, 48
      %s211 = sadd.s32 %s209, %s210
      %s212 = smul.addr %s204, 96
      %s213 = sadd.s32 %s211, %s212
      %s214 = smul.addr %s213, 4
      %s215 = scalar_lea.vmem %s1, %s214
      %p216 = pneg %p94
      %p217 = pneg %p91
      %p218 = pneg %p124
      %p219 = pneg %p121
      %s220 = smul.u32 16, %s21
      %p221 = scmp.lt.s32.totalorder %s19, 1
      %s222 = scalar_select %p221, %s19, 1
      %p223 = scmp.lt.s32.totalorder %s20, 1
      %s224 = scalar_select %p223, %s20, 1
      %p225 = scmp.lt.s32.totalorder %s220, 15
      %s226 = scalar_select %p225, %s220, 15
      %s227 = smul.addr %s224, 16
      %s228 = sadd.s32 %s226, %s227
      %s229 = smul.addr %s222, 32
      %s230 = sadd.s32 %s228, %s229
      %s231 = smul.addr %s230, 4
      %s232 = scalar_lea.vmem %s2, %s231
      %s233 = smul.u32 16, %s21
      %p234 = scmp.lt.s32.totalorder %s19, 1
      %s235 = scalar_select %p234, %s19, 1
      %p236 = scmp.lt.s32.totalorder %s20, 1
      %s237 = scalar_select %p236, %s20, 1
      %p238 = scmp.lt.s32.totalorder %s233, 15
      %s239 = scalar_select %p238, %s233, 15
      %s240 = smul.addr %s239, 3
      %s241 = smul.addr %s237, 48
      %s242 = sadd.s32 %s240, %s241
      %s243 = smul.addr %s235, 96
      %s244 = sadd.s32 %s242, %s243
      %s245 = smul.addr %s244, 4
      %s246 = scalar_lea.vmem %s0, %s245
      %s247 = smul.u32 16, %s21
      %s248 = smul.u32 8, %s22
      %p249 = scmp.lt.s32.totalorder %s19, 1
      %s250 = scalar_select %p249, %s19, 1
      %p251 = scmp.lt.s32.totalorder %s20, 1
      %s252 = scalar_select %p251, %s20, 1
      %p253 = scmp.lt.s32.totalorder %s248, 15
      %s254 = scalar_select %p253, %s248, 15
      %s255 = smul.addr %s254, 3
      %s256 = smul.addr %s252, 48
      %s257 = sadd.s32 %s255, %s256
      %s258 = smul.addr %s250, 96
      %s259 = sadd.s32 %s257, %s258
      %s260 = smul.addr %s259, 4
      %s261 = scalar_lea.vmem %s1, %s260
      %s262 = smul.u32 8, %s22
      %s263 = smul.u32 16, %s21
      %p264 = scmp.lt.s32.totalorder %s19, 1
      %s265 = scalar_select %p264, %s19, 1
      %p266 = scmp.lt.s32.totalorder %s20, 1
      %s267 = scalar_select %p266, %s20, 1
      %p268 = scmp.lt.s32.totalorder %s263, 15
      %s269 = scalar_select %p268, %s263, 15
      %s270 = smul.addr %s267, 16
      %s271 = sadd.s32 %s269, %s270
      %s272 = smul.addr %s265, 32
      %s273 = sadd.s32 %s271, %s272
      %s274 = smul.addr %s273, 4
      %s275 = scalar_lea.vmem %s2, %s274
      %s276 = smul.u32 16, %s21
      %p278 = scmp.eq.s32.totalorder %s22, 0
      // Predicated region
      $region29: #{llama_decoder_layer.6} parent=27 // pred_check
        %p279 = pneg %p278
      $region30: #{llama_decoder_layer.6} parent=27 // pred_check_branch
        %281 = sbr.rel (%p279) target = $region32
      $region31: #{llama_decoder_layer.6} parent=27 // pred_region
        %vm282 = vcmask 7168
        %283 = vst.msk [vmem:[#allocation2] sm:$0xff] %vm282, -inf
        %284 = vst.msk [vmem:[#allocation2 + $0x8] sm:$0xff] %vm282, -inf
        %285 = vst.msk [vmem:[#allocation2 + $0x10] sm:$0xff] %vm282, -inf
        %286 = vst.msk [vmem:[#allocation2 + $0x18] sm:$0xff] %vm282, -inf
        %287 = vst.msk [vmem:[#allocation2 + $0x20] sm:$0xff] %vm282, -inf
        %288 = vst.msk [vmem:[#allocation2 + $0x28] sm:$0xff] %vm282, -inf
        %289 = vst.msk [vmem:[#allocation2 + $0x30] sm:$0xff] %vm282, -inf
        %290 = vst.msk [vmem:[#allocation2 + $0x38] sm:$0xff] %vm282, -inf
        %291 = vst.msk [vmem:[#allocation2 + $0x40] sm:$0xff] %vm282, -inf
        %292 = vst.msk [vmem:[#allocation2 + $0x48] sm:$0xff] %vm282, -inf
        %293 = vst.msk [vmem:[#allocation2 + $0x50] sm:$0xff] %vm282, -inf
        %294 = vst.msk [vmem:[#allocation2 + $0x58] sm:$0xff] %vm282, -inf
        %295 = vst.msk [vmem:[#allocation2 + $0x60] sm:$0xff] %vm282, -inf
        %296 = vst.msk [vmem:[#allocation2 + $0x68] sm:$0xff] %vm282, -inf
        %297 = vst.msk [vmem:[#allocation2 + $0x70] sm:$0xff] %vm282, -inf
        %298 = vst.msk [vmem:[#allocation2 + $0x78] sm:$0xff] %vm282, -inf
        %299 = vst.msk [vmem:[#allocation3] sm:$0xff] %vm282, 0.0
        %300 = vst.msk [vmem:[#allocation3 + $0x8] sm:$0xff] %vm282, 0.0
        %301 = vst.msk [vmem:[#allocation3 + $0x10] sm:$0xff] %vm282, 0.0
        %302 = vst.msk [vmem:[#allocation3 + $0x18] sm:$0xff] %vm282, 0.0
        %303 = vst.msk [vmem:[#allocation3 + $0x20] sm:$0xff] %vm282, 0.0
        %304 = vst.msk [vmem:[#allocation3 + $0x28] sm:$0xff] %vm282, 0.0
        %305 = vst.msk [vmem:[#allocation3 + $0x30] sm:$0xff] %vm282, 0.0
        %306 = vst.msk [vmem:[#allocation3 + $0x38] sm:$0xff] %vm282, 0.0
        %307 = vst.msk [vmem:[#allocation3 + $0x40] sm:$0xff] %vm282, 0.0
        %308 = vst.msk [vmem:[#allocation3 + $0x48] sm:$0xff] %vm282, 0.0
        %309 = vst.msk [vmem:[#allocation3 + $0x50] sm:$0xff] %vm282, 0.0
        %310 = vst.msk [vmem:[#allocation3 + $0x58] sm:$0xff] %vm282, 0.0
        %311 = vst.msk [vmem:[#allocation3 + $0x60] sm:$0xff] %vm282, 0.0
        %312 = vst.msk [vmem:[#allocation3 + $0x68] sm:$0xff] %vm282, 0.0
        %313 = vst.msk [vmem:[#allocation3 + $0x70] sm:$0xff] %vm282, 0.0
        %314 = vst.msk [vmem:[#allocation3 + $0x78] sm:$0xff] %vm282, 0.0
        %315 = vst [vmem:[#allocation4] sm:$0xff] 0.0
        %316 = vst [vmem:[#allocation4 + $0x8] sm:$0xff] 0.0
        %317 = vst [vmem:[#allocation4 + $0x10] sm:$0xff] 0.0
        %318 = vst [vmem:[#allocation4 + $0x18] sm:$0xff] 0.0
        %319 = vst [vmem:[#allocation4 + $0x20] sm:$0xff] 0.0
        %320 = vst [vmem:[#allocation4 + $0x28] sm:$0xff] 0.0
        %321 = vst [vmem:[#allocation4 + $0x30] sm:$0xff] 0.0
        %322 = vst [vmem:[#allocation4 + $0x38] sm:$0xff] 0.0
        %323 = vst [vmem:[#allocation4 + $0x40] sm:$0xff] 0.0
        %324 = vst [vmem:[#allocation4 + $0x48] sm:$0xff] 0.0
        %325 = vst [vmem:[#allocation4 + $0x50] sm:$0xff] 0.0
        %326 = vst [vmem:[#allocation4 + $0x58] sm:$0xff] 0.0
        %327 = vst [vmem:[#allocation4 + $0x60] sm:$0xff] 0.0
        %328 = vst [vmem:[#allocation4 + $0x68] sm:$0xff] 0.0
        %329 = vst [vmem:[#allocation4 + $0x70] sm:$0xff] 0.0
        %330 = vst [vmem:[#allocation4 + $0x78] sm:$0xff] 0.0
      $region32: #{llama_decoder_layer.6} parent=27 // pred_fallthru
        _
      %v331 = vld [vmem:[%s246] sm:$0xf]
      %v332 = vld [vmem:[%s246 + $0xc] sm:$0xf]
      %v333 = vld [vmem:[%s246 + $0x18] sm:$0xf]
      %v334 = vld [vmem:[%s246 + $0x24] sm:$0xf]
      %v335 = vld [vmem:[%s246 + $0x30] sm:$0xf]
      %v336 = vld [vmem:[%s246 + $0x3c] sm:$0xf]
      %v337 = vld [vmem:[%s246 + $0x48] sm:$0xf]
      %v338 = vld [vmem:[%s246 + $0x54] sm:$0xf]
      %v339 = vld [vmem:[%s246 + $0x60] sm:$0xf]
      %v340 = vld [vmem:[%s246 + $0x6c] sm:$0xf]
      %v341 = vld [vmem:[%s246 + $0x78] sm:$0xf]
      %v342 = vld [vmem:[%s246 + $0x84] sm:$0xf]
      %v343 = vld [vmem:[%s246 + $0x90] sm:$0xf]
      %v344 = vld [vmem:[%s246 + $0x9c] sm:$0xf]
      %v345 = vld [vmem:[%s246 + $0xa8] sm:$0xf]
      %v346 = vld [vmem:[%s246 + $0xb4] sm:$0xf]
      %v347 = vld [vmem:[%s261 + $0x4] sm:$0xf]
      %v348 = vld [vmem:[%s261 + $0x10] sm:$0xf]
      %v349 = vld [vmem:[%s261 + $0x1c] sm:$0xf]
      %v350 = vld [vmem:[%s261 + $0x28] sm:$0xf]
      %v351 = vld [vmem:[%s261 + $0x34] sm:$0xf]
      %v352 = vld [vmem:[%s261 + $0x40] sm:$0xf]
      %v353 = vld [vmem:[%s261 + $0x4c] sm:$0xf]
      %v354 = vld [vmem:[%s261 + $0x58] sm:$0xf]
      %v355 = vld [vmem:[%s261 + $0x8] sm:$0xf]
      %v356 = vld [vmem:[%s261 + $0x14] sm:$0xf]
      %v357 = vld [vmem:[%s261 + $0x20] sm:$0xf]
      %v358 = vld [vmem:[%s261 + $0x2c] sm:$0xf]
      %v359 = vld [vmem:[%s261 + $0x38] sm:$0xf]
      %v360 = vld [vmem:[%s261 + $0x44] sm:$0xf]
      %v361 = vld [vmem:[%s261 + $0x50] sm:$0xf]
      %v362 = vld [vmem:[%s261 + $0x5c] sm:$0xf]
      %v379 = vunpack.c.l.b16 %v331
      %v380 = vunpack.c.l.b16 %v332
      %v381 = vunpack.c.l.b16 %v333
      %v382 = vunpack.c.l.b16 %v334
      %v383 = vunpack.c.l.b16 %v335
      %v384 = vunpack.c.l.b16 %v336
      %v385 = vunpack.c.l.b16 %v337
      %v386 = vunpack.c.l.b16 %v338
      %v387 = vunpack.c.l.b16 %v339
      %v388 = vunpack.c.l.b16 %v340
      %v389 = vunpack.c.l.b16 %v341
      %v390 = vunpack.c.l.b16 %v342
      %v391 = vunpack.c.l.b16 %v343
      %v392 = vunpack.c.l.b16 %v344
      %v393 = vunpack.c.l.b16 %v345
      %v394 = vunpack.c.l.b16 %v346
      %v395 = vpack.c.b16 %v380, %v379
      %v396 = vpack.c.b16 %v382, %v381
      %v397 = vpack.c.b16 %v384, %v383
      %v398 = vpack.c.b16 %v386, %v385
      %v399 = vpack.c.b16 %v388, %v387
      %v400 = vpack.c.b16 %v390, %v389
      %v401 = vpack.c.b16 %v392, %v391
      %v402 = vpack.c.b16 %v394, %v393
      %v419 = vunpack.c.l.b16 %v347
      %v420 = vunpack.c.l.b16 %v348
      %v421 = vunpack.c.l.b16 %v349
      %v422 = vunpack.c.l.b16 %v350
      %v423 = vunpack.c.l.b16 %v351
      %v424 = vunpack.c.l.b16 %v352
      %v425 = vunpack.c.l.b16 %v353
      %v426 = vunpack.c.l.b16 %v354
      %v427 = vpack.c.b16 %v420, %v419
      %v428 = vpack.c.b16 %v422, %v421
      %v429 = vpack.c.b16 %v424, %v423
      %v430 = vpack.c.b16 %v426, %v425
      %435 = vmatprep.subr.bf16.mxu0 0
      %436 = vmatpush1.bf16.xpose.msra.mxu0 %v427
      %437 = vmatprep.subr.bf16.mxu0 0
      %438 = vmatpush1.bf16.xpose.msra.mxu0 %v428
      %439 = vmatprep.subr.bf16.mxu0 0
      %440 = vmatpush1.bf16.xpose.msra.mxu0 %v429
      %441 = vmatprep.subr.bf16.mxu0 0
      %442 = vmatpush1.bf16.xpose.msra.mxu0 %v430
      %443 = vmatprep.subr.bf16.mxu0 0
      %444 = vmatpush1.bf16.xpose.msra.mxu0 0
      %445 = vmatprep.subr.bf16.mxu0 0
      %446 = vmatpush1.bf16.xpose.msra.mxu0 0
      %447 = vmatprep.subr.bf16.mxu0 0
      %448 = vmatpush1.bf16.xpose.msra.mxu0 0
      %449 = vmatprep.subr.bf16.mxu0 0
      %450 = vmatpush1.bf16.xpose.msra.mxu0 0
      %451 = vmatprep.subr.bf16.mxu0 0
      %452 = vmatpush1.bf16.xpose.msra.mxu0 0
      %453 = vmatprep.subr.bf16.mxu0 0
      %454 = vmatpush1.bf16.xpose.msra.mxu0 0
      %455 = vmatprep.subr.bf16.mxu0 0
      %456 = vmatpush1.bf16.xpose.msra.mxu0 0
      %457 = vmatprep.subr.bf16.mxu0 0
      %458 = vmatpush1.bf16.xpose.msra.mxu0 0
      %459 = vmatprep.subr.bf16.mxu0 0
      %460 = vmatpush1.bf16.xpose.msra.mxu0 0
      %461 = vmatprep.subr.bf16.mxu0 0
      %462 = vmatpush1.bf16.xpose.msra.mxu0 0
      %463 = vmatprep.subr.bf16.mxu0 0
      %464 = vmatpush1.bf16.xpose.msra.mxu0 0
      %465 = vmatprep.subr.bf16.mxu0 0
      %466 = vmatpush1.bf16.xpose.msra.mxu0 0
      %467 = vmatprep.mubr.bf16.mxu0 0
      %468 = vmatmul.mubr.bf16.gmra.mrb[0].mxu0 %v395
      %v469 = vpop.f32.mrb[0].mxu0
      %v470 = vadd.f32 0.0, %v469
      %v471 = vpop.f32.mrb[0].mxu0
      %v472 = vpop.f32.mrb[0].mxu0
      %v473 = vadd.f32 0.0, %v472
      %v474 = vpop.f32.mrb[0].mxu0
      %475 = vmatprep.mubr.bf16.mxu0 0
      %476 = vmatmul.mubr.bf16.gmra.mrb[0].mxu0 %v396
      %v477 = vpop.f32.mrb[0].mxu0
      %v478 = vadd.f32 0.0, %v477
      %v479 = vpop.f32.mrb[0].mxu0
      %v480 = vpop.f32.mrb[0].mxu0
      %v481 = vadd.f32 0.0, %v480
      %v482 = vpop.f32.mrb[0].mxu0
      %483 = vmatprep.mubr.bf16.mxu0 0
      %484 = vmatmul.mubr.bf16.gmra.mrb[0].mxu0 %v397
      %v485 = vpop.f32.mrb[0].mxu0
      %v486 = vadd.f32 0.0, %v485
      %v487 = vpop.f32.mrb[0].mxu0
      %v488 = vpop.f32.mrb[0].mxu0
      %v489 = vadd.f32 0.0, %v488
      %v490 = vpop.f32.mrb[0].mxu0
      %491 = vmatprep.mubr.bf16.mxu0 0
      %492 = vmatmul.mubr.bf16.gmra.mrb[0].mxu0 %v398
      %v493 = vpop.f32.mrb[0].mxu0
      %v494 = vadd.f32 0.0, %v493
      %v495 = vpop.f32.mrb[0].mxu0
      %v496 = vpop.f32.mrb[0].mxu0
      %v497 = vadd.f32 0.0, %v496
      %v498 = vpop.f32.mrb[0].mxu0
      %499 = vmatprep.mubr.bf16.mxu0 0
      %500 = vmatmul.mubr.bf16.gmra.mrb[0].mxu0 %v399
      %v501 = vpop.f32.mrb[0].mxu0
      %v502 = vadd.f32 0.0, %v501
      %v503 = vpop.f32.mrb[0].mxu0
      %v504 = vpop.f32.mrb[0].mxu0
      %v505 = vadd.f32 0.0, %v504
      %v506 = vpop.f32.mrb[0].mxu0
      %507 = vmatprep.mubr.bf16.mxu0 0
      %508 = vmatmul.mubr.bf16.gmra.mrb[0].mxu0 %v400
      %v509 = vpop.f32.mrb[0].mxu0
      %v510 = vadd.f32 0.0, %v509
      %v511 = vpop.f32.mrb[0].mxu0
      %v512 = vpop.f32.mrb[0].mxu0
      %v513 = vadd.f32 0.0, %v512
      %v514 = vpop.f32.mrb[0].mxu0
      %515 = vmatprep.mubr.bf16.mxu0 0
      %516 = vmatmul.mubr.bf16.gmra.mrb[0].mxu0 %v401
      %v517 = vpop.f32.mrb[0].mxu0
      %v518 = vadd.f32 0.0, %v517
      %v519 = vpop.f32.mrb[0].mxu0
      %v520 = vpop.f32.mrb[0].mxu0
      %v521 = vadd.f32 0.0, %v520
      %v522 = vpop.f32.mrb[0].mxu0
      %523 = vmatprep.mubr.bf16.mxu0 0
      %524 = vmatmul.mubr.bf16.gmra.mrb[0].mxu0 %v402
      %v525 = vpop.f32.mrb[0].mxu0
      %v526 = vadd.f32 0.0, %v525
      %v527 = vpop.f32.mrb[0].mxu0
      %v528 = vpop.f32.mrb[0].mxu0
      %v529 = vadd.f32 0.0, %v528
      %v530 = vpop.f32.mrb[0].mxu0
      %531 = vdwg.mxu0
      %v532 = vmul.f32 %v470, 0.088388346
      %v533 = vmul.f32 %v473, 0.088388346
      %v534 = vmul.f32 %v478, 0.088388346
      %v535 = vmul.f32 %v481, 0.088388346
      %v536 = vmul.f32 %v486, 0.088388346
      %v537 = vmul.f32 %v489, 0.088388346
      %v538 = vmul.f32 %v494, 0.088388346
      %v539 = vmul.f32 %v497, 0.088388346
      %v540 = vmul.f32 %v502, 0.088388346
      %v541 = vmul.f32 %v505, 0.088388346
      %v542 = vmul.f32 %v510, 0.088388346
      %v543 = vmul.f32 %v513, 0.088388346
      %v544 = vmul.f32 %v518, 0.088388346
      %v545 = vmul.f32 %v521, 0.088388346
      %v546 = vmul.f32 %v526, 0.088388346
      %v547 = vmul.f32 %v529, 0.088388346
      %v548 = vld [vmem:[#allocation2] sm:$0xff]
      %v549 = vld [vmem:[#allocation2 + $0x8] sm:$0xff]
      %v550 = vld [vmem:[#allocation2 + $0x10] sm:$0xff]
      %v551 = vld [vmem:[#allocation2 + $0x18] sm:$0xff]
      %v552 = vld [vmem:[#allocation2 + $0x20] sm:$0xff]
      %v553 = vld [vmem:[#allocation2 + $0x28] sm:$0xff]
      %v554 = vld [vmem:[#allocation2 + $0x30] sm:$0xff]
      %v555 = vld [vmem:[#allocation2 + $0x38] sm:$0xff]
      %v556 = vld [vmem:[#allocation2 + $0x40] sm:$0xff]
      %v557 = vld [vmem:[#allocation2 + $0x48] sm:$0xff]
      %v558 = vld [vmem:[#allocation2 + $0x50] sm:$0xff]
      %v559 = vld [vmem:[#allocation2 + $0x58] sm:$0xff]
      %v560 = vld [vmem:[#allocation2 + $0x60] sm:$0xff]
      %v561 = vld [vmem:[#allocation2 + $0x68] sm:$0xff]
      %v562 = vld [vmem:[#allocation2 + $0x70] sm:$0xff]
      %v563 = vld [vmem:[#allocation2 + $0x78] sm:$0xff]
      %vm564 = vcmask 523264
      %v565 = vsel %vm564, %v532, -inf
      %566 = vmax.xlane.f32.xlu0 %v565
      %v567 = vpop.xlane.xlu0 %566
      %v568 = vsel %vm564, %v533, -inf
      %569 = vmax.xlane.f32.xlu0 %v568
      %v570 = vpop.xlane.xlu0 %569
      %v571 = vsel %vm564, %v534, -inf
      %572 = vmax.xlane.f32.xlu0 %v571
      %v573 = vpop.xlane.xlu0 %572
      %v574 = vsel %vm564, %v535, -inf
      %575 = vmax.xlane.f32.xlu0 %v574
      %v576 = vpop.xlane.xlu0 %575
      %v577 = vsel %vm564, %v536, -inf
      %578 = vmax.xlane.f32.xlu0 %v577
      %v579 = vpop.xlane.xlu0 %578
      %v580 = vsel %vm564, %v537, -inf
      %581 = vmax.xlane.f32.xlu0 %v580
      %v582 = vpop.xlane.xlu0 %581
      %v583 = vsel %vm564, %v538, -inf
      %584 = vmax.xlane.f32.xlu0 %v583
      %v585 = vpop.xlane.xlu0 %584
      %v586 = vsel %vm564, %v539, -inf
      %587 = vmax.xlane.f32.xlu0 %v586
      %v588 = vpop.xlane.xlu0 %587
      %v589 = vsel %vm564, %v540, -inf
      %590 = vmax.xlane.f32.xlu0 %v589
      %v591 = vpop.xlane.xlu0 %590
      %v592 = vsel %vm564, %v541, -inf
      %593 = vmax.xlane.f32.xlu0 %v592
      %v594 = vpop.xlane.xlu0 %593
      %v595 = vsel %vm564, %v542, -inf
      %596 = vmax.xlane.f32.xlu0 %v595
      %v597 = vpop.xlane.xlu0 %596
      %v598 = vsel %vm564, %v543, -inf
      %599 = vmax.xlane.f32.xlu0 %v598
      %v600 = vpop.xlane.xlu0 %599
      %v601 = vsel %vm564, %v544, -inf
      %602 = vmax.xlane.f32.xlu0 %v601
      %v603 = vpop.xlane.xlu0 %602
      %v604 = vsel %vm564, %v545, -inf
      %605 = vmax.xlane.f32.xlu0 %v604
      %v606 = vpop.xlane.xlu0 %605
      %v607 = vsel %vm564, %v546, -inf
      %608 = vmax.xlane.f32.xlu0 %v607
      %v609 = vpop.xlane.xlu0 %608
      %v610 = vsel %vm564, %v547, -inf
      %611 = vmax.xlane.f32.xlu0 %v610
      %v612 = vpop.xlane.xlu0 %611
      %v613 = vmax.f32 %v548, %v567
      %v614 = vmax.f32 %v549, %v570
      %v615 = vmax.f32 %v550, %v573
      %v616 = vmax.f32 %v551, %v576
      %v617 = vmax.f32 %v552, %v579
      %v618 = vmax.f32 %v553, %v582
      %v619 = vmax.f32 %v554, %v585
      %v620 = vmax.f32 %v555, %v588
      %v621 = vmax.f32 %v556, %v591
      %v622 = vmax.f32 %v557, %v594
      %v623 = vmax.f32 %v558, %v597
      %v624 = vmax.f32 %v559, %v600
      %v625 = vmax.f32 %v560, %v603
      %v626 = vmax.f32 %v561, %v606
      %v627 = vmax.f32 %v562, %v609
      %v628 = vmax.f32 %v563, %v612
      %v629 = vsub.f32 %v548, %v613
      %v630 = vsub.f32 %v549, %v614
      %v631 = vsub.f32 %v550, %v615
      %v632 = vsub.f32 %v551, %v616
      %v633 = vsub.f32 %v552, %v617
      %v634 = vsub.f32 %v553, %v618
      %v635 = vsub.f32 %v554, %v619
      %v636 = vsub.f32 %v555, %v620
      %v637 = vsub.f32 %v556, %v621
      %v638 = vsub.f32 %v557, %v622
      %v639 = vsub.f32 %v558, %v623
      %v640 = vsub.f32 %v559, %v624
      %v641 = vsub.f32 %v560, %v625
      %v642 = vsub.f32 %v561, %v626
      %v643 = vsub.f32 %v562, %v627
      %v644 = vsub.f32 %v563, %v628
      %v645 = vmul.f32 %v629, 1.442695
      %v646 = vpow.pop %v645
      %v647 = vmul.f32 %v630, 1.442695
      %v648 = vpow.pop %v647
      %v649 = vmul.f32 %v631, 1.442695
      %v650 = vpow.pop %v649
      %v651 = vmul.f32 %v632, 1.442695
      %v652 = vpow.pop %v651
      %v653 = vmul.f32 %v633, 1.442695
      %v654 = vpow.pop %v653
      %v655 = vmul.f32 %v634, 1.442695
      %v656 = vpow.pop %v655
      %v657 = vmul.f32 %v635, 1.442695
      %v658 = vpow.pop %v657
      %v659 = vmul.f32 %v636, 1.442695
      %v660 = vpow.pop %v659
      %v661 = vmul.f32 %v637, 1.442695
      %v662 = vpow.pop %v661
      %v663 = vmul.f32 %v638, 1.442695
      %v664 = vpow.pop %v663
      %v665 = vmul.f32 %v639, 1.442695
      %v666 = vpow.pop %v665
      %v667 = vmul.f32 %v640, 1.442695
      %v668 = vpow.pop %v667
      %v669 = vmul.f32 %v641, 1.442695
      %v670 = vpow.pop %v669
      %v671 = vmul.f32 %v642, 1.442695
      %v672 = vpow.pop %v671
      %v673 = vmul.f32 %v643, 1.442695
      %v674 = vpow.pop %v673
      %v675 = vmul.f32 %v644, 1.442695
      %v676 = vpow.pop %v675
      %678 = vset.pattern.permute.xlu0 0
      %679 = vperm.xlu0 %678, %v613
      %v680 = vpop.permute.xlu0 %679
      %683 = vset.pattern.permute.xlu0 0
      %684 = vperm.xlu0 %683, %v614
      %v685 = vpop.permute.xlu0 %684
      %688 = vset.pattern.permute.xlu0 0
      %689 = vperm.xlu0 %688, %v615
      %v690 = vpop.permute.xlu0 %689
      %693 = vset.pattern.permute.xlu0 0
      %694 = vperm.xlu0 %693, %v616
      %v695 = vpop.permute.xlu0 %694
      %698 = vset.pattern.permute.xlu0 0
      %699 = vperm.xlu0 %698, %v617
      %v700 = vpop.permute.xlu0 %699
      %703 = vset.pattern.permute.xlu0 0
      %704 = vperm.xlu0 %703, %v618
      %v705 = vpop.permute.xlu0 %704
      %708 = vset.pattern.permute.xlu0 0
      %709 = vperm.xlu0 %708, %v619
      %v710 = vpop.permute.xlu0 %709
      %713 = vset.pattern.permute.xlu0 0
      %714 = vperm.xlu0 %713, %v620
      %v715 = vpop.permute.xlu0 %714
      %718 = vset.pattern.permute.xlu0 0
      %719 = vperm.xlu0 %718, %v621
      %v720 = vpop.permute.xlu0 %719
      %723 = vset.pattern.permute.xlu0 0
      %724 = vperm.xlu0 %723, %v622
      %v725 = vpop.permute.xlu0 %724
      %728 = vset.pattern.permute.xlu0 0
      %729 = vperm.xlu0 %728, %v623
      %v730 = vpop.permute.xlu0 %729
      %733 = vset.pattern.permute.xlu0 0
      %734 = vperm.xlu0 %733, %v624
      %v735 = vpop.permute.xlu0 %734
      %738 = vset.pattern.permute.xlu0 0
      %739 = vperm.xlu0 %738, %v625
      %v740 = vpop.permute.xlu0 %739
      %743 = vset.pattern.permute.xlu0 0
      %744 = vperm.xlu0 %743, %v626
      %v745 = vpop.permute.xlu0 %744
      %748 = vset.pattern.permute.xlu0 0
      %749 = vperm.xlu0 %748, %v627
      %v750 = vpop.permute.xlu0 %749
      %753 = vset.pattern.permute.xlu0 0
      %754 = vperm.xlu0 %753, %v628
      %v755 = vpop.permute.xlu0 %754
      %v757 = vsub.f32 %v532, %v680
      %v758 = vsub.f32 %v533, %v685
      %v759 = vsub.f32 %v534, %v690
      %v760 = vsub.f32 %v535, %v695
      %v761 = vsub.f32 %v536, %v700
      %v762 = vsub.f32 %v537, %v705
      %v763 = vsub.f32 %v538, %v710
      %v764 = vsub.f32 %v539, %v715
      %v765 = vsub.f32 %v540, %v720
      %v766 = vsub.f32 %v541, %v725
      %v767 = vsub.f32 %v542, %v730
      %v768 = vsub.f32 %v543, %v735
      %v769 = vsub.f32 %v544, %v740
      %v770 = vsub.f32 %v545, %v745
      %v771 = vsub.f32 %v546, %v750
      %v772 = vsub.f32 %v547, %v755
      %v773 = vmul.f32 %v757, 1.442695
      %v774 = vpow.pop %v773
      %v775 = vmul.f32 %v758, 1.442695
      %v776 = vpow.pop %v775
      %v777 = vmul.f32 %v759, 1.442695
      %v778 = vpow.pop %v777
      %v779 = vmul.f32 %v760, 1.442695
      %v780 = vpow.pop %v779
      %v781 = vmul.f32 %v761, 1.442695
      %v782 = vpow.pop %v781
      %v783 = vmul.f32 %v762, 1.442695
      %v784 = vpow.pop %v783
      %v785 = vmul.f32 %v763, 1.442695
      %v786 = vpow.pop %v785
      %v787 = vmul.f32 %v764, 1.442695
      %v788 = vpow.pop %v787
      %v789 = vmul.f32 %v765, 1.442695
      %v790 = vpow.pop %v789
      %v791 = vmul.f32 %v766, 1.442695
      %v792 = vpow.pop %v791
      %v793 = vmul.f32 %v767, 1.442695
      %v794 = vpow.pop %v793
      %v795 = vmul.f32 %v768, 1.442695
      %v796 = vpow.pop %v795
      %v797 = vmul.f32 %v769, 1.442695
      %v798 = vpow.pop %v797
      %v799 = vmul.f32 %v770, 1.442695
      %v800 = vpow.pop %v799
      %v801 = vmul.f32 %v771, 1.442695
      %v802 = vpow.pop %v801
      %v803 = vmul.f32 %v772, 1.442695
      %v804 = vpow.pop %v803
      %v805 = vld [vmem:[#allocation3] sm:$0xff]
      %v806 = vld [vmem:[#allocation3 + $0x8] sm:$0xff]
      %v807 = vld [vmem:[#allocation3 + $0x10] sm:$0xff]
      %v808 = vld [vmem:[#allocation3 + $0x18] sm:$0xff]
      %v809 = vld [vmem:[#allocation3 + $0x20] sm:$0xff]
      %v810 = vld [vmem:[#allocation3 + $0x28] sm:$0xff]
      %v811 = vld [vmem:[#allocation3 + $0x30] sm:$0xff]
      %v812 = vld [vmem:[#allocation3 + $0x38] sm:$0xff]
      %v813 = vld [vmem:[#allocation3 + $0x40] sm:$0xff]
      %v814 = vld [vmem:[#allocation3 + $0x48] sm:$0xff]
      %v815 = vld [vmem:[#allocation3 + $0x50] sm:$0xff]
      %v816 = vld [vmem:[#allocation3 + $0x58] sm:$0xff]
      %v817 = vld [vmem:[#allocation3 + $0x60] sm:$0xff]
      %v818 = vld [vmem:[#allocation3 + $0x68] sm:$0xff]
      %v819 = vld [vmem:[#allocation3 + $0x70] sm:$0xff]
      %v820 = vld [vmem:[#allocation3 + $0x78] sm:$0xff]
      %v821 = vmul.f32 %v646, %v805
      %v822 = vmul.f32 %v648, %v806
      %v823 = vmul.f32 %v650, %v807
      %v824 = vmul.f32 %v652, %v808
      %v825 = vmul.f32 %v654, %v809
      %v826 = vmul.f32 %v656, %v810
      %v827 = vmul.f32 %v658, %v811
      %v828 = vmul.f32 %v660, %v812
      %v829 = vmul.f32 %v662, %v813
      %v830 = vmul.f32 %v664, %v814
      %v831 = vmul.f32 %v666, %v815
      %v832 = vmul.f32 %v668, %v816
      %v833 = vmul.f32 %v670, %v817
      %v834 = vmul.f32 %v672, %v818
      %v835 = vmul.f32 %v674, %v819
      %v836 = vmul.f32 %v676, %v820
      %v837 = vsel %vm564, %v774, 0.0
      %838 = vadd.xlane.f32.xlu0 %v837
      %v839 = vpop.xlane.xlu0 %838
      %v840 = vsel %vm564, %v776, 0.0
      %841 = vadd.xlane.f32.xlu0 %v840
      %v842 = vpop.xlane.xlu0 %841
      %v843 = vsel %vm564, %v778, 0.0
      %844 = vadd.xlane.f32.xlu0 %v843
      %v845 = vpop.xlane.xlu0 %844
      %v846 = vsel %vm564, %v780, 0.0
      %847 = vadd.xlane.f32.xlu0 %v846
      %v848 = vpop.xlane.xlu0 %847
      %v849 = vsel %vm564, %v782, 0.0
      %850 = vadd.xlane.f32.xlu0 %v849
      %v851 = vpop.xlane.xlu0 %850
      %v852 = vsel %vm564, %v784, 0.0
      %853 = vadd.xlane.f32.xlu0 %v852
      %v854 = vpop.xlane.xlu0 %853
      %v855 = vsel %vm564, %v786, 0.0
      %856 = vadd.xlane.f32.xlu0 %v855
      %v857 = vpop.xlane.xlu0 %856
      %v858 = vsel %vm564, %v788, 0.0
      %859 = vadd.xlane.f32.xlu0 %v858
      %v860 = vpop.xlane.xlu0 %859
      %v861 = vsel %vm564, %v790, 0.0
      %862 = vadd.xlane.f32.xlu0 %v861
      %v863 = vpop.xlane.xlu0 %862
      %v864 = vsel %vm564, %v792, 0.0
      %865 = vadd.xlane.f32.xlu0 %v864
      %v866 = vpop.xlane.xlu0 %865
      %v867 = vsel %vm564, %v794, 0.0
      %868 = vadd.xlane.f32.xlu0 %v867
      %v869 = vpop.xlane.xlu0 %868
      %v870 = vsel %vm564, %v796, 0.0
      %871 = vadd.xlane.f32.xlu0 %v870
      %v872 = vpop.xlane.xlu0 %871
      %v873 = vsel %vm564, %v798, 0.0
      %874 = vadd.xlane.f32.xlu0 %v873
      %v875 = vpop.xlane.xlu0 %874
      %v876 = vsel %vm564, %v800, 0.0
      %877 = vadd.xlane.f32.xlu0 %v876
      %v878 = vpop.xlane.xlu0 %877
      %v879 = vsel %vm564, %v802, 0.0
      %880 = vadd.xlane.f32.xlu0 %v879
      %v881 = vpop.xlane.xlu0 %880
      %v882 = vsel %vm564, %v804, 0.0
      %883 = vadd.xlane.f32.xlu0 %v882
      %v884 = vpop.xlane.xlu0 %883
      %v885 = vadd.f32 %v821, %v839
      %v886 = vadd.f32 %v822, %v842
      %v887 = vadd.f32 %v823, %v845
      %v888 = vadd.f32 %v824, %v848
      %v889 = vadd.f32 %v825, %v851
      %v890 = vadd.f32 %v826, %v854
      %v891 = vadd.f32 %v827, %v857
      %v892 = vadd.f32 %v828, %v860
      %v893 = vadd.f32 %v829, %v863
      %v894 = vadd.f32 %v830, %v866
      %v895 = vadd.f32 %v831, %v869
      %v896 = vadd.f32 %v832, %v872
      %v897 = vadd.f32 %v833, %v875
      %v898 = vadd.f32 %v834, %v878
      %v899 = vadd.f32 %v835, %v881
      %v900 = vadd.f32 %v836, %v884
      %vm901 = vcmask 7168
      %902 = vst.msk [vmem:[#allocation3] sm:$0xff] %vm901, %v885
      %903 = vst.msk [vmem:[#allocation3 + $0x8] sm:$0xff] %vm901, %v886
      %904 = vst.msk [vmem:[#allocation3 + $0x10] sm:$0xff] %vm901, %v887
      %905 = vst.msk [vmem:[#allocation3 + $0x18] sm:$0xff] %vm901, %v888
      %906 = vst.msk [vmem:[#allocation3 + $0x20] sm:$0xff] %vm901, %v889
      %907 = vst.msk [vmem:[#allocation3 + $0x28] sm:$0xff] %vm901, %v890
      %908 = vst.msk [vmem:[#allocation3 + $0x30] sm:$0xff] %vm901, %v891
      %909 = vst.msk [vmem:[#allocation3 + $0x38] sm:$0xff] %vm901, %v892
      %910 = vst.msk [vmem:[#allocation3 + $0x40] sm:$0xff] %vm901, %v893
      %911 = vst.msk [vmem:[#allocation3 + $0x48] sm:$0xff] %vm901, %v894
      %912 = vst.msk [vmem:[#allocation3 + $0x50] sm:$0xff] %vm901, %v895
      %913 = vst.msk [vmem:[#allocation3 + $0x58] sm:$0xff] %vm901, %v896
      %914 = vst.msk [vmem:[#allocation3 + $0x60] sm:$0xff] %vm901, %v897
      %915 = vst.msk [vmem:[#allocation3 + $0x68] sm:$0xff] %vm901, %v898
      %916 = vst.msk [vmem:[#allocation3 + $0x70] sm:$0xff] %vm901, %v899
      %917 = vst.msk [vmem:[#allocation3 + $0x78] sm:$0xff] %vm901, %v900
      %v918 = vld [vmem:[#allocation4] sm:$0xff]
      %v919 = vld [vmem:[#allocation4 + $0x8] sm:$0xff]
      %v920 = vld [vmem:[#allocation4 + $0x10] sm:$0xff]
      %v921 = vld [vmem:[#allocation4 + $0x18] sm:$0xff]
      %v922 = vld [vmem:[#allocation4 + $0x20] sm:$0xff]
      %v923 = vld [vmem:[#allocation4 + $0x28] sm:$0xff]
      %v924 = vld [vmem:[#allocation4 + $0x30] sm:$0xff]
      %v925 = vld [vmem:[#allocation4 + $0x38] sm:$0xff]
      %v926 = vld [vmem:[#allocation4 + $0x40] sm:$0xff]
      %v927 = vld [vmem:[#allocation4 + $0x48] sm:$0xff]
      %v928 = vld [vmem:[#allocation4 + $0x50] sm:$0xff]
      %v929 = vld [vmem:[#allocation4 + $0x58] sm:$0xff]
      %v930 = vld [vmem:[#allocation4 + $0x60] sm:$0xff]
      %v931 = vld [vmem:[#allocation4 + $0x68] sm:$0xff]
      %v932 = vld [vmem:[#allocation4 + $0x70] sm:$0xff]
      %v933 = vld [vmem:[#allocation4 + $0x78] sm:$0xff]
      %935 = vset.pattern.permute.xlu0 0
      %936 = vperm.xlu0 %935, %v646
      %v937 = vpop.permute.xlu0 %936
      %940 = vset.pattern.permute.xlu0 0
      %941 = vperm.xlu0 %940, %v648
      %v942 = vpop.permute.xlu0 %941
      %945 = vset.pattern.permute.xlu0 0
      %946 = vperm.xlu0 %945, %v650
      %v947 = vpop.permute.xlu0 %946
      %950 = vset.pattern.permute.xlu0 0
      %951 = vperm.xlu0 %950, %v652
      %v952 = vpop.permute.xlu0 %951
      %955 = vset.pattern.permute.xlu0 0
      %956 = vperm.xlu0 %955, %v654
      %v957 = vpop.permute.xlu0 %956
      %960 = vset.pattern.permute.xlu0 0
      %961 = vperm.xlu0 %960, %v656
      %v962 = vpop.permute.xlu0 %961
      %965 = vset.pattern.permute.xlu0 0
      %966 = vperm.xlu0 %965, %v658
      %v967 = vpop.permute.xlu0 %966
      %970 = vset.pattern.permute.xlu0 0
      %971 = vperm.xlu0 %970, %v660
      %v972 = vpop.permute.xlu0 %971
      %975 = vset.pattern.permute.xlu0 0
      %976 = vperm.xlu0 %975, %v662
      %v977 = vpop.permute.xlu0 %976
      %980 = vset.pattern.permute.xlu0 0
      %981 = vperm.xlu0 %980, %v664
      %v982 = vpop.permute.xlu0 %981
      %985 = vset.pattern.permute.xlu0 0
      %986 = vperm.xlu0 %985, %v666
      %v987 = vpop.permute.xlu0 %986
      %990 = vset.pattern.permute.xlu0 0
      %991 = vperm.xlu0 %990, %v668
      %v992 = vpop.permute.xlu0 %991
      %995 = vset.pattern.permute.xlu0 0
      %996 = vperm.xlu0 %995, %v670
      %v997 = vpop.permute.xlu0 %996
      %1000 = vset.pattern.permute.xlu0 0
      %1001 = vperm.xlu0 %1000, %v672
      %v1002 = vpop.permute.xlu0 %1001
      %1005 = vset.pattern.permute.xlu0 0
      %1006 = vperm.xlu0 %1005, %v674
      %v1007 = vpop.permute.xlu0 %1006
      %1010 = vset.pattern.permute.xlu0 0
      %1011 = vperm.xlu0 %1010, %v676
      %v1012 = vpop.permute.xlu0 %1011
      %v1014 = vmul.f32 %v937, %v918
      %v1015 = vmul.f32 %v942, %v919
      %v1016 = vmul.f32 %v947, %v920
      %v1017 = vmul.f32 %v952, %v921
      %v1018 = vmul.f32 %v957, %v922
      %v1019 = vmul.f32 %v962, %v923
      %v1020 = vmul.f32 %v967, %v924
      %v1021 = vmul.f32 %v972, %v925
      %v1022 = vmul.f32 %v977, %v926
      %v1023 = vmul.f32 %v982, %v927
      %v1024 = vmul.f32 %v987, %v928
      %v1025 = vmul.f32 %v992, %v929
      %v1026 = vmul.f32 %v997, %v930
      %v1027 = vmul.f32 %v1002, %v931
      %v1028 = vmul.f32 %v1007, %v932
      %v1029 = vmul.f32 %v1012, %v933
      %v1030 = vpack.c.bf16 %v776, %v774
      %v1031 = vpack.c.bf16 %v780, %v778
      %v1032 = vpack.c.bf16 %v784, %v782
      %v1033 = vpack.c.bf16 %v788, %v786
      %v1034 = vpack.c.bf16 %v792, %v790
      %v1035 = vpack.c.bf16 %v796, %v794
      %v1036 = vpack.c.bf16 %v800, %v798
      %v1037 = vpack.c.bf16 %v804, %v802
      %v1046 = vunpack.c.l.b16 %v355
      %v1047 = vunpack.c.l.b16 %v356
      %v1048 = vunpack.c.l.b16 %v357
      %v1049 = vunpack.c.l.b16 %v358
      %v1050 = vunpack.c.l.b16 %v359
      %v1051 = vunpack.c.l.b16 %v360
      %v1052 = vunpack.c.l.b16 %v361
      %v1053 = vunpack.c.l.b16 %v362
      %v1054 = vpack.c.b16 %v1047, %v1046
      %v1055 = vpack.c.b16 %v1049, %v1048
      %v1056 = vpack.c.b16 %v1051, %v1050
      %v1057 = vpack.c.b16 %v1053, %v1052
      %v1063 = vsel %vm564, %v1030, 0
      %v1066 = vsel %vm564, %v1031, 0
      %v1069 = vsel %vm564, %v1032, 0
      %v1072 = vsel %vm564, %v1033, 0
      %v1075 = vsel %vm564, %v1034, 0
      %v1078 = vsel %vm564, %v1035, 0
      %v1081 = vsel %vm564, %v1036, 0
      %v1084 = vsel %vm564, %v1037, 0
      %1086 = vmatprep.subr.bf16.mxu0 0
      %1087 = vmatpush1.bf16.msra.mxu0 %v1054
      %1088 = vmatprep.subr.bf16.mxu0 0
      %1089 = vmatpush1.bf16.msra.mxu0 %v1055
      %1090 = vmatprep.subr.bf16.mxu0 0
      %1091 = vmatpush1.bf16.msra.mxu0 %v1056
      %1092 = vmatprep.subr.bf16.mxu0 0
      %1093 = vmatpush1.bf16.msra.mxu0 %v1057
      %1094 = vmatprep.subr.bf16.mxu0 0
      %1095 = vmatpush1.bf16.msra.mxu0 0
      %1096 = vmatprep.subr.bf16.mxu0 0
      %1097 = vmatpush1.bf16.msra.mxu0 0
      %1098 = vmatprep.subr.bf16.mxu0 0
      %1099 = vmatpush1.bf16.msra.mxu0 0
      %1100 = vmatprep.subr.bf16.mxu0 0
      %1101 = vmatpush1.bf16.msra.mxu0 0
      %1102 = vmatprep.subr.bf16.mxu0 0
      %1103 = vmatpush1.bf16.msra.mxu0 0
      %1104 = vmatprep.subr.bf16.mxu0 0
      %1105 = vmatpush1.bf16.msra.mxu0 0
      %1106 = vmatprep.subr.bf16.mxu0 0
      %1107 = vmatpush1.bf16.msra.mxu0 0
      %1108 = vmatprep.subr.bf16.mxu0 0
      %1109 = vmatpush1.bf16.msra.mxu0 0
      %1110 = vmatprep.subr.bf16.mxu0 0
      %1111 = vmatpush1.bf16.msra.mxu0 0
      %1112 = vmatprep.subr.bf16.mxu0 0
      %1113 = vmatpush1.bf16.msra.mxu0 0
      %1114 = vmatprep.subr.bf16.mxu0 0
      %1115 = vmatpush1.bf16.msra.mxu0 0
      %1116 = vmatprep.subr.bf16.mxu0 0
      %1117 = vmatpush1.bf16.msra.mxu0 0
      %1118 = vmatprep.mubr.bf16.mxu0 0
      %1119 = vmatmul.mubr.bf16.gmra.mrb[0].mxu0 %v1063
      %v1120 = vpop.f32.mrb[0].mxu0
      %v1121 = vadd.f32 0.0, %v1120
      %v1122 = vpop.f32.mrb[0].mxu0
      %v1123 = vpop.f32.mrb[0].mxu0
      %v1124 = vadd.f32 0.0, %v1123
      %v1125 = vpop.f32.mrb[0].mxu0
      %1126 = vmatprep.mubr.bf16.mxu0 0
      %1127 = vmatmul.mubr.bf16.gmra.mrb[0].mxu0 %v1066
      %v1128 = vpop.f32.mrb[0].mxu0
      %v1129 = vadd.f32 0.0, %v1128
      %v1130 = vpop.f32.mrb[0].mxu0
      %v1131 = vpop.f32.mrb[0].mxu0
      %v1132 = vadd.f32 0.0, %v1131
      %v1133 = vpop.f32.mrb[0].mxu0
      %1134 = vmatprep.mubr.bf16.mxu0 0
      %1135 = vmatmul.mubr.bf16.gmra.mrb[0].mxu0 %v1069
      %v1136 = vpop.f32.mrb[0].mxu0
      %v1137 = vadd.f32 0.0, %v1136
      %v1138 = vpop.f32.mrb[0].mxu0
      %v1139 = vpop.f32.mrb[0].mxu0
      %v1140 = vadd.f32 0.0, %v1139
      %v1141 = vpop.f32.mrb[0].mxu0
      %1142 = vmatprep.mubr.bf16.mxu0 0
      %1143 = vmatmul.mubr.bf16.gmra.mrb[0].mxu0 %v1072
      %v1144 = vpop.f32.mrb[0].mxu0
      %v1145 = vadd.f32 0.0, %v1144
      %v1146 = vpop.f32.mrb[0].mxu0
      %v1147 = vpop.f32.mrb[0].mxu0
      %v1148 = vadd.f32 0.0, %v1147
      %v1149 = vpop.f32.mrb[0].mxu0
      %1150 = vmatprep.mubr.bf16.mxu0 0
      %1151 = vmatmul.mubr.bf16.gmra.mrb[0].mxu0 %v1075
      %v1152 = vpop.f32.mrb[0].mxu0
      %v1153 = vadd.f32 0.0, %v1152
      %v1154 = vpop.f32.mrb[0].mxu0
      %v1155 = vpop.f32.mrb[0].mxu0
      %v1156 = vadd.f32 0.0, %v1155
      %v1157 = vpop.f32.mrb[0].mxu0
      %1158 = vmatprep.mubr.bf16.mxu0 0
      %1159 = vmatmul.mubr.bf16.gmra.mrb[0].mxu0 %v1078
      %v1160 = vpop.f32.mrb[0].mxu0
      %v1161 = vadd.f32 0.0, %v1160
      %v1162 = vpop.f32.mrb[0].mxu0
      %v1163 = vpop.f32.mrb[0].mxu0
      %v1164 = vadd.f32 0.0, %v1163
      %v1165 = vpop.f32.mrb[0].mxu0
      %1166 = vmatprep.mubr.bf16.mxu0 0
      %1167 = vmatmul.mubr.bf16.gmra.mrb[0].mxu0 %v1081
      %v1168 = vpop.f32.mrb[0].mxu0
      %v1169 = vadd.f32 0.0, %v1168
      %v1170 = vpop.f32.mrb[0].mxu0
      %v1171 = vpop.f32.mrb[0].mxu0
      %v1172 = vadd.f32 0.0, %v1171
      %v1173 = vpop.f32.mrb[0].mxu0
      %1174 = vmatprep.mubr.bf16.mxu0 0
      %1175 = vmatmul.mubr.bf16.gmra.mrb[0].mxu0 %v1084
      %v1176 = vpop.f32.mrb[0].mxu0
      %v1177 = vadd.f32 0.0, %v1176
      %v1178 = vpop.f32.mrb[0].mxu0
      %v1179 = vpop.f32.mrb[0].mxu0
      %v1180 = vadd.f32 0.0, %v1179
      %v1181 = vpop.f32.mrb[0].mxu0
      %1182 = vdwg.mxu0
      %v1183 = vadd.f32 %v1014, %v1121
      %v1184 = vadd.f32 %v1015, %v1124
      %v1185 = vadd.f32 %v1016, %v1129
      %v1186 = vadd.f32 %v1017, %v1132
      %v1187 = vadd.f32 %v1018, %v1137
      %v1188 = vadd.f32 %v1019, %v1140
      %v1189 = vadd.f32 %v1020, %v1145
      %v1190 = vadd.f32 %v1021, %v1148
      %v1191 = vadd.f32 %v1022, %v1153
      %v1192 = vadd.f32 %v1023, %v1156
      %v1193 = vadd.f32 %v1024, %v1161
      %v1194 = vadd.f32 %v1025, %v1164
      %v1195 = vadd.f32 %v1026, %v1169
      %v1196 = vadd.f32 %v1027, %v1172
      %v1197 = vadd.f32 %v1028, %v1177
      %v1198 = vadd.f32 %v1029, %v1180
      %1199 = vst [vmem:[#allocation4] sm:$0xff] %v1183
      %1200 = vst [vmem:[#allocation4 + $0x8] sm:$0xff] %v1184
      %1201 = vst [vmem:[#allocation4 + $0x10] sm:$0xff] %v1185
      %1202 = vst [vmem:[#allocation4 + $0x18] sm:$0xff] %v1186
      %1203 = vst [vmem:[#allocation4 + $0x20] sm:$0xff] %v1187
      %1204 = vst [vmem:[#allocation4 + $0x28] sm:$0xff] %v1188
      %1205 = vst [vmem:[#allocation4 + $0x30] sm:$0xff] %v1189
      %1206 = vst [vmem:[#allocation4 + $0x38] sm:$0xff] %v1190
      %1207 = vst [vmem:[#allocation4 + $0x40] sm:$0xff] %v1191
      %1208 = vst [vmem:[#allocation4 + $0x48] sm:$0xff] %v1192
      %1209 = vst [vmem:[#allocation4 + $0x50] sm:$0xff] %v1193
      %1210 = vst [vmem:[#allocation4 + $0x58] sm:$0xff] %v1194
      %1211 = vst [vmem:[#allocation4 + $0x60] sm:$0xff] %v1195
      %1212 = vst [vmem:[#allocation4 + $0x68] sm:$0xff] %v1196
      %1213 = vst [vmem:[#allocation4 + $0x70] sm:$0xff] %v1197
      %1214 = vst [vmem:[#allocation4 + $0x78] sm:$0xff] %v1198
      %1215 = vst.msk [vmem:[#allocation2] sm:$0xff] %vm901, %v613
      %1216 = vst.msk [vmem:[#allocation2 + $0x8] sm:$0xff] %vm901, %v614
      %1217 = vst.msk [vmem:[#allocation2 + $0x10] sm:$0xff] %vm901, %v615
      %1218 = vst.msk [vmem:[#allocation2 + $0x18] sm:$0xff] %vm901, %v616
      %1219 = vst.msk [vmem:[#allocation2 + $0x20] sm:$0xff] %vm901, %v617
      %1220 = vst.msk [vmem:[#allocation2 + $0x28] sm:$0xff] %vm901, %v618
      %1221 = vst.msk [vmem:[#allocation2 + $0x30] sm:$0xff] %vm901, %v619
      %1222 = vst.msk [vmem:[#allocation2 + $0x38] sm:$0xff] %vm901, %v620
      %1223 = vst.msk [vmem:[#allocation2 + $0x40] sm:$0xff] %vm901, %v621
      %1224 = vst.msk [vmem:[#allocation2 + $0x48] sm:$0xff] %vm901, %v622
      %1225 = vst.msk [vmem:[#allocation2 + $0x50] sm:$0xff] %vm901, %v623
      %1226 = vst.msk [vmem:[#allocation2 + $0x58] sm:$0xff] %vm901, %v624
      %1227 = vst.msk [vmem:[#allocation2 + $0x60] sm:$0xff] %vm901, %v625
      %1228 = vst.msk [vmem:[#allocation2 + $0x68] sm:$0xff] %vm901, %v626
      %1229 = vst.msk [vmem:[#allocation2 + $0x70] sm:$0xff] %vm901, %v627
      %1230 = vst.msk [vmem:[#allocation2 + $0x78] sm:$0xff] %vm901, %v628
      %p1231 = scmp.eq.s32.totalorder %s22, 1
      // Predicated region
      $region33: #{llama_decoder_layer.6} parent=27 // pred_check
        %p1232 = pneg %p1231
      $region34: #{llama_decoder_layer.6} parent=27 // pred_check_branch
        %1234 = sbr.rel (%p1232) target = $region36
      $region35: #{llama_decoder_layer.6} parent=27 // pred_region
        %v1235 = vld [vmem:[#allocation4] sm:$0xff]
        %v1236 = vld [vmem:[#allocation4 + $0x8] sm:$0xff]
        %v1237 = vld [vmem:[#allocation4 + $0x10] sm:$0xff]
        %v1238 = vld [vmem:[#allocation4 + $0x18] sm:$0xff]
        %v1239 = vld [vmem:[#allocation4 + $0x20] sm:$0xff]
        %v1240 = vld [vmem:[#allocation4 + $0x28] sm:$0xff]
        %v1241 = vld [vmem:[#allocation4 + $0x30] sm:$0xff]
        %v1242 = vld [vmem:[#allocation4 + $0x38] sm:$0xff]
        %v1243 = vld [vmem:[#allocation4 + $0x40] sm:$0xff]
        %v1244 = vld [vmem:[#allocation4 + $0x48] sm:$0xff]
        %v1245 = vld [vmem:[#allocation4 + $0x50] sm:$0xff]
        %v1246 = vld [vmem:[#allocation4 + $0x58] sm:$0xff]
        %v1247 = vld [vmem:[#allocation4 + $0x60] sm:$0xff]
        %v1248 = vld [vmem:[#allocation4 + $0x68] sm:$0xff]
        %v1249 = vld [vmem:[#allocation4 + $0x70] sm:$0xff]
        %v1250 = vld [vmem:[#allocation4 + $0x78] sm:$0xff]
        %v1251 = vld [vmem:[#allocation3] sm:$0xff]
        %v1252 = vld [vmem:[#allocation3 + $0x8] sm:$0xff]
        %v1253 = vld [vmem:[#allocation3 + $0x10] sm:$0xff]
        %v1254 = vld [vmem:[#allocation3 + $0x18] sm:$0xff]
        %v1255 = vld [vmem:[#allocation3 + $0x20] sm:$0xff]
        %v1256 = vld [vmem:[#allocation3 + $0x28] sm:$0xff]
        %v1257 = vld [vmem:[#allocation3 + $0x30] sm:$0xff]
        %v1258 = vld [vmem:[#allocation3 + $0x38] sm:$0xff]
        %v1259 = vld [vmem:[#allocation3 + $0x40] sm:$0xff]
        %v1260 = vld [vmem:[#allocation3 + $0x48] sm:$0xff]
        %v1261 = vld [vmem:[#allocation3 + $0x50] sm:$0xff]
        %v1262 = vld [vmem:[#allocation3 + $0x58] sm:$0xff]
        %v1263 = vld [vmem:[#allocation3 + $0x60] sm:$0xff]
        %v1264 = vld [vmem:[#allocation3 + $0x68] sm:$0xff]
        %v1265 = vld [vmem:[#allocation3 + $0x70] sm:$0xff]
        %v1266 = vld [vmem:[#allocation3 + $0x78] sm:$0xff]
        %v1267 = vrcp.pop %v1251
        %v1268 = vrcp.pop %v1252
        %v1269 = vrcp.pop %v1253
        %v1270 = vrcp.pop %v1254
        %v1271 = vrcp.pop %v1255
        %v1272 = vrcp.pop %v1256
        %v1273 = vrcp.pop %v1257
        %v1274 = vrcp.pop %v1258
        %v1275 = vrcp.pop %v1259
        %v1276 = vrcp.pop %v1260
        %v1277 = vrcp.pop %v1261
        %v1278 = vrcp.pop %v1262
        %v1279 = vrcp.pop %v1263
        %v1280 = vrcp.pop %v1264
        %v1281 = vrcp.pop %v1265
        %v1282 = vrcp.pop %v1266
        %1284 = vset.pattern.permute.xlu0 0
        %1285 = vperm.xlu0 %1284, %v1267
        %v1286 = vpop.permute.xlu0 %1285
        %1289 = vset.pattern.permute.xlu0 0
        %1290 = vperm.xlu0 %1289, %v1268
        %v1291 = vpop.permute.xlu0 %1290
        %1294 = vset.pattern.permute.xlu0 0
        %1295 = vperm.xlu0 %1294, %v1269
        %v1296 = vpop.permute.xlu0 %1295
        %1299 = vset.pattern.permute.xlu0 0
        %1300 = vperm.xlu0 %1299, %v1270
        %v1301 = vpop.permute.xlu0 %1300
        %1304 = vset.pattern.permute.xlu0 0
        %1305 = vperm.xlu0 %1304, %v1271
        %v1306 = vpop.permute.xlu0 %1305
        %1309 = vset.pattern.permute.xlu0 0
        %1310 = vperm.xlu0 %1309, %v1272
        %v1311 = vpop.permute.xlu0 %1310
        %1314 = vset.pattern.permute.xlu0 0
        %1315 = vperm.xlu0 %1314, %v1273
        %v1316 = vpop.permute.xlu0 %1315
        %1319 = vset.pattern.permute.xlu0 0
        %1320 = vperm.xlu0 %1319, %v1274
        %v1321 = vpop.permute.xlu0 %1320
        %1324 = vset.pattern.permute.xlu0 0
        %1325 = vperm.xlu0 %1324, %v1275
        %v1326 = vpop.permute.xlu0 %1325
        %1329 = vset.pattern.permute.xlu0 0
        %1330 = vperm.xlu0 %1329, %v1276
        %v1331 = vpop.permute.xlu0 %1330
        %1334 = vset.pattern.permute.xlu0 0
        %1335 = vperm.xlu0 %1334, %v1277
        %v1336 = vpop.permute.xlu0 %1335
        %1339 = vset.pattern.permute.xlu0 0
        %1340 = vperm.xlu0 %1339, %v1278
        %v1341 = vpop.permute.xlu0 %1340
        %1344 = vset.pattern.permute.xlu0 0
        %1345 = vperm.xlu0 %1344, %v1279
        %v1346 = vpop.permute.xlu0 %1345
        %1349 = vset.pattern.permute.xlu0 0
        %1350 = vperm.xlu0 %1349, %v1280
        %v1351 = vpop.permute.xlu0 %1350
        %1354 = vset.pattern.permute.xlu0 0
        %1355 = vperm.xlu0 %1354, %v1281
        %v1356 = vpop.permute.xlu0 %1355
        %1359 = vset.pattern.permute.xlu0 0
        %1360 = vperm.xlu0 %1359, %v1282
        %v1361 = vpop.permute.xlu0 %1360
        %v1363 = vmul.f32 %v1235, %v1286
        %v1364 = vmul.f32 %v1236, %v1291
        %v1365 = vmul.f32 %v1237, %v1296
        %v1366 = vmul.f32 %v1238, %v1301
        %v1367 = vmul.f32 %v1239, %v1306
        %v1368 = vmul.f32 %v1240, %v1311
        %v1369 = vmul.f32 %v1241, %v1316
        %v1370 = vmul.f32 %v1242, %v1321
        %v1371 = vmul.f32 %v1243, %v1326
        %v1372 = vmul.f32 %v1244, %v1331
        %v1373 = vmul.f32 %v1245, %v1336
        %v1374 = vmul.f32 %v1246, %v1341
        %v1375 = vmul.f32 %v1247, %v1346
        %v1376 = vmul.f32 %v1248, %v1351
        %v1377 = vmul.f32 %v1249, %v1356
        %v1378 = vmul.f32 %v1250, %v1361
        %v1379 = vpack.c.bf16 %v1364, %v1363
        %v1380 = vpack.c.bf16 %v1366, %v1365
        %v1381 = vpack.c.bf16 %v1368, %v1367
        %v1382 = vpack.c.bf16 %v1370, %v1369
        %v1383 = vpack.c.bf16 %v1372, %v1371
        %v1384 = vpack.c.bf16 %v1374, %v1373
        %v1385 = vpack.c.bf16 %v1376, %v1375
        %v1386 = vpack.c.bf16 %v1378, %v1377
        %v1395 = vunpack.c.l.b16 %v1379
        %v1396 = vunpack.c.h.b16 %v1379
        %v1397 = vunpack.c.l.b16 %v1380
        %v1398 = vunpack.c.h.b16 %v1380
        %v1399 = vunpack.c.l.b16 %v1381
        %v1400 = vunpack.c.h.b16 %v1381
        %v1401 = vunpack.c.l.b16 %v1382
        %v1402 = vunpack.c.h.b16 %v1382
        %v1403 = vunpack.c.l.b16 %v1383
        %v1404 = vunpack.c.h.b16 %v1383
        %v1405 = vunpack.c.l.b16 %v1384
        %v1406 = vunpack.c.h.b16 %v1384
        %v1407 = vunpack.c.l.b16 %v1385
        %v1408 = vunpack.c.h.b16 %v1385
        %v1409 = vunpack.c.l.b16 %v1386
        %v1410 = vunpack.c.h.b16 %v1386
        %v1411 = vpack.c.b16 %v1395, %v1395
        %v1412 = vpack.c.b16 %v1396, %v1396
        %v1413 = vpack.c.b16 %v1397, %v1397
        %v1414 = vpack.c.b16 %v1398, %v1398
        %v1415 = vpack.c.b16 %v1399, %v1399
        %v1416 = vpack.c.b16 %v1400, %v1400
        %v1417 = vpack.c.b16 %v1401, %v1401
        %v1418 = vpack.c.b16 %v1402, %v1402
        %v1419 = vpack.c.b16 %v1403, %v1403
        %v1420 = vpack.c.b16 %v1404, %v1404
        %v1421 = vpack.c.b16 %v1405, %v1405
        %v1422 = vpack.c.b16 %v1406, %v1406
        %v1423 = vpack.c.b16 %v1407, %v1407
        %v1424 = vpack.c.b16 %v1408, %v1408
        %v1425 = vpack.c.b16 %v1409, %v1409
        %v1426 = vpack.c.b16 %v1410, %v1410
        %1443 = vst [vmem:[%s275] sm:$0xf] %v1411
        %1444 = vst [vmem:[%s275 + $0x4] sm:$0xf] %v1412
        %1445 = vst [vmem:[%s275 + $0x8] sm:$0xf] %v1413
        %1446 = vst [vmem:[%s275 + $0xc] sm:$0xf] %v1414
        %1447 = vst [vmem:[%s275 + $0x10] sm:$0xf] %v1415
        %1448 = vst [vmem:[%s275 + $0x14] sm:$0xf] %v1416
        %1449 = vst [vmem:[%s275 + $0x18] sm:$0xf] %v1417
        %1450 = vst [vmem:[%s275 + $0x1c] sm:$0xf] %v1418
        %1451 = vst [vmem:[%s275 + $0x20] sm:$0xf] %v1419
        %1452 = vst [vmem:[%s275 + $0x24] sm:$0xf] %v1420
        %1453 = vst [vmem:[%s275 + $0x28] sm:$0xf] %v1421
        %1454 = vst [vmem:[%s275 + $0x2c] sm:$0xf] %v1422
        %1455 = vst [vmem:[%s275 + $0x30] sm:$0xf] %v1423
        %1456 = vst [vmem:[%s275 + $0x34] sm:$0xf] %v1424
        %1457 = vst [vmem:[%s275 + $0x38] sm:$0xf] %v1425
        %1458 = vst [vmem:[%s275 + $0x3c] sm:$0xf] %v1426
      $region36: #{llama_decoder_layer.6} parent=27 // pred_fallthru
        _
      %s1459 = smul.u32 16, %s21
      %p1460 = scmp.lt.s32.totalorder %s19, 1
      %s1461 = scalar_select %p1460, %s19, 1
      %p1462 = scmp.lt.s32.totalorder %s20, 1
      %s1463 = scalar_select %p1462, %s20, 1
      %p1464 = scmp.lt.s32.totalorder %s1459, 15
      %s1465 = scalar_select %p1464, %s1459, 15
      %s1466 = smul.addr %s1463, 16
      %s1467 = sadd.s32 %s1465, %s1466
      %s1468 = smul.addr %s1461, 32
      %s1469 = sadd.s32 %s1467, %s1468
      %s1470 = smul.addr %s1469, 4
      %s1471 = scalar_lea.vmem %s2, %s1470
      // Predicated region
      $region37: #{llama_decoder_layer.6} parent=27 // pred_check
        %p1472 = pneg %p121
      $region38: #{llama_decoder_layer.6} parent=27 // pred_check_branch
        %1474 = sbr.rel (%p1472) target = $region40
      $region39: #{llama_decoder_layer.6} parent=27 // pred_region
        %s1475 = smul.u32 16, %s21
      $region40: #{llama_decoder_layer.6} parent=27 // pred_fallthru
        _
    $region28: #{llama_decoder_layer.6} parent=5 // pred_fallthru
      _
    %p1476 = scmp.le.s32.totalorder 2, %s8
    // Predicated region
    $region41: #{llama_decoder_layer.6} parent=5 // pred_check
      %p1477 = pneg %p1476
    $region42: #{llama_decoder_layer.6} parent=5 // pred_check_branch
      %1479 = sbr.rel (%p1477) target = $region44
    $region43: #{llama_decoder_layer.6} parent=5 // pred_region
      %s1480 = ssub.s32 %s8, 2
      // Predicated region
      $region45: #{llama_decoder_layer.6} parent=43 // pred_check
        %p1481 = pneg %p127
      $region46: #{llama_decoder_layer.6} parent=43 // pred_check_branch
        %1483 = sbr.rel (%p1481) target = $region48
      $region47: #{llama_decoder_layer.6} parent=43 // pred_region
        %s1484 = smul.u32 16, %s25
        %p1485 = scmp.lt.s32.totalorder %s23, 1
        %s1486 = scalar_select %p1485, %s23, 1
        %p1487 = scmp.lt.s32.totalorder %s24, 1
        %s1488 = scalar_select %p1487, %s24, 1
        %p1489 = scmp.lt.s32.totalorder %s1484, 15
        %s1490 = scalar_select %p1489, %s1484, 15
        %s1491 = smul.addr %s1488, 16
        %s1492 = sadd.s32 %s1490, %s1491
        %s1493 = smul.addr %s1486, 32
        %s1494 = sadd.s32 %s1492, %s1493
        %s1495 = smul.addr %s1494, 4
        %s1496 = scalar_lea.vmem %s2, %s1495
      $region48: #{llama_decoder_layer.6} parent=43 // pred_fallthru
        _
    $region44: #{llama_decoder_layer.6} parent=5 // pred_fallthru
      _
  $region6: #{llama_decoder_layer.6} parent=0 // loop_footer
    %s12 = sadd.s32 1, %s8
  $region7: #{llama_decoder_layer.6} parent=0 // loop_footer_branch
    %7 = sbr.rel target = $region3
  $region8: #{llama_decoder_layer.6} parent=0 // loop_exit
    _

// kernel: llama_decoder_layer.7
$region0: #{llama_decoder_layer.7}
  #allocation0 [shape = 'u32[]', space=smem, size = 0x4, offset = 0x4, fixed_abs, tag = 'smem constant byte address 0x4 - core index']
  #allocation1 [shape = 'u32[144,128]{1,0:T(1,128)}', space=vmem, size = 0x12000, scoped, tag = 'internal scratch']
  #allocation2 [shape = 'bf16[64,256]{1,0:T(16,128)(2,1)}', space=vmem, size = 0x8000, scoped, tag = 'scratch operand']
  #allocation3 [shape = 'f32[64,256]{1,0:T(8,128)}', space=vmem, size = 0x10000, scoped, tag = 'scratch operand']
  %s0 = inlined_call_operand.vmem [shape: bf16[2,128,256], index: 0, kind: input, shape index: {}]
  %s1 = inlined_call_operand.vmem [shape: f32[2,128,256], index: 1, kind: input, shape index: {}]
  %s2 = inlined_call_operand.vmem [shape: bf16[256,256], index: 2, kind: input, shape index: {}]
  %s3 = inlined_call_operand.vmem [shape: bf16[256,1024], index: 3, kind: input, shape index: {}]
  %s4 = inlined_call_operand.vmem [shape: bf16[512,256], index: 4, kind: input, shape index: {}]
  %s5 = inlined_call_operand.hbm [shape: f32[2,128,256], index: 5, kind: output, shape index: {}]
  %s6 = sld [smem:[#allocation0]]
  $region84: #{llama_decoder_layer.7} parent=0
    _
  %s8 = ssub.s32 1, %s6
  %s9 = scalar_select 0, %s8, %s6
  $region1: #{llama_decoder_layer.7} parent=0
    #allocation4 [shape = 'u8[524288]{0}', space=vmem, size = 0x80000, scoped, tag = 'input window, operand 3']
    #allocation5 [shape = 'u8[131072]{0}', space=vmem, size = 0x20000, scoped, tag = 'output window, operand 0']
    #allocation6 [shape = 's32[2]{0}', space=sflag, size = 0x8, scoped, tag = 'scoped memory for llama_decoder_layer.7']
    %10 = vsyncpa [#allocation6], 0
    %s11 = scalar_lea.sflag [#allocation6], 1
    %12 = vsyncpa %s11, 0
    loop: start=0, step=1, limit=10
    $region2: #{llama_decoder_layer.7} parent=1 // loop_pre_header
      _
    $region3: #{llama_decoder_layer.7} parent=1 // loop_header
      %s14 = sphi 0, %s18
      %p15 = scmp.ge.s32.totalorder %s14, 10
      %s21 = sphi 0, %s40
      %s22 = sphi 0, %s36
      %s23 = sphi 0, %s32
      %s24 = sphi 0, %s21
      %s25 = sphi 0, %s22
      %s26 = sphi 0, %s23
      %s27 = sphi 0, %s24
      %s28 = sphi 0, %s25
      %s29 = sphi 0, %s26
      %s45 = sphi 0, %s47
      %s48 = sphi 0, %s45
      %s49 = sphi 0, %s48
      %s65 = sphi 0, %s49
      %s73 = sphi 0, %s75
      %s76 = sphi 0, %s73
      %s77 = sphi 0, %s76
      %s93 = sphi 0, %s77
      %s97 = sphi 0, %s97
      %s99 = sphi 0, %s97
      %s100 = sphi 0, %s99
      %s114 = sphi 0, %s100
      %s120 = sphi 0, %s122
      %s123 = sphi 0, %s120
      %s124 = sphi 0, %s123
      %s140 = sphi 0, %s124
      %s146 = sphi 0, %s148
      %s149 = sphi 0, %s146
      %s150 = sphi 0, %s149
      %s166 = sphi 0, %s150
      %s174 = sphi 0, %s176
      %s177 = sphi 0, %s174
      %s178 = sphi 0, %s177
      %s194 = sphi 0, %s178
    $region4: #{llama_decoder_layer.7} parent=1 // loop_header_branch
      %17 = sbr.rel (%p15) target = $region8
    $region5: #{llama_decoder_layer.7} parent=1 // loop_body
      %s19 = ssub.s32 %s14, 1
      %s20 = ssub.s32 %s14, 2
      %s30 = sadd.s32 1, %s23
      %p31 = scmp.ge.s32.totalorder %s30, 2
      %s32 = scalar_select %p31, 0, %s30
      %s33 = sadd.s32 1, %s22
      %s34 = scalar_select %p31, %s33, %s22
      %p35 = scmp.ge.s32.totalorder %s34, 2
      %s36 = scalar_select %p35, 0, %s34
      %s37 = sadd.s32 1, %s21
      %s38 = scalar_select %p35, %s37, %s21
      %p39 = scmp.ge.s32.totalorder %s38, 2
      %s40 = scalar_select %p39, 0, %s38
      %s41 = ssub.s32 %s21, %s40
      %s42 = ssub.s32 %s22, %s36
      %s43 = sor.u32 %s41, %s42
      %p44 = scmp.eq.s32.totalorder %s43, 0
      %s46 = sadd.s32 %s45, 1
      %s47 = scalar_select %p44, %s45, %s46
      %p50 = pneg %p44
      %p51 = scmp.eq.s32.totalorder %s14, 7
      %p52 = por %p50, %p51
      %p53 = scmp.ne.s32.totalorder %s45, %s48
      %p54 = scmp.eq.s32.totalorder %s14, 0
      %p55 = por %p53, %p54
      %p56 = scmp.ne.s32.totalorder %s45, %s48
      %p57 = scmp.eq.s32.totalorder %s19, 7
      %p58 = por %p56, %p57
      %p59 = scmp.ne.s32.totalorder %s48, %s49
      %p60 = scmp.eq.s32.totalorder %s19, 0
      %p61 = por %p59, %p60
      %p62 = scmp.ne.s32.totalorder %s48, %s49
      %p63 = scmp.eq.s32.totalorder %s20, 7
      %p64 = por %p62, %p63
      %p66 = scmp.ne.s32.totalorder %s49, %s65
      %p67 = scmp.eq.s32.totalorder %s20, 0
      %p68 = por %p66, %p67
      %s69 = ssub.s32 %s21, %s40
      %s70 = ssub.s32 %s22, %s36
      %s71 = sor.u32 %s69, %s70
      %p72 = scmp.eq.s32.totalorder %s71, 0
      %s74 = sadd.s32 %s73, 1
      %s75 = scalar_select %p72, %s73, %s74
      %p78 = pneg %p72
      %p79 = scmp.eq.s32.totalorder %s14, 7
      %p80 = por %p78, %p79
      %p81 = scmp.ne.s32.totalorder %s73, %s76
      %p82 = scmp.eq.s32.totalorder %s14, 0
      %p83 = por %p81, %p82
      %p84 = scmp.ne.s32.totalorder %s73, %s76
      %p85 = scmp.eq.s32.totalorder %s19, 7
      %p86 = por %p84, %p85
      %p87 = scmp.ne.s32.totalorder %s76, %s77
      %p88 = scmp.eq.s32.totalorder %s19, 0
      %p89 = por %p87, %p88
      %p90 = scmp.ne.s32.totalorder %s76, %s77
      %p91 = scmp.eq.s32.totalorder %s20, 7
      %p92 = por %p90, %p91
      %p94 = scmp.ne.s32.totalorder %s77, %s93
      %p95 = scmp.eq.s32.totalorder %s20, 0
      %p96 = por %p94, %p95
      %s98 = sadd.s32 %s97, 1
      %p101 = scmp.eq.s32.totalorder %s14, 7
      %p102 = scmp.ne.s32.totalorder %s97, %s99
      %p103 = scmp.eq.s32.totalorder %s14, 0
      %p104 = por %p102, %p103
      %p105 = scmp.ne.s32.totalorder %s97, %s99
      %p106 = scmp.eq.s32.totalorder %s19, 7
      %p107 = por %p105, %p106
      %p108 = scmp.ne.s32.totalorder %s99, %s100
      %p109 = scmp.eq.s32.totalorder %s19, 0
      %p110 = por %p108, %p109
      %p111 = scmp.ne.s32.totalorder %s99, %s100
      %p112 = scmp.eq.s32.totalorder %s20, 7
      %p113 = por %p111, %p112
      %p115 = scmp.ne.s32.totalorder %s100, %s114
      %p116 = scmp.eq.s32.totalorder %s20, 0
      %p117 = por %p115, %p116
      %s118 = ssub.s32 %s23, %s32
      %p119 = scmp.eq.s32.totalorder %s118, 0
      %s121 = sadd.s32 %s120, 1
      %s122 = scalar_select %p119, %s120, %s121
      %p125 = pneg %p119
      %p126 = scmp.eq.s32.totalorder %s14, 7
      %p127 = por %p125, %p126
      %p128 = scmp.ne.s32.totalorder %s120, %s123
      %p129 = scmp.eq.s32.totalorder %s14, 0
      %p130 = por %p128, %p129
      %p131 = scmp.ne.s32.totalorder %s120, %s123
      %p132 = scmp.eq.s32.totalorder %s19, 7
      %p133 = por %p131, %p132
      %p134 = scmp.ne.s32.totalorder %s123, %s124
      %p135 = scmp.eq.s32.totalorder %s19, 0
      %p136 = por %p134, %p135
      %p137 = scmp.ne.s32.totalorder %s123, %s124
      %p138 = scmp.eq.s32.totalorder %s20, 7
      %p139 = por %p137, %p138
      %p141 = scmp.ne.s32.totalorder %s124, %s140
      %p142 = scmp.eq.s32.totalorder %s20, 0
      %p143 = por %p141, %p142
      %s144 = ssub.s32 %s23, %s32
      %p145 = scmp.eq.s32.totalorder %s144, 0
      %s147 = sadd.s32 %s146, 1
      %s148 = scalar_select %p145, %s146, %s147
      %p151 = pneg %p145
      %p152 = scmp.eq.s32.totalorder %s14, 7
      %p153 = por %p151, %p152
      %p154 = scmp.ne.s32.totalorder %s146, %s149
      %p155 = scmp.eq.s32.totalorder %s14, 0
      %p156 = por %p154, %p155
      %p157 = scmp.ne.s32.totalorder %s146, %s149
      %p158 = scmp.eq.s32.totalorder %s19, 7
      %p159 = por %p157, %p158
      %p160 = scmp.ne.s32.totalorder %s149, %s150
      %p161 = scmp.eq.s32.totalorder %s19, 0
      %p162 = por %p160, %p161
      %p163 = scmp.ne.s32.totalorder %s149, %s150
      %p164 = scmp.eq.s32.totalorder %s20, 7
      %p165 = por %p163, %p164
      %p167 = scmp.ne.s32.totalorder %s150, %s166
      %p168 = scmp.eq.s32.totalorder %s20, 0
      %p169 = por %p167, %p168
      %s170 = ssub.s32 %s21, %s40
      %s171 = ssub.s32 %s22, %s36
      %s172 = sor.u32 %s170, %s171
      %p173 = scmp.eq.s32.totalorder %s172, 0
      %s175 = sadd.s32 %s174, 1
      %s176 = scalar_select %p173, %s174, %s175
      %p179 = pneg %p173
      %p180 = scmp.eq.s32.totalorder %s14, 7
      %p181 = por %p179, %p180
      %p182 = scmp.ne.s32.totalorder %s174, %s177
      %p183 = scmp.eq.s32.totalorder %s14, 0
      %p184 = por %p182, %p183
      %p185 = scmp.ne.s32.totalorder %s174, %s177
      %p186 = scmp.eq.s32.totalorder %s19, 7
      %p187 = por %p185, %p186
      %p188 = scmp.ne.s32.totalorder %s177, %s178
      %p189 = scmp.eq.s32.totalorder %s19, 0
      %p190 = por %p188, %p189
      %p191 = scmp.ne.s32.totalorder %s177, %s178
      %p192 = scmp.eq.s32.totalorder %s20, 7
      %p193 = por %p191, %p192
      %p195 = scmp.ne.s32.totalorder %s178, %s194
      %p196 = scmp.eq.s32.totalorder %s20, 0
      %p197 = por %p195, %p196
      %p198 = scmp.le.s32.totalorder 1, %s14
      %p199 = scmp.lt.s32.totalorder %s14, 9
      %p200 = pnand %p198, %p199
      %p201 = pneg %p200
      // Predicated region
      $region9: #{llama_decoder_layer.7} parent=5 // pred_check
        _
      $region10: #{llama_decoder_layer.7} parent=5 // pred_check_branch
        %203 = sbr.rel (%p200) target = $region12
      $region11: #{llama_decoder_layer.7} parent=5 // pred_region
        %s204 = ssub.s32 %s14, 1
        // Predicated region
        $region13: #{llama_decoder_layer.7} parent=11 // pred_check
          %p205 = pneg %p110
        $region14: #{llama_decoder_layer.7} parent=11 // pred_check_branch
          %207 = sbr.rel (%p205) target = $region16
        $region15: #{llama_decoder_layer.7} parent=11 // pred_region
          _
        $region16: #{llama_decoder_layer.7} parent=11 // pred_fallthru
          _
      $region12: #{llama_decoder_layer.7} parent=5 // pred_fallthru
        _
      %p208 = scmp.lt.s32.totalorder %s14, 8
      // Predicated region
      $region17: #{llama_decoder_layer.7} parent=5 // pred_check
        %p209 = pneg %p208
      $region18: #{llama_decoder_layer.7} parent=5 // pred_check_branch
        %211 = sbr.rel (%p209) target = $region20
      $region19: #{llama_decoder_layer.7} parent=5 // pred_region
        // Predicated region
        $region21: #{llama_decoder_layer.7} parent=19 // pred_check
          %p212 = pneg %p55
        $region22: #{llama_decoder_layer.7} parent=19 // pred_check_branch
          %214 = sbr.rel (%p212) target = $region24
        $region23: #{llama_decoder_layer.7} parent=19 // pred_region
          %s215 = smul.u32 8, %s22
          %p216 = scmp.lt.s32.totalorder %s21, 1
          %s217 = scalar_select %p216, %s21, 1
          %p218 = scmp.lt.s32.totalorder %s215, 15
          %s219 = scalar_select %p218, %s215, 15
          %s220 = smul.addr %s219, 2
          %s221 = smul.addr %s217, 32
          %s222 = sadd.s32 %s220, %s221
          %s223 = smul.addr %s222, 4
          %s224 = scalar_lea.vmem %s0, %s223
          %s225 = smul.u32 8, %s22
        $region24: #{llama_decoder_layer.7} parent=19 // pred_fallthru
          _
        // Predicated region
        $region25: #{llama_decoder_layer.7} parent=19 // pred_check
          %p226 = pneg %p83
        $region26: #{llama_decoder_layer.7} parent=19 // pred_check_branch
          %228 = sbr.rel (%p226) target = $region28
        $region27: #{llama_decoder_layer.7} parent=19 // pred_region
          %s229 = smul.u32 8, %s22
          %p230 = scmp.lt.s32.totalorder %s21, 1
          %s231 = scalar_select %p230, %s21, 1
          %p232 = scmp.lt.s32.totalorder %s229, 15
          %s233 = scalar_select %p232, %s229, 15
          %s234 = smul.addr %s233, 2
          %s235 = smul.addr %s231, 32
          %s236 = sadd.s32 %s234, %s235
          %s237 = smul.addr %s236, 8
          %s238 = scalar_lea.vmem %s1, %s237
          %s239 = smul.u32 8, %s22
        $region28: #{llama_decoder_layer.7} parent=19 // pred_fallthru
          _
        // Predicated region
        $region29: #{llama_decoder_layer.7} parent=19 // pred_check
          %p240 = pneg %p130
        $region30: #{llama_decoder_layer.7} parent=19 // pred_check_branch
          %242 = sbr.rel (%p240) target = $region32
        $region31: #{llama_decoder_layer.7} parent=19 // pred_region
          %s243 = sand.u32 %s120, 1
          %s244 = sand.u32 %s120, 1
          %s245 = smul.addr %s244, 512
          %s246 = scalar_lea.vmem [#allocation4], %s245
          %s247 = smul.u32 4, %s23
          %s248 = smul.addr %s247, 4
          %s249 = scalar_lea.vmem %s3, %s248
          // Predicated region
          $region33: #{llama_decoder_layer.7} parent=31 // pred_check
            _
          $region34: #{llama_decoder_layer.7} parent=31 // pred_check_branch
            %251 = sbr.rel (0) target = $region36
          $region35: #{llama_decoder_layer.7} parent=31 // pred_region
            // Predicated region
            $region37: #{llama_decoder_layer.7} parent=35 // pred_check
              _
            $region38: #{llama_decoder_layer.7} parent=35 // pred_check_branch
              %253 = sbr.rel (0) target = $region40
            $region39: #{llama_decoder_layer.7} parent=35 // pred_region
              loop: start=0, step=1, limit=1
              $region41: #{llama_decoder_layer.7} parent=39 // loop_pre_header
                _
              $region42: #{llama_decoder_layer.7} parent=39 // loop_header
                %s255 = sphi 0, %s259
                %p256 = scmp.ge.s32.totalorder %s255, 1
                %s260 = sphi %s249, %s249
                %s261 = sphi %s246, %s246
              $region43: #{llama_decoder_layer.7} parent=39 // loop_header_branch
                %258 = sbr.rel (%p256) target = $region47
              $region44: #{llama_decoder_layer.7} parent=39 // loop_body
                %v262 = vld [vmem:[%s260] sm:$0xff]
                %263 = vst [vmem:[%s261] sm:$0xff] %v262
                %v264 = vld [vmem:[%s260 + $0x8] sm:$0xff]
                %265 = vst [vmem:[%s261 + $0x8] sm:$0xff] %v264
                %v266 = vld [vmem:[%s260 + $0x20] sm:$0xff]
                %267 = vst [vmem:[%s261 + $0x10] sm:$0xff] %v266
                %v268 = vld [vmem:[%s260 + $0x28] sm:$0xff]
                %269 = vst [vmem:[%s261 + $0x18] sm:$0xff] %v268
                %v270 = vld [vmem:[%s260 + $0x40] sm:$0xff]
                %271 = vst [vmem:[%s261 + $0x20] sm:$0xff] %v270
                %v272 = vld [vmem:[%s260 + $0x48] sm:$0xff]
                %273 = vst [vmem:[%s261 + $0x28] sm:$0xff] %v272
                %v274 = vld [vmem:[%s260 + $0x60] sm:$0xff]
                %275 = vst [vmem:[%s261 + $0x30] sm:$0xff] %v274
                %v276 = vld [vmem:[%s260 + $0x68] sm:$0xff]
                %277 = vst [vmem:[%s261 + $0x38] sm:$0xff] %v276
                %v278 = vld [vmem:[%s260 + $0x80] sm:$0xff]
                %279 = vst [vmem:[%s261 + $0x40] sm:$0xff] %v278
                %v280 = vld [vmem:[%s260 + $0x88] sm:$0xff]
                %281 = vst [vmem:[%s261 + $0x48] sm:$0xff] %v280
                %v282 = vld [vmem:[%s260 + $0xa0] sm:$0xff]
                %283 = vst [vmem:[%s261 + $0x50] sm:$0xff] %v282
                %v284 = vld [vmem:[%s260 + $0xa8] sm:$0xff]
                %285 = vst [vmem:[%s261 + $0x58] sm:$0xff] %v284
                %v286 = vld [vmem:[%s260 + $0xc0] sm:$0xff]
                %287 = vst [vmem:[%s261 + $0x60] sm:$0xff] %v286
                %v288 = vld [vmem:[%s260 + $0xc8] sm:$0xff]
                %289 = vst [vmem:[%s261 + $0x68] sm:$0xff] %v288
                %v290 = vld [vmem:[%s260 + $0xe0] sm:$0xff]
                %291 = vst [vmem:[%s261 + $0x70] sm:$0xff] %v290
                %v292 = vld [vmem:[%s260 + $0xe8] sm:$0xff]
                %293 = vst [vmem:[%s261 + $0x78] sm:$0xff] %v292
                %v294 = vld [vmem:[%s260 + $0x100] sm:$0xff]
                %295 = vst [vmem:[%s261 + $0x80] sm:$0xff] %v294
                %v296 = vld [vmem:[%s260 + $0x108] sm:$0xff]
                %297 = vst [vmem:[%s261 + $0x88] sm:$0xff] %v296
                %v298 = vld [vmem:[%s260 + $0x120] sm:$0xff]
                %299 = vst [vmem:[%s261 + $0x90] sm:$0xff] %v298
                %v300 = vld [vmem:[%s260 + $0x128] sm:$0xff]
                %301 = vst [vmem:[%s261 + $0x98] sm:$0xff] %v300
                %v302 = vld [vmem:[%s260 + $0x140] sm:$0xff]
                %303 = vst [vmem:[%s261 + $0xa0] sm:$0xff] %v302
                %v304 = vld [vmem:[%s260 + $0x148] sm:$0xff]
                %305 = vst [vmem:[%s261 + $0xa8] sm:$0xff] %v304
                %v306 = vld [vmem:[%s260 + $0x160] sm:$0xff]
                %307 = vst [vmem:[%s261 + $0xb0] sm:$0xff] %v306
                %v308 = vld [vmem:[%s260 + $0x168] sm:$0xff]
                %309 = vst [vmem:[%s261 + $0xb8] sm:$0xff] %v308
                %v310 = vld [vmem:[%s260 + $0x180] sm:$0xff]
                %311 = vst [vmem:[%s261 + $0xc0] sm:$0xff] %v310
                %v312 = vld [vmem:[%s260 + $0x188] sm:$0xff]
                %313 = vst [vmem:[%s261 + $0xc8] sm:$0xff] %v312
                %v314 = vld [vmem:[%s260 + $0x1a0] sm:$0xff]
                %315 = vst [vmem:[%s261 + $0xd0] sm:$0xff] %v314
                %v316 = vld [vmem:[%s260 + $0x1a8] sm:$0xff]
                %317 = vst [vmem:[%s261 + $0xd8] sm:$0xff] %v316
                %v318 = vld [vmem:[%s260 + $0x1c0] sm:$0xff]
                %319 = vst [vmem:[%s261 + $0xe0] sm:$0xff] %v318
                %v320 = vld [vmem:[%s260 + $0x1c8] sm:$0xff]
                %321 = vst [vmem:[%s261 + $0xe8] sm:$0xff] %v320
                %v322 = vld [vmem:[%s260 + $0x1e0] sm:$0xff]
                %323 = vst [vmem:[%s261 + $0xf0] sm:$0xff] %v322
                %v324 = vld [vmem:[%s260 + $0x1e8] sm:$0xff]
                %325 = vst [vmem:[%s261 + $0xf8] sm:$0xff] %v324
                %v326 = vld [vmem:[%s260 + $0x200] sm:$0xff]
                %327 = vst [vmem:[%s261 + $0x100] sm:$0xff] %v326
                %v328 = vld [vmem:[%s260 + $0x208] sm:$0xff]
                %329 = vst [vmem:[%s261 + $0x108] sm:$0xff] %v328
                %v330 = vld [vmem:[%s260 + $0x220] sm:$0xff]
                %331 = vst [vmem:[%s261 + $0x110] sm:$0xff] %v330
                %v332 = vld [vmem:[%s260 + $0x228] sm:$0xff]
                %333 = vst [vmem:[%s261 + $0x118] sm:$0xff] %v332
                %v334 = vld [vmem:[%s260 + $0x240] sm:$0xff]
                %335 = vst [vmem:[%s261 + $0x120] sm:$0xff] %v334
                %v336 = vld [vmem:[%s260 + $0x248] sm:$0xff]
                %337 = vst [vmem:[%s261 + $0x128] sm:$0xff] %v336
                %v338 = vld [vmem:[%s260 + $0x260] sm:$0xff]
                %339 = vst [vmem:[%s261 + $0x130] sm:$0xff] %v338
                %v340 = vld [vmem:[%s260 + $0x268] sm:$0xff]
                %341 = vst [vmem:[%s261 + $0x138] sm:$0xff] %v340
                %v342 = vld [vmem:[%s260 + $0x280] sm:$0xff]
                %343 = vst [vmem:[%s261 + $0x140] sm:$0xff] %v342
                %v344 = vld [vmem:[%s260 + $0x288] sm:$0xff]
                %345 = vst [vmem:[%s261 + $0x148] sm:$0xff] %v344
                %v346 = vld [vmem:[%s260 + $0x2a0] sm:$0xff]
                %347 = vst [vmem:[%s261 + $0x150] sm:$0xff] %v346
                %v348 = vld [vmem:[%s260 + $0x2a8] sm:$0xff]
                %349 = vst [vmem:[%s261 + $0x158] sm:$0xff] %v348
                %v350 = vld [vmem:[%s260 + $0x2c0] sm:$0xff]
                %351 = vst [vmem:[%s261 + $0x160] sm:$0xff] %v350
                %v352 = vld [vmem:[%s260 + $0x2c8] sm:$0xff]
                %353 = vst [vmem:[%s261 + $0x168] sm:$0xff] %v352
                %v354 = vld [vmem:[%s260 + $0x2e0] sm:$0xff]
                %355 = vst [vmem:[%s261 + $0x170] sm:$0xff] %v354
                %v356 = vld [vmem:[%s260 + $0x2e8] sm:$0xff]
                %357 = vst [vmem:[%s261 + $0x178] sm:$0xff] %v356
                %v358 = vld [vmem:[%s260 + $0x300] sm:$0xff]
                %359 = vst [vmem:[%s261 + $0x180] sm:$0xff] %v358
                %v360 = vld [vmem:[%s260 + $0x308] sm:$0xff]
                %361 = vst [vmem:[%s261 + $0x188] sm:$0xff] %v360
                %v362 = vld [vmem:[%s260 + $0x320] sm:$0xff]
                %363 = vst [vmem:[%s261 + $0x190] sm:$0xff] %v362
                %v364 = vld [vmem:[%s260 + $0x328] sm:$0xff]
                %365 = vst [vmem:[%s261 + $0x198] sm:$0xff] %v364
                %v366 = vld [vmem:[%s260 + $0x340] sm:$0xff]
                %367 = vst [vmem:[%s261 + $0x1a0] sm:$0xff] %v366
                %v368 = vld [vmem:[%s260 + $0x348] sm:$0xff]
                %369 = vst [vmem:[%s261 + $0x1a8] sm:$0xff] %v368
                %v370 = vld [vmem:[%s260 + $0x360] sm:$0xff]
                %371 = vst [vmem:[%s261 + $0x1b0] sm:$0xff] %v370
                %v372 = vld [vmem:[%s260 + $0x368] sm:$0xff]
                %373 = vst [vmem:[%s261 + $0x1b8] sm:$0xff] %v372
                %v374 = vld [vmem:[%s260 + $0x380] sm:$0xff]
                %375 = vst [vmem:[%s261 + $0x1c0] sm:$0xff] %v374
                %v376 = vld [vmem:[%s260 + $0x388] sm:$0xff]
                %377 = vst [vmem:[%s261 + $0x1c8] sm:$0xff] %v376
                %v378 = vld [vmem:[%s260 + $0x3a0] sm:$0xff]
                %379 = vst [vmem:[%s261 + $0x1d0] sm:$0xff] %v378
                %v380 = vld [vmem:[%s260 + $0x3a8] sm:$0xff]
                %381 = vst [vmem:[%s261 + $0x1d8] sm:$0xff] %v380
                %v382 = vld [vmem:[%s260 + $0x3c0] sm:$0xff]
                %383 = vst [vmem:[%s261 + $0x1e0] sm:$0xff] %v382
                %v384 = vld [vmem:[%s260 + $0x3c8] sm:$0xff]
                %385 = vst [vmem:[%s261 + $0x1e8] sm:$0xff] %v384
                %v386 = vld [vmem:[%s260 + $0x3e0] sm:$0xff]
                %387 = vst [vmem:[%s261 + $0x1f0] sm:$0xff] %v386
                %v388 = vld [vmem:[%s260 + $0x3e8] sm:$0xff]
                %389 = vst [vmem:[%s261 + $0x1f8] sm:$0xff] %v388
              $region45: #{llama_decoder_layer.7} parent=39 // loop_footer
                %s259 = sadd.s32 1, %s255
              $region46: #{llama_decoder_layer.7} parent=39 // loop_footer_branch
                %254 = sbr.rel target = $region42
              $region47: #{llama_decoder_layer.7} parent=39 // loop_exit
                _
            $region40: #{llama_decoder_layer.7} parent=35 // pred_fallthru
              _
            // Predicated region
            $region48: #{llama_decoder_layer.7} parent=35 // pred_check
              _
            $region49: #{llama_decoder_layer.7} parent=35 // pred_check_branch
              %391 = sbr.rel target = $region51
            $region50: #{llama_decoder_layer.7} parent=35 // pred_region
              _
            $region51: #{llama_decoder_layer.7} parent=35 // pred_fallthru
              _
          $region36: #{llama_decoder_layer.7} parent=31 // pred_fallthru
            _
          %392 = vnop
        $region32: #{llama_decoder_layer.7} parent=19 // pred_fallthru
          _
        // Predicated region
        $region52: #{llama_decoder_layer.7} parent=19 // pred_check
          %p393 = pneg %p156
        $region53: #{llama_decoder_layer.7} parent=19 // pred_check_branch
          %395 = sbr.rel (%p393) target = $region55
        $region54: #{llama_decoder_layer.7} parent=19 // pred_region
          %s396 = smul.u32 32, %s23
          %p397 = scmp.lt.s32.totalorder %s396, 63
          %s398 = scalar_select %p397, %s396, 63
          %s399 = smul.addr %s398, 2
          %s400 = smul.addr %s399, 4
          %s401 = scalar_lea.vmem %s4, %s400
          %s402 = smul.u32 32, %s23
        $region55: #{llama_decoder_layer.7} parent=19 // pred_fallthru
          _
      $region20: #{llama_decoder_layer.7} parent=5 // pred_fallthru
        _
      %p403 = scmp.le.s32.totalorder 1, %s14
      %p404 = scmp.lt.s32.totalorder %s14, 9
      %p405 = pnand %p403, %p404
      %p406 = pneg %p405
      // Predicated region
      $region56: #{llama_decoder_layer.7} parent=5 // pred_check
        _
      $region57: #{llama_decoder_layer.7} parent=5 // pred_check_branch
        %408 = sbr.rel (%p405) target = $region59
      $region58: #{llama_decoder_layer.7} parent=5 // pred_region
        %s409 = ssub.s32 %s14, 1
        %s410 = sand.u32 %s123, 1
        %s411 = sand.u32 %s123, 1
        %s412 = smul.addr %s411, 512
        %s413 = scalar_lea.vmem [#allocation4], %s412
        // Predicated region
        $region60: #{llama_decoder_layer.7} parent=58 // pred_check
          %p414 = pneg %p136
        $region61: #{llama_decoder_layer.7} parent=58 // pred_check_branch
          %416 = sbr.rel (%p414) target = $region63
        $region62: #{llama_decoder_layer.7} parent=58 // pred_region
          _
        $region63: #{llama_decoder_layer.7} parent=58 // pred_fallthru
          _
        %s417 = smul.u32 8, %s25
        %p418 = scmp.lt.s32.totalorder %s24, 1
        %s419 = scalar_select %p418, %s24, 1
        %p420 = scmp.lt.s32.totalorder %s417, 15
        %s421 = scalar_select %p420, %s417, 15
        %s422 = smul.addr %s421, 2
        %s423 = smul.addr %s419, 32
        %s424 = sadd.s32 %s422, %s423
        %s425 = smul.addr %s424, 4
        %s426 = scalar_lea.vmem %s0, %s425
        %p427 = pneg %p61
        %p428 = pneg %p58
        %s429 = smul.u32 8, %s25
        %p430 = scmp.lt.s32.totalorder %s24, 1
        %s431 = scalar_select %p430, %s24, 1
        %p432 = scmp.lt.s32.totalorder %s429, 15
        %s433 = scalar_select %p432, %s429, 15
        %s434 = smul.addr %s433, 2
        %s435 = smul.addr %s431, 32
        %s436 = sadd.s32 %s434, %s435
        %s437 = smul.addr %s436, 8
        %s438 = scalar_lea.vmem %s1, %s437
        %p439 = pneg %p89
        %p440 = pneg %p86
        %p441 = pneg %p110
        %p442 = pneg %p107
        %s443 = sand.u32 %s123, 1
        %s444 = sand.u32 %s123, 1
        %s445 = smul.addr %s444, 512
        %s446 = scalar_lea.vmem [#allocation4], %s445
        %p447 = pneg %p136
        %p448 = pneg %p133
        %s449 = smul.u32 32, %s26
        %p450 = scmp.lt.s32.totalorder %s449, 63
        %s451 = scalar_select %p450, %s449, 63
        %s452 = smul.addr %s451, 2
        %s453 = smul.addr %s452, 4
        %s454 = scalar_lea.vmem %s4, %s453
        %p455 = pneg %p162
        %p456 = pneg %p159
        %p457 = pneg %p190
        %p458 = pneg %p187
        %s459 = sand.u32 %s177, 1
        %s460 = scalar_lea.sflag [#allocation6], %s459
        %s461 = sand.u32 %s177, 1
        %s462 = smul.addr %s461, 128
        %s463 = scalar_lea.vmem [#allocation5], %s462
        %s464 = smul.u32 8, %s25
        %p465 = scmp.lt.s32.totalorder %s24, 1
        %s466 = scalar_select %p465, %s24, 1
        %p467 = scmp.lt.s32.totalorder %s464, 15
        %s468 = scalar_select %p467, %s464, 15
        %s469 = smul.addr %s468, 2
        %s470 = smul.addr %s466, 32
        %s471 = sadd.s32 %s469, %s470
        %s472 = smul.addr %s471, 4
        %s473 = scalar_lea.vmem %s0, %s472
        %s474 = smul.u32 8, %s25
        %s475 = smul.u32 8, %s25
        %p476 = scmp.lt.s32.totalorder %s24, 1
        %s477 = scalar_select %p476, %s24, 1
        %p478 = scmp.lt.s32.totalorder %s475, 15
        %s479 = scalar_select %p478, %s475, 15
        %s480 = smul.addr %s479, 2
        %s481 = smul.addr %s477, 32
        %s482 = sadd.s32 %s480, %s481
        %s483 = smul.addr %s482, 8
        %s484 = scalar_lea.vmem %s1, %s483
        %s485 = smul.u32 8, %s25
        %s486 = smul.u32 4, %s26
        %s487 = smul.u32 32, %s26
        %p488 = scmp.lt.s32.totalorder %s487, 63
        %s489 = scalar_select %p488, %s487, 63
        %s490 = smul.addr %s489, 2
        %s491 = smul.addr %s490, 4
        %s492 = scalar_lea.vmem %s4, %s491
        %s493 = smul.u32 32, %s26
        %s494 = smul.u32 8, %s25
        %p495 = scmp.eq.s32.totalorder %s26, 0
        // Predicated region
        $region64: #{llama_decoder_layer.7} parent=58 // pred_check
          %p496 = pneg %p495
        $region65: #{llama_decoder_layer.7} parent=58 // pred_check_branch
          %498 = sbr.rel (%p496) target = $region67
        $region66: #{llama_decoder_layer.7} parent=58 // pred_region
          %v499 = vld [vmem:[%s473] sm:$0xff]
          %v500 = vld [vmem:[%s473 + $0x8] sm:$0xff]
          %v501 = vld [vmem:[%s473 + $0x10] sm:$0xff]
          %v502 = vld [vmem:[%s473 + $0x18] sm:$0xff]
          %v503 = vld [vmem:[%s473 + $0x20] sm:$0xff]
          %v504 = vld [vmem:[%s473 + $0x28] sm:$0xff]
          %v505 = vld [vmem:[%s473 + $0x30] sm:$0xff]
          %v506 = vld [vmem:[%s473 + $0x38] sm:$0xff]
          %v507 = vld [vmem:[%s2] sm:$0xff]
          %v508 = vld [vmem:[%s2 + $0x8] sm:$0xff]
          %v509 = vld [vmem:[%s2 + $0x10] sm:$0xff]
          %v510 = vld [vmem:[%s2 + $0x18] sm:$0xff]
          %v511 = vld [vmem:[%s2 + $0x20] sm:$0xff]
          %v512 = vld [vmem:[%s2 + $0x28] sm:$0xff]
          %v513 = vld [vmem:[%s2 + $0x30] sm:$0xff]
          %v514 = vld [vmem:[%s2 + $0x38] sm:$0xff]
          %v515 = vld [vmem:[%s2 + $0x40] sm:$0xff]
          %v516 = vld [vmem:[%s2 + $0x48] sm:$0xff]
          %v517 = vld [vmem:[%s2 + $0x50] sm:$0xff]
          %v518 = vld [vmem:[%s2 + $0x58] sm:$0xff]
          %v519 = vld [vmem:[%s2 + $0x60] sm:$0xff]
          %v520 = vld [vmem:[%s2 + $0x68] sm:$0xff]
          %v521 = vld [vmem:[%s2 + $0x70] sm:$0xff]
          %v522 = vld [vmem:[%s2 + $0x78] sm:$0xff]
          %v523 = vld [vmem:[%s2 + $0x80] sm:$0xff]
          %v524 = vld [vmem:[%s2 + $0x88] sm:$0xff]
          %v525 = vld [vmem:[%s2 + $0x90] sm:$0xff]
          %v526 = vld [vmem:[%s2 + $0x98] sm:$0xff]
          %v527 = vld [vmem:[%s2 + $0xa0] sm:$0xff]
          %v528 = vld [vmem:[%s2 + $0xa8] sm:$0xff]
          %v529 = vld [vmem:[%s2 + $0xb0] sm:$0xff]
          %v530 = vld [vmem:[%s2 + $0xb8] sm:$0xff]
          %v531 = vld [vmem:[%s2 + $0xc0] sm:$0xff]
          %v532 = vld [vmem:[%s2 + $0xc8] sm:$0xff]
          %v533 = vld [vmem:[%s2 + $0xd0] sm:$0xff]
          %v534 = vld [vmem:[%s2 + $0xd8] sm:$0xff]
          %v535 = vld [vmem:[%s2 + $0xe0] sm:$0xff]
          %v536 = vld [vmem:[%s2 + $0xe8] sm:$0xff]
          %v537 = vld [vmem:[%s2 + $0xf0] sm:$0xff]
          %v538 = vld [vmem:[%s2 + $0xf8] sm:$0xff]
          %v547 = vunpack.c.l.b16 %v499
          %v548 = vunpack.c.h.b16 %v499
          %v549 = vunpack.c.l.b16 %v500
          %v550 = vunpack.c.h.b16 %v500
          %v551 = vunpack.c.l.b16 %v501
          %v552 = vunpack.c.h.b16 %v501
          %v553 = vunpack.c.l.b16 %v502
          %v554 = vunpack.c.h.b16 %v502
          %v555 = vunpack.c.l.b16 %v503
          %v556 = vunpack.c.h.b16 %v503
          %v557 = vunpack.c.l.b16 %v504
          %v558 = vunpack.c.h.b16 %v504
          %v559 = vunpack.c.l.b16 %v505
          %v560 = vunpack.c.h.b16 %v505
          %v561 = vunpack.c.l.b16 %v506
          %v562 = vunpack.c.h.b16 %v506
          %v563 = vpack.c.b16 %v549, %v547
          %v564 = vpack.c.b16 %v550, %v548
          %v565 = vpack.c.b16 %v553, %v551
          %v566 = vpack.c.b16 %v554, %v552
          %v567 = vpack.c.b16 %v557, %v555
          %v568 = vpack.c.b16 %v558, %v556
          %v569 = vpack.c.b16 %v561, %v559
          %v570 = vpack.c.b16 %v562, %v560
          %v611 = vunpack.c.l.b16 %v507
          %v612 = vunpack.c.h.b16 %v507
          %v613 = vunpack.c.l.b16 %v508
          %v614 = vunpack.c.h.b16 %v508
          %v615 = vunpack.c.l.b16 %v509
          %v616 = vunpack.c.h.b16 %v509
          %v617 = vunpack.c.l.b16 %v510
          %v618 = vunpack.c.h.b16 %v510
          %v619 = vunpack.c.l.b16 %v511
          %v620 = vunpack.c.h.b16 %v511
          %v621 = vunpack.c.l.b16 %v512
          %v622 = vunpack.c.h.b16 %v512
          %v623 = vunpack.c.l.b16 %v513
          %v624 = vunpack.c.h.b16 %v513
          %v625 = vunpack.c.l.b16 %v514
          %v626 = vunpack.c.h.b16 %v514
          %v627 = vunpack.c.l.b16 %v515
          %v628 = vunpack.c.h.b16 %v515
          %v629 = vunpack.c.l.b16 %v516
          %v630 = vunpack.c.h.b16 %v516
          %v631 = vunpack.c.l.b16 %v517
          %v632 = vunpack.c.h.b16 %v517
          %v633 = vunpack.c.l.b16 %v518
          %v634 = vunpack.c.h.b16 %v518
          %v635 = vunpack.c.l.b16 %v519
          %v636 = vunpack.c.h.b16 %v519
          %v637 = vunpack.c.l.b16 %v520
          %v638 = vunpack.c.h.b16 %v520
          %v639 = vunpack.c.l.b16 %v521
          %v640 = vunpack.c.h.b16 %v521
          %v641 = vunpack.c.l.b16 %v522
          %v642 = vunpack.c.h.b16 %v522
          %v643 = vunpack.c.l.b16 %v523
          %v644 = vunpack.c.h.b16 %v523
          %v645 = vunpack.c.l.b16 %v524
          %v646 = vunpack.c.h.b16 %v524
          %v647 = vunpack.c.l.b16 %v525
          %v648 = vunpack.c.h.b16 %v525
          %v649 = vunpack.c.l.b16 %v526
          %v650 = vunpack.c.h.b16 %v526
          %v651 = vunpack.c.l.b16 %v527
          %v652 = vunpack.c.h.b16 %v527
          %v653 = vunpack.c.l.b16 %v528
          %v654 = vunpack.c.h.b16 %v528
          %v655 = vunpack.c.l.b16 %v529
          %v656 = vunpack.c.h.b16 %v529
          %v657 = vunpack.c.l.b16 %v530
          %v658 = vunpack.c.h.b16 %v530
          %v659 = vunpack.c.l.b16 %v531
          %v660 = vunpack.c.h.b16 %v531
          %v661 = vunpack.c.l.b16 %v532
          %v662 = vunpack.c.h.b16 %v532
          %v663 = vunpack.c.l.b16 %v533
          %v664 = vunpack.c.h.b16 %v533
          %v665 = vunpack.c.l.b16 %v534
          %v666 = vunpack.c.h.b16 %v534
          %v667 = vunpack.c.l.b16 %v535
          %v668 = vunpack.c.h.b16 %v535
          %v669 = vunpack.c.l.b16 %v536
          %v670 = vunpack.c.h.b16 %v536
          %v671 = vunpack.c.l.b16 %v537
          %v672 = vunpack.c.h.b16 %v537
          %v673 = vunpack.c.l.b16 %v538
          %v674 = vunpack.c.h.b16 %v538
          %v675 = vpack.c.b16 %v613, %v611
          %v676 = vpack.c.b16 %v614, %v612
          %v677 = vpack.c.b16 %v617, %v615
          %v678 = vpack.c.b16 %v618, %v616
          %v679 = vpack.c.b16 %v621, %v619
          %v680 = vpack.c.b16 %v622, %v620
          %v681 = vpack.c.b16 %v625, %v623
          %v682 = vpack.c.b16 %v626, %v624
          %v683 = vpack.c.b16 %v629, %v627
          %v684 = vpack.c.b16 %v630, %v628
          %v685 = vpack.c.b16 %v633, %v631
          %v686 = vpack.c.b16 %v634, %v632
          %v687 = vpack.c.b16 %v637, %v635
          %v688 = vpack.c.b16 %v638, %v636
          %v689 = vpack.c.b16 %v641, %v639
          %v690 = vpack.c.b16 %v642, %v640
          %v691 = vpack.c.b16 %v645, %v643
          %v692 = vpack.c.b16 %v646, %v644
          %v693 = vpack.c.b16 %v649, %v647
          %v694 = vpack.c.b16 %v650, %v648
          %v695 = vpack.c.b16 %v653, %v651
          %v696 = vpack.c.b16 %v654, %v652
          %v697 = vpack.c.b16 %v657, %v655
          %v698 = vpack.c.b16 %v658, %v656
          %v699 = vpack.c.b16 %v661, %v659
          %v700 = vpack.c.b16 %v662, %v660
          %v701 = vpack.c.b16 %v665, %v663
          %v702 = vpack.c.b16 %v666, %v664
          %v703 = vpack.c.b16 %v669, %v667
          %v704 = vpack.c.b16 %v670, %v668
          %v705 = vpack.c.b16 %v673, %v671
          %v706 = vpack.c.b16 %v674, %v672
          %739 = vmatprep.subr.bf16.mxu0 %v676
          %740 = vmatpush1.bf16.msra.mxu0 %v675
          %741 = vmatprep.subr.bf16.mxu0 %v678
          %742 = vmatpush1.bf16.msra.mxu0 %v677
          %743 = vmatprep.subr.bf16.mxu0 %v680
          %744 = vmatpush1.bf16.msra.mxu0 %v679
          %745 = vmatprep.subr.bf16.mxu0 %v682
          %746 = vmatpush1.bf16.msra.mxu0 %v681
          %747 = vmatprep.subr.bf16.mxu0 %v684
          %748 = vmatpush1.bf16.msra.mxu0 %v683
          %749 = vmatprep.subr.bf16.mxu0 %v686
          %750 = vmatpush1.bf16.msra.mxu0 %v685
          %751 = vmatprep.subr.bf16.mxu0 %v688
          %752 = vmatpush1.bf16.msra.mxu0 %v687
          %753 = vmatprep.subr.bf16.mxu0 %v690
          %754 = vmatpush1.bf16.msra.mxu0 %v689
          %755 = vmatprep.subr.bf16.mxu0 %v692
          %756 = vmatpush1.bf16.msra.mxu0 %v691
          %757 = vmatprep.subr.bf16.mxu0 %v694
          %758 = vmatpush1.bf16.msra.mxu0 %v693
          %759 = vmatprep.subr.bf16.mxu0 %v696
          %760 = vmatpush1.bf16.msra.mxu0 %v695
          %761 = vmatprep.subr.bf16.mxu0 %v698
          %762 = vmatpush1.bf16.msra.mxu0 %v697
          %763 = vmatprep.subr.bf16.mxu0 %v700
          %764 = vmatpush1.bf16.msra.mxu0 %v699
          %765 = vmatprep.subr.bf16.mxu0 %v702
          %766 = vmatpush1.bf16.msra.mxu0 %v701
          %767 = vmatprep.subr.bf16.mxu0 %v704
          %768 = vmatpush1.bf16.msra.mxu0 %v703
          %769 = vmatprep.subr.bf16.mxu0 %v706
          %770 = vmatpush1.bf16.msra.mxu0 %v705
          %771 = vmatprep.mubr.bf16.mxu0 %v564
          %772 = vmatmul.mubr.bf16.gmra.mrb[0].mxu0 %v563
          %v773 = vpop.f32.mrb[0].mxu0
          %v774 = vadd.f32 0.0, %v773
          %v775 = vpop.f32.mrb[0].mxu0
          %v776 = vadd.f32 0.0, %v775
          %v777 = vpop.f32.mrb[0].mxu0
          %v778 = vadd.f32 0.0, %v777
          %v779 = vpop.f32.mrb[0].mxu0
          %v780 = vadd.f32 0.0, %v779
          %781 = vmatprep.mubr.bf16.mxu0 %v566
          %782 = vmatmul.mubr.bf16.gmra.mrb[0].mxu0 %v565
          %v783 = vpop.f32.mrb[0].mxu0
          %v784 = vadd.f32 0.0, %v783
          %v785 = vpop.f32.mrb[0].mxu0
          %v786 = vadd.f32 0.0, %v785
          %v787 = vpop.f32.mrb[0].mxu0
          %v788 = vadd.f32 0.0, %v787
          %v789 = vpop.f32.mrb[0].mxu0
          %v790 = vadd.f32 0.0, %v789
          %791 = vmatprep.mubr.bf16.mxu0 %v568
          %792 = vmatmul.mubr.bf16.gmra.mrb[0].mxu0 %v567
          %v793 = vpop.f32.mrb[0].mxu0
          %v794 = vadd.f32 0.0, %v793
          %v795 = vpop.f32.mrb[0].mxu0
          %v796 = vadd.f32 0.0, %v795
          %v797 = vpop.f32.mrb[0].mxu0
          %v798 = vadd.f32 0.0, %v797
          %v799 = vpop.f32.mrb[0].mxu0
          %v800 = vadd.f32 0.0, %v799
          %801 = vmatprep.mubr.bf16.mxu0 %v570
          %802 = vmatmul.mubr.bf16.gmra.mrb[0].mxu0 %v569
          %v803 = vpop.f32.mrb[0].mxu0
          %v804 = vadd.f32 0.0, %v803
          %v805 = vpop.f32.mrb[0].mxu0
          %v806 = vadd.f32 0.0, %v805
          %v807 = vpop.f32.mrb[0].mxu0
          %v808 = vadd.f32 0.0, %v807
          %v809 = vpop.f32.mrb[0].mxu0
          %v810 = vadd.f32 0.0, %v809
          %811 = vdwg.mxu0
          %v812 = vpack.c.bf16 %v778, %v774
          %v813 = vpack.c.bf16 %v780, %v776
          %v814 = vpack.c.bf16 %v788, %v784
          %v815 = vpack.c.bf16 %v790, %v786
          %v816 = vpack.c.bf16 %v798, %v794
          %v817 = vpack.c.bf16 %v800, %v796
          %v818 = vpack.c.bf16 %v808, %v804
          %v819 = vpack.c.bf16 %v810, %v806
          %820 = vst [vmem:[#allocation2] sm:$0xff] %v812
          %821 = vst [vmem:[#allocation2 + $0x8] sm:$0xff] %v813
          %822 = vst [vmem:[#allocation2 + $0x10] sm:$0xff] %v814
          %823 = vst [vmem:[#allocation2 + $0x18] sm:$0xff] %v815
          %824 = vst [vmem:[#allocation2 + $0x20] sm:$0xff] %v816
          %825 = vst [vmem:[#allocation2 + $0x28] sm:$0xff] %v817
          %826 = vst [vmem:[#allocation2 + $0x30] sm:$0xff] %v818
          %827 = vst [vmem:[#allocation2 + $0x38] sm:$0xff] %v819
          %828 = vst [vmem:[#allocation3] sm:$0xff] 0.0
          %829 = vst [vmem:[#allocation3 + $0x8] sm:$0xff] 0.0
          %830 = vst [vmem:[#allocation3 + $0x10] sm:$0xff] 0.0
          %831 = vst [vmem:[#allocation3 + $0x18] sm:$0xff] 0.0
          %832 = vst [vmem:[#allocation3 + $0x20] sm:$0xff] 0.0
          %833 = vst [vmem:[#allocation3 + $0x28] sm:$0xff] 0.0
          %834 = vst [vmem:[#allocation3 + $0x30] sm:$0xff] 0.0
          %835 = vst [vmem:[#allocation3 + $0x38] sm:$0xff] 0.0
          %836 = vst [vmem:[#allocation3 + $0x40] sm:$0xff] 0.0
          %837 = vst [vmem:[#allocation3 + $0x48] sm:$0xff] 0.0
          %838 = vst [vmem:[#allocation3 + $0x50] sm:$0xff] 0.0
          %839 = vst [vmem:[#allocation3 + $0x58] sm:$0xff] 0.0
          %840 = vst [vmem:[#allocation3 + $0x60] sm:$0xff] 0.0
          %841 = vst [vmem:[#allocation3 + $0x68] sm:$0xff] 0.0
          %842 = vst [vmem:[#allocation3 + $0x70] sm:$0xff] 0.0
          %843 = vst [vmem:[#allocation3 + $0x78] sm:$0xff] 0.0
        $region67: #{llama_decoder_layer.7} parent=58 // pred_fallthru
          _
        %v844 = vld [vmem:[#allocation2] sm:$0xff]
        %v845 = vld [vmem:[#allocation2 + $0x8] sm:$0xff]
        %v846 = vld [vmem:[#allocation2 + $0x10] sm:$0xff]
        %v847 = vld [vmem:[#allocation2 + $0x18] sm:$0xff]
        %v848 = vld [vmem:[#allocation2 + $0x20] sm:$0xff]
        %v849 = vld [vmem:[#allocation2 + $0x28] sm:$0xff]
        %v850 = vld [vmem:[#allocation2 + $0x30] sm:$0xff]
        %v851 = vld [vmem:[#allocation2 + $0x38] sm:$0xff]
        %v852 = vld [vmem:[%s413] sm:$0xff]
        %v853 = vld [vmem:[%s413 + $0x8] sm:$0xff]
        %v854 = vld [vmem:[%s413 + $0x10] sm:$0xff]
        %v855 = vld [vmem:[%s413 + $0x18] sm:$0xff]
        %v856 = vld [vmem:[%s413 + $0x20] sm:$0xff]
        %v857 = vld [vmem:[%s413 + $0x28] sm:$0xff]
        %v858 = vld [vmem:[%s413 + $0x30] sm:$0xff]
        %v859 = vld [vmem:[%s413 + $0x38] sm:$0xff]
        %v860 = vld [vmem:[%s413 + $0x40] sm:$0xff]
        %v861 = vld [vmem:[%s413 + $0x48] sm:$0xff]
        %v862 = vld [vmem:[%s413 + $0x50] sm:$0xff]
        %v863 = vld [vmem:[%s413 + $0x58] sm:$0xff]
        %v864 = vld [vmem:[%s413 + $0x60] sm:$0xff]
        %v865 = vld [vmem:[%s413 + $0x68] sm:$0xff]
        %v866 = vld [vmem:[%s413 + $0x70] sm:$0xff]
        %v867 = vld [vmem:[%s413 + $0x78] sm:$0xff]
        %v868 = vld [vmem:[%s413 + $0x80] sm:$0xff]
        %v869 = vld [vmem:[%s413 + $0x88] sm:$0xff]
        %v870 = vld [vmem:[%s413 + $0x90] sm:$0xff]
        %v871 = vld [vmem:[%s413 + $0x98] sm:$0xff]
        %v872 = vld [vmem:[%s413 + $0xa0] sm:$0xff]
        %v873 = vld [vmem:[%s413 + $0xa8] sm:$0xff]
        %v874 = vld [vmem:[%s413 + $0xb0] sm:$0xff]
        %v875 = vld [vmem:[%s413 + $0xb8] sm:$0xff]
        %v876 = vld [vmem:[%s413 + $0xc0] sm:$0xff]
        %v877 = vld [vmem:[%s413 + $0xc8] sm:$0xff]
        %v878 = vld [vmem:[%s413 + $0xd0] sm:$0xff]
        %v879 = vld [vmem:[%s413 + $0xd8] sm:$0xff]
        %v880 = vld [vmem:[%s413 + $0xe0] sm:$0xff]
        %v881 = vld [vmem:[%s413 + $0xe8] sm:$0xff]
        %v882 = vld [vmem:[%s413 + $0xf0] sm:$0xff]
        %v883 = vld [vmem:[%s413 + $0xf8] sm:$0xff]
        %v884 = vld [vmem:[%s413 + $0x100] sm:$0xff]
        %v885 = vld [vmem:[%s413 + $0x108] sm:$0xff]
        %v886 = vld [vmem:[%s413 + $0x110] sm:$0xff]
        %v887 = vld [vmem:[%s413 + $0x118] sm:$0xff]
        %v888 = vld [vmem:[%s413 + $0x120] sm:$0xff]
        %v889 = vld [vmem:[%s413 + $0x128] sm:$0xff]
        %v890 = vld [vmem:[%s413 + $0x130] sm:$0xff]
        %v891 = vld [vmem:[%s413 + $0x138] sm:$0xff]
        %v892 = vld [vmem:[%s413 + $0x140] sm:$0xff]
        %v893 = vld [vmem:[%s413 + $0x148] sm:$0xff]
        %v894 = vld [vmem:[%s413 + $0x150] sm:$0xff]
        %v895 = vld [vmem:[%s413 + $0x158] sm:$0xff]
        %v896 = vld [vmem:[%s413 + $0x160] sm:$0xff]
        %v897 = vld [vmem:[%s413 + $0x168] sm:$0xff]
        %v898 = vld [vmem:[%s413 + $0x170] sm:$0xff]
        %v899 = vld [vmem:[%s413 + $0x178] sm:$0xff]
        %v900 = vld [vmem:[%s413 + $0x180] sm:$0xff]
        %v901 = vld [vmem:[%s413 + $0x188] sm:$0xff]
        %v902 = vld [vmem:[%s413 + $0x190] sm:$0xff]
        %v903 = vld [vmem:[%s413 + $0x198] sm:$0xff]
        %v904 = vld [vmem:[%s413 + $0x1a0] sm:$0xff]
        %v905 = vld [vmem:[%s413 + $0x1a8] sm:$0xff]
        %v906 = vld [vmem:[%s413 + $0x1b0] sm:$0xff]
        %v907 = vld [vmem:[%s413 + $0x1b8] sm:$0xff]
        %v908 = vld [vmem:[%s413 + $0x1c0] sm:$0xff]
        %v909 = vld [vmem:[%s413 + $0x1c8] sm:$0xff]
        %v910 = vld [vmem:[%s413 + $0x1d0] sm:$0xff]
        %v911 = vld [vmem:[%s413 + $0x1d8] sm:$0xff]
        %v912 = vld [vmem:[%s413 + $0x1e0] sm:$0xff]
        %v913 = vld [vmem:[%s413 + $0x1e8] sm:$0xff]
        %v914 = vld [vmem:[%s413 + $0x1f0] sm:$0xff]
        %v915 = vld [vmem:[%s413 + $0x1f8] sm:$0xff]
        %v980 = vunpack.c.l.b16 %v852
        %v981 = vunpack.c.h.b16 %v852
        %v982 = vunpack.c.l.b16 %v853
        %v983 = vunpack.c.h.b16 %v853
        %v984 = vunpack.c.l.b16 %v854
        %v985 = vunpack.c.h.b16 %v854
        %v986 = vunpack.c.l.b16 %v855
        %v987 = vunpack.c.h.b16 %v855
        %v988 = vunpack.c.l.b16 %v856
        %v989 = vunpack.c.h.b16 %v856
        %v990 = vunpack.c.l.b16 %v857
        %v991 = vunpack.c.h.b16 %v857
        %v992 = vunpack.c.l.b16 %v858
        %v993 = vunpack.c.h.b16 %v858
        %v994 = vunpack.c.l.b16 %v859
        %v995 = vunpack.c.h.b16 %v859
        %v996 = vunpack.c.l.b16 %v860
        %v997 = vunpack.c.h.b16 %v860
        %v998 = vunpack.c.l.b16 %v861
        %v999 = vunpack.c.h.b16 %v861
        %v1000 = vunpack.c.l.b16 %v862
        %v1001 = vunpack.c.h.b16 %v862
        %v1002 = vunpack.c.l.b16 %v863
        %v1003 = vunpack.c.h.b16 %v863
        %v1004 = vunpack.c.l.b16 %v864
        %v1005 = vunpack.c.h.b16 %v864
        %v1006 = vunpack.c.l.b16 %v865
        %v1007 = vunpack.c.h.b16 %v865
        %v1008 = vunpack.c.l.b16 %v866
        %v1009 = vunpack.c.h.b16 %v866
        %v1010 = vunpack.c.l.b16 %v867
        %v1011 = vunpack.c.h.b16 %v867
        %v1012 = vunpack.c.l.b16 %v868
        %v1013 = vunpack.c.h.b16 %v868
        %v1014 = vunpack.c.l.b16 %v869
        %v1015 = vunpack.c.h.b16 %v869
        %v1016 = vunpack.c.l.b16 %v870
        %v1017 = vunpack.c.h.b16 %v870
        %v1018 = vunpack.c.l.b16 %v871
        %v1019 = vunpack.c.h.b16 %v871
        %v1020 = vunpack.c.l.b16 %v872
        %v1021 = vunpack.c.h.b16 %v872
        %v1022 = vunpack.c.l.b16 %v873
        %v1023 = vunpack.c.h.b16 %v873
        %v1024 = vunpack.c.l.b16 %v874
        %v1025 = vunpack.c.h.b16 %v874
        %v1026 = vunpack.c.l.b16 %v875
        %v1027 = vunpack.c.h.b16 %v875
        %v1028 = vunpack.c.l.b16 %v876
        %v1029 = vunpack.c.h.b16 %v876
        %v1030 = vunpack.c.l.b16 %v877
        %v1031 = vunpack.c.h.b16 %v877
        %v1032 = vunpack.c.l.b16 %v878
        %v1033 = vunpack.c.h.b16 %v878
        %v1034 = vunpack.c.l.b16 %v879
        %v1035 = vunpack.c.h.b16 %v879
        %v1036 = vunpack.c.l.b16 %v880
        %v1037 = vunpack.c.h.b16 %v880
        %v1038 = vunpack.c.l.b16 %v881
        %v1039 = vunpack.c.h.b16 %v881
        %v1040 = vunpack.c.l.b16 %v882
        %v1041 = vunpack.c.h.b16 %v882
        %v1042 = vunpack.c.l.b16 %v883
        %v1043 = vunpack.c.h.b16 %v883
        %v1044 = vunpack.c.l.b16 %v884
        %v1045 = vunpack.c.h.b16 %v884
        %v1046 = vunpack.c.l.b16 %v885
        %v1047 = vunpack.c.h.b16 %v885
        %v1048 = vunpack.c.l.b16 %v886
        %v1049 = vunpack.c.h.b16 %v886
        %v1050 = vunpack.c.l.b16 %v887
        %v1051 = vunpack.c.h.b16 %v887
        %v1052 = vunpack.c.l.b16 %v888
        %v1053 = vunpack.c.h.b16 %v888
        %v1054 = vunpack.c.l.b16 %v889
        %v1055 = vunpack.c.h.b16 %v889
        %v1056 = vunpack.c.l.b16 %v890
        %v1057 = vunpack.c.h.b16 %v890
        %v1058 = vunpack.c.l.b16 %v891
        %v1059 = vunpack.c.h.b16 %v891
        %v1060 = vunpack.c.l.b16 %v892
        %v1061 = vunpack.c.h.b16 %v892
        %v1062 = vunpack.c.l.b16 %v893
        %v1063 = vunpack.c.h.b16 %v893
        %v1064 = vunpack.c.l.b16 %v894
        %v1065 = vunpack.c.h.b16 %v894
        %v1066 = vunpack.c.l.b16 %v895
        %v1067 = vunpack.c.h.b16 %v895
        %v1068 = vunpack.c.l.b16 %v896
        %v1069 = vunpack.c.h.b16 %v896
        %v1070 = vunpack.c.l.b16 %v897
        %v1071 = vunpack.c.h.b16 %v897
        %v1072 = vunpack.c.l.b16 %v898
        %v1073 = vunpack.c.h.b16 %v898
        %v1074 = vunpack.c.l.b16 %v899
        %v1075 = vunpack.c.h.b16 %v899
        %v1076 = vunpack.c.l.b16 %v900
        %v1077 = vunpack.c.h.b16 %v900
        %v1078 = vunpack.c.l.b16 %v901
        %v1079 = vunpack.c.h.b16 %v901
        %v1080 = vunpack.c.l.b16 %v902
        %v1081 = vunpack.c.h.b16 %v902
        %v1082 = vunpack.c.l.b16 %v903
        %v1083 = vunpack.c.h.b16 %v903
        %v1084 = vunpack.c.l.b16 %v904
        %v1085 = vunpack.c.h.b16 %v904
        %v1086 = vunpack.c.l.b16 %v905
        %v1087 = vunpack.c.h.b16 %v905
        %v1088 = vunpack.c.l.b16 %v906
        %v1089 = vunpack.c.h.b16 %v906
        %v1090 = vunpack.c.l.b16 %v907
        %v1091 = vunpack.c.h.b16 %v907
        %v1092 = vunpack.c.l.b16 %v908
        %v1093 = vunpack.c.h.b16 %v908
        %v1094 = vunpack.c.l.b16 %v909
        %v1095 = vunpack.c.h.b16 %v909
        %v1096 = vunpack.c.l.b16 %v910
        %v1097 = vunpack.c.h.b16 %v910
        %v1098 = vunpack.c.l.b16 %v911
        %v1099 = vunpack.c.h.b16 %v911
        %v1100 = vunpack.c.l.b16 %v912
        %v1101 = vunpack.c.h.b16 %v912
        %v1102 = vunpack.c.l.b16 %v913
        %v1103 = vunpack.c.h.b16 %v913
        %v1104 = vunpack.c.l.b16 %v914
        %v1105 = vunpack.c.h.b16 %v914
        %v1106 = vunpack.c.l.b16 %v915
        %v1107 = vunpack.c.h.b16 %v915
        %v1108 = vpack.c.b16 %v984, %v980
        %v1109 = vpack.c.b16 %v985, %v981
        %v1110 = vpack.c.b16 %v986, %v982
        %v1111 = vpack.c.b16 %v987, %v983
        %v1112 = vpack.c.b16 %v992, %v988
        %v1113 = vpack.c.b16 %v993, %v989
        %v1114 = vpack.c.b16 %v994, %v990
        %v1115 = vpack.c.b16 %v995, %v991
        %v1116 = vpack.c.b16 %v1000, %v996
        %v1117 = vpack.c.b16 %v1001, %v997
        %v1118 = vpack.c.b16 %v1002, %v998
        %v1119 = vpack.c.b16 %v1003, %v999
        %v1120 = vpack.c.b16 %v1008, %v1004
        %v1121 = vpack.c.b16 %v1009, %v1005
        %v1122 = vpack.c.b16 %v1010, %v1006
        %v1123 = vpack.c.b16 %v1011, %v1007
        %v1124 = vpack.c.b16 %v1016, %v1012
        %v1125 = vpack.c.b16 %v1017, %v1013
        %v1126 = vpack.c.b16 %v1018, %v1014
        %v1127 = vpack.c.b16 %v1019, %v1015
        %v1128 = vpack.c.b16 %v1024, %v1020
        %v1129 = vpack.c.b16 %v1025, %v1021
        %v1130 = vpack.c.b16 %v1026, %v1022
        %v1131 = vpack.c.b16 %v1027, %v1023
        %v1132 = vpack.c.b16 %v1032, %v1028
        %v1133 = vpack.c.b16 %v1033, %v1029
        %v1134 = vpack.c.b16 %v1034, %v1030
        %v1135 = vpack.c.b16 %v1035, %v1031
        %v1136 = vpack.c.b16 %v1040, %v1036
        %v1137 = vpack.c.b16 %v1041, %v1037
        %v1138 = vpack.c.b16 %v1042, %v1038
        %v1139 = vpack.c.b16 %v1043, %v1039
        %v1140 = vpack.c.b16 %v1048, %v1044
        %v1141 = vpack.c.b16 %v1049, %v1045
        %v1142 = vpack.c.b16 %v1050, %v1046
        %v1143 = vpack.c.b16 %v1051, %v1047
        %v1144 = vpack.c.b16 %v1056, %v1052
        %v1145 = vpack.c.b16 %v1057, %v1053
        %v1146 = vpack.c.b16 %v1058, %v1054
        %v1147 = vpack.c.b16 %v1059, %v1055
        %v1148 = vpack.c.b16 %v1064, %v1060
        %v1149 = vpack.c.b16 %v1065, %v1061
        %v1150 = vpack.c.b16 %v1066, %v1062
        %v1151 = vpack.c.b16 %v1067, %v1063
        %v1152 = vpack.c.b16 %v1072, %v1068
        %v1153 = vpack.c.b16 %v1073, %v1069
        %v1154 = vpack.c.b16 %v1074, %v1070
        %v1155 = vpack.c.b16 %v1075, %v1071
        %v1156 = vpack.c.b16 %v1080, %v1076
        %v1157 = vpack.c.b16 %v1081, %v1077
        %v1158 = vpack.c.b16 %v1082, %v1078
        %v1159 = vpack.c.b16 %v1083, %v1079
        %v1160 = vpack.c.b16 %v1088, %v1084
        %v1161 = vpack.c.b16 %v1089, %v1085
        %v1162 = vpack.c.b16 %v1090, %v1086
        %v1163 = vpack.c.b16 %v1091, %v1087
        %v1164 = vpack.c.b16 %v1096, %v1092
        %v1165 = vpack.c.b16 %v1097, %v1093
        %v1166 = vpack.c.b16 %v1098, %v1094
        %v1167 = vpack.c.b16 %v1099, %v1095
        %v1168 = vpack.c.b16 %v1104, %v1100
        %v1169 = vpack.c.b16 %v1105, %v1101
        %v1170 = vpack.c.b16 %v1106, %v1102
        %v1171 = vpack.c.b16 %v1107, %v1103
        %1236 = vmatprep.subr.bf16.mxu0 %v1109
        %1237 = vmatpush1.bf16.msra.mxu0 %v1108
        %1238 = vmatprep.subr.bf16.mxu0 %v1113
        %1239 = vmatpush1.bf16.msra.mxu0 %v1112
        %1240 = vmatprep.subr.bf16.mxu0 %v1117
        %1241 = vmatpush1.bf16.msra.mxu0 %v1116
        %1242 = vmatprep.subr.bf16.mxu0 %v1121
        %1243 = vmatpush1.bf16.msra.mxu0 %v1120
        %1244 = vmatprep.subr.bf16.mxu0 %v1125
        %1245 = vmatpush1.bf16.msra.mxu0 %v1124
        %1246 = vmatprep.subr.bf16.mxu0 %v1129
        %1247 = vmatpush1.bf16.msra.mxu0 %v1128
        %1248 = vmatprep.subr.bf16.mxu0 %v1133
        %1249 = vmatpush1.bf16.msra.mxu0 %v1132
        %1250 = vmatprep.subr.bf16.mxu0 %v1137
        %1251 = vmatpush1.bf16.msra.mxu0 %v1136
        %1252 = vmatprep.subr.bf16.mxu0 %v1141
        %1253 = vmatpush1.bf16.msra.mxu0 %v1140
        %1254 = vmatprep.subr.bf16.mxu0 %v1145
        %1255 = vmatpush1.bf16.msra.mxu0 %v1144
        %1256 = vmatprep.subr.bf16.mxu0 %v1149
        %1257 = vmatpush1.bf16.msra.mxu0 %v1148
        %1258 = vmatprep.subr.bf16.mxu0 %v1153
        %1259 = vmatpush1.bf16.msra.mxu0 %v1152
        %1260 = vmatprep.subr.bf16.mxu0 %v1157
        %1261 = vmatpush1.bf16.msra.mxu0 %v1156
        %1262 = vmatprep.subr.bf16.mxu0 %v1161
        %1263 = vmatpush1.bf16.msra.mxu0 %v1160
        %1264 = vmatprep.subr.bf16.mxu0 %v1165
        %1265 = vmatpush1.bf16.msra.mxu0 %v1164
        %1266 = vmatprep.subr.bf16.mxu0 %v1169
        %1267 = vmatpush1.bf16.msra.mxu0 %v1168
        %1268 = vmatprep.mubr.bf16.mxu0 %v845
        %1269 = vmatmul.mubr.bf16.gmra.mrb[0].mxu0 %v844
        %v1270 = vpop.f32.mrb[0].mxu0
        %v1271 = vadd.f32 0.0, %v1270
        %v1272 = vpop.f32.mrb[0].mxu0
        %v1273 = vadd.f32 0.0, %v1272
        %v1274 = vpop.f32.mrb[0].mxu0
        %v1275 = vadd.f32 0.0, %v1274
        %v1276 = vpop.f32.mrb[0].mxu0
        %v1277 = vadd.f32 0.0, %v1276
        %1278 = vmatprep.mubr.bf16.mxu0 %v847
        %1279 = vmatmul.mubr.bf16.gmra.mrb[0].mxu0 %v846
        %v1280 = vpop.f32.mrb[0].mxu0
        %v1281 = vadd.f32 0.0, %v1280
        %v1282 = vpop.f32.mrb[0].mxu0
        %v1283 = vadd.f32 0.0, %v1282
        %v1284 = vpop.f32.mrb[0].mxu0
        %v1285 = vadd.f32 0.0, %v1284
        %v1286 = vpop.f32.mrb[0].mxu0
        %v1287 = vadd.f32 0.0, %v1286
        %1288 = vmatprep.mubr.bf16.mxu0 %v849
        %1289 = vmatmul.mubr.bf16.gmra.mrb[0].mxu0 %v848
        %v1290 = vpop.f32.mrb[0].mxu0
        %v1291 = vadd.f32 0.0, %v1290
        %v1292 = vpop.f32.mrb[0].mxu0
        %v1293 = vadd.f32 0.0, %v1292
        %v1294 = vpop.f32.mrb[0].mxu0
        %v1295 = vadd.f32 0.0, %v1294
        %v1296 = vpop.f32.mrb[0].mxu0
        %v1297 = vadd.f32 0.0, %v1296
        %1298 = vmatprep.mubr.bf16.mxu0 %v851
        %1299 = vmatmul.mubr.bf16.gmra.mrb[0].mxu0 %v850
        %v1300 = vpop.f32.mrb[0].mxu0
        %v1301 = vadd.f32 0.0, %v1300
        %v1302 = vpop.f32.mrb[0].mxu0
        %v1303 = vadd.f32 0.0, %v1302
        %v1304 = vpop.f32.mrb[0].mxu0
        %v1305 = vadd.f32 0.0, %v1304
        %v1306 = vpop.f32.mrb[0].mxu0
        %v1307 = vadd.f32 0.0, %v1306
        %1308 = vdwg.mxu0
        %1309 = vmatprep.subr.bf16.mxu0 %v1111
        %1310 = vmatpush1.bf16.msra.mxu0 %v1110
        %1311 = vmatprep.subr.bf16.mxu0 %v1115
        %1312 = vmatpush1.bf16.msra.mxu0 %v1114
        %1313 = vmatprep.subr.bf16.mxu0 %v1119
        %1314 = vmatpush1.bf16.msra.mxu0 %v1118
        %1315 = vmatprep.subr.bf16.mxu0 %v1123
        %1316 = vmatpush1.bf16.msra.mxu0 %v1122
        %1317 = vmatprep.subr.bf16.mxu0 %v1127
        %1318 = vmatpush1.bf16.msra.mxu0 %v1126
        %1319 = vmatprep.subr.bf16.mxu0 %v1131
        %1320 = vmatpush1.bf16.msra.mxu0 %v1130
        %1321 = vmatprep.subr.bf16.mxu0 %v1135
        %1322 = vmatpush1.bf16.msra.mxu0 %v1134
        %1323 = vmatprep.subr.bf16.mxu0 %v1139
        %1324 = vmatpush1.bf16.msra.mxu0 %v1138
        %1325 = vmatprep.subr.bf16.mxu0 %v1143
        %1326 = vmatpush1.bf16.msra.mxu0 %v1142
        %1327 = vmatprep.subr.bf16.mxu0 %v1147
        %1328 = vmatpush1.bf16.msra.mxu0 %v1146
        %1329 = vmatprep.subr.bf16.mxu0 %v1151
        %1330 = vmatpush1.bf16.msra.mxu0 %v1150
        %1331 = vmatprep.subr.bf16.mxu0 %v1155
        %1332 = vmatpush1.bf16.msra.mxu0 %v1154
        %1333 = vmatprep.subr.bf16.mxu0 %v1159
        %1334 = vmatpush1.bf16.msra.mxu0 %v1158
        %1335 = vmatprep.subr.bf16.mxu0 %v1163
        %1336 = vmatpush1.bf16.msra.mxu0 %v1162
        %1337 = vmatprep.subr.bf16.mxu0 %v1167
        %1338 = vmatpush1.bf16.msra.mxu0 %v1166
        %1339 = vmatprep.subr.bf16.mxu0 %v1171
        %1340 = vmatpush1.bf16.msra.mxu0 %v1170
        %1341 = vmatprep.mubr.bf16.mxu0 %v845
        %1342 = vmatmul.mubr.bf16.gmra.mrb[0].mxu0 %v844
        %v1343 = vpop.f32.mrb[0].mxu0
        %v1344 = vadd.f32 0.0, %v1343
        %v1345 = vpop.f32.mrb[0].mxu0
        %v1346 = vadd.f32 0.0, %v1345
        %v1347 = vpop.f32.mrb[0].mxu0
        %v1348 = vadd.f32 0.0, %v1347
        %v1349 = vpop.f32.mrb[0].mxu0
        %v1350 = vadd.f32 0.0, %v1349
        %1351 = vmatprep.mubr.bf16.mxu0 %v847
        %1352 = vmatmul.mubr.bf16.gmra.mrb[0].mxu0 %v846
        %v1353 = vpop.f32.mrb[0].mxu0
        %v1354 = vadd.f32 0.0, %v1353
        %v1355 = vpop.f32.mrb[0].mxu0
        %v1356 = vadd.f32 0.0, %v1355
        %v1357 = vpop.f32.mrb[0].mxu0
        %v1358 = vadd.f32 0.0, %v1357
        %v1359 = vpop.f32.mrb[0].mxu0
        %v1360 = vadd.f32 0.0, %v1359
        %1361 = vmatprep.mubr.bf16.mxu0 %v849
        %1362 = vmatmul.mubr.bf16.gmra.mrb[0].mxu0 %v848
        %v1363 = vpop.f32.mrb[0].mxu0
        %v1364 = vadd.f32 0.0, %v1363
        %v1365 = vpop.f32.mrb[0].mxu0
        %v1366 = vadd.f32 0.0, %v1365
        %v1367 = vpop.f32.mrb[0].mxu0
        %v1368 = vadd.f32 0.0, %v1367
        %v1369 = vpop.f32.mrb[0].mxu0
        %v1370 = vadd.f32 0.0, %v1369
        %1371 = vmatprep.mubr.bf16.mxu0 %v851
        %1372 = vmatmul.mubr.bf16.gmra.mrb[0].mxu0 %v850
        %v1373 = vpop.f32.mrb[0].mxu0
        %v1374 = vadd.f32 0.0, %v1373
        %v1375 = vpop.f32.mrb[0].mxu0
        %v1376 = vadd.f32 0.0, %v1375
        %v1377 = vpop.f32.mrb[0].mxu0
        %v1378 = vadd.f32 0.0, %v1377
        %v1379 = vpop.f32.mrb[0].mxu0
        %v1380 = vadd.f32 0.0, %v1379
        %1381 = vdwg.mxu0
        %v1382 = vsub.f32 0.0, %v1271
        %v1383 = vsub.f32 0.0, %v1273
        %v1384 = vsub.f32 0.0, %v1275
        %v1385 = vsub.f32 0.0, %v1277
        %v1386 = vsub.f32 0.0, %v1281
        %v1387 = vsub.f32 0.0, %v1283
        %v1388 = vsub.f32 0.0, %v1285
        %v1389 = vsub.f32 0.0, %v1287
        %v1390 = vsub.f32 0.0, %v1291
        %v1391 = vsub.f32 0.0, %v1293
        %v1392 = vsub.f32 0.0, %v1295
        %v1393 = vsub.f32 0.0, %v1297
        %v1394 = vsub.f32 0.0, %v1301
        %v1395 = vsub.f32 0.0, %v1303
        %v1396 = vsub.f32 0.0, %v1305
        %v1397 = vsub.f32 0.0, %v1307
        %v1398 = vmul.f32 %v1382, 1.442695
        %v1399 = vpow.pop %v1398
        %v1400 = vmul.f32 %v1383, 1.442695
        %v1401 = vpow.pop %v1400
        %v1402 = vmul.f32 %v1384, 1.442695
        %v1403 = vpow.pop %v1402
        %v1404 = vmul.f32 %v1385, 1.442695
        %v1405 = vpow.pop %v1404
        %v1406 = vmul.f32 %v1386, 1.442695
        %v1407 = vpow.pop %v1406
        %v1408 = vmul.f32 %v1387, 1.442695
        %v1409 = vpow.pop %v1408
        %v1410 = vmul.f32 %v1388, 1.442695
        %v1411 = vpow.pop %v1410
        %v1412 = vmul.f32 %v1389, 1.442695
        %v1413 = vpow.pop %v1412
        %v1414 = vmul.f32 %v1390, 1.442695
        %v1415 = vpow.pop %v1414
        %v1416 = vmul.f32 %v1391, 1.442695
        %v1417 = vpow.pop %v1416
        %v1418 = vmul.f32 %v1392, 1.442695
        %v1419 = vpow.pop %v1418
        %v1420 = vmul.f32 %v1393, 1.442695
        %v1421 = vpow.pop %v1420
        %v1422 = vmul.f32 %v1394, 1.442695
        %v1423 = vpow.pop %v1422
        %v1424 = vmul.f32 %v1395, 1.442695
        %v1425 = vpow.pop %v1424
        %v1426 = vmul.f32 %v1396, 1.442695
        %v1427 = vpow.pop %v1426
        %v1428 = vmul.f32 %v1397, 1.442695
        %v1429 = vpow.pop %v1428
        %v1430 = vadd.f32 %v1399, 1.0
        %v1431 = vadd.f32 %v1401, 1.0
        %v1432 = vadd.f32 %v1403, 1.0
        %v1433 = vadd.f32 %v1405, 1.0
        %v1434 = vadd.f32 %v1407, 1.0
        %v1435 = vadd.f32 %v1409, 1.0
        %v1436 = vadd.f32 %v1411, 1.0
        %v1437 = vadd.f32 %v1413, 1.0
        %v1438 = vadd.f32 %v1415, 1.0
        %v1439 = vadd.f32 %v1417, 1.0
        %v1440 = vadd.f32 %v1419, 1.0
        %v1441 = vadd.f32 %v1421, 1.0
        %v1442 = vadd.f32 %v1423, 1.0
        %v1443 = vadd.f32 %v1425, 1.0
        %v1444 = vadd.f32 %v1427, 1.0
        %v1445 = vadd.f32 %v1429, 1.0
        %v1446 = vrcp.pop %v1430
        %v1447 = vmul.f32 1.0, %v1446
        %v1448 = vrcp.pop %v1431
        %v1449 = vmul.f32 1.0, %v1448
        %v1450 = vrcp.pop %v1432
        %v1451 = vmul.f32 1.0, %v1450
        %v1452 = vrcp.pop %v1433
        %v1453 = vmul.f32 1.0, %v1452
        %v1454 = vrcp.pop %v1434
        %v1455 = vmul.f32 1.0, %v1454
        %v1456 = vrcp.pop %v1435
        %v1457 = vmul.f32 1.0, %v1456
        %v1458 = vrcp.pop %v1436
        %v1459 = vmul.f32 1.0, %v1458
        %v1460 = vrcp.pop %v1437
        %v1461 = vmul.f32 1.0, %v1460
        %v1462 = vrcp.pop %v1438
        %v1463 = vmul.f32 1.0, %v1462
        %v1464 = vrcp.pop %v1439
        %v1465 = vmul.f32 1.0, %v1464
        %v1466 = vrcp.pop %v1440
        %v1467 = vmul.f32 1.0, %v1466
        %v1468 = vrcp.pop %v1441
        %v1469 = vmul.f32 1.0, %v1468
        %v1470 = vrcp.pop %v1442
        %v1471 = vmul.f32 1.0, %v1470
        %v1472 = vrcp.pop %v1443
        %v1473 = vmul.f32 1.0, %v1472
        %v1474 = vrcp.pop %v1444
        %v1475 = vmul.f32 1.0, %v1474
        %v1476 = vrcp.pop %v1445
        %v1477 = vmul.f32 1.0, %v1476
        %v1478 = vmul.f32 %v1271, %v1447
        %v1479 = vmul.f32 %v1273, %v1449
        %v1480 = vmul.f32 %v1275, %v1451
        %v1481 = vmul.f32 %v1277, %v1453
        %v1482 = vmul.f32 %v1281, %v1455
        %v1483 = vmul.f32 %v1283, %v1457
        %v1484 = vmul.f32 %v1285, %v1459
        %v1485 = vmul.f32 %v1287, %v1461
        %v1486 = vmul.f32 %v1291, %v1463
        %v1487 = vmul.f32 %v1293, %v1465
        %v1488 = vmul.f32 %v1295, %v1467
        %v1489 = vmul.f32 %v1297, %v1469
        %v1490 = vmul.f32 %v1301, %v1471
        %v1491 = vmul.f32 %v1303, %v1473
        %v1492 = vmul.f32 %v1305, %v1475
        %v1493 = vmul.f32 %v1307, %v1477
        %v1494 = vmul.f32 %v1478, %v1344
        %v1495 = vmul.f32 %v1479, %v1346
        %v1496 = vmul.f32 %v1480, %v1348
        %v1497 = vmul.f32 %v1481, %v1350
        %v1498 = vmul.f32 %v1482, %v1354
        %v1499 = vmul.f32 %v1483, %v1356
        %v1500 = vmul.f32 %v1484, %v1358
        %v1501 = vmul.f32 %v1485, %v1360
        %v1502 = vmul.f32 %v1486, %v1364
        %v1503 = vmul.f32 %v1487, %v1366
        %v1504 = vmul.f32 %v1488, %v1368
        %v1505 = vmul.f32 %v1489, %v1370
        %v1506 = vmul.f32 %v1490, %v1374
        %v1507 = vmul.f32 %v1491, %v1376
        %v1508 = vmul.f32 %v1492, %v1378
        %v1509 = vmul.f32 %v1493, %v1380
        %v1510 = vld [vmem:[#allocation3] sm:$0xff]
        %v1511 = vld [vmem:[#allocation3 + $0x8] sm:$0xff]
        %v1512 = vld [vmem:[#allocation3 + $0x10] sm:$0xff]
        %v1513 = vld [vmem:[#allocation3 + $0x18] sm:$0xff]
        %v1514 = vld [vmem:[#allocation3 + $0x20] sm:$0xff]
        %v1515 = vld [vmem:[#allocation3 + $0x28] sm:$0xff]
        %v1516 = vld [vmem:[#allocation3 + $0x30] sm:$0xff]
        %v1517 = vld [vmem:[#allocation3 + $0x38] sm:$0xff]
        %v1518 = vld [vmem:[#allocation3 + $0x40] sm:$0xff]
        %v1519 = vld [vmem:[#allocation3 + $0x48] sm:$0xff]
        %v1520 = vld [vmem:[#allocation3 + $0x50] sm:$0xff]
        %v1521 = vld [vmem:[#allocation3 + $0x58] sm:$0xff]
        %v1522 = vld [vmem:[#allocation3 + $0x60] sm:$0xff]
        %v1523 = vld [vmem:[#allocation3 + $0x68] sm:$0xff]
        %v1524 = vld [vmem:[#allocation3 + $0x70] sm:$0xff]
        %v1525 = vld [vmem:[#allocation3 + $0x78] sm:$0xff]
        %v1526 = vpack.c.bf16 %v1496, %v1494
        %v1527 = vpack.c.bf16 %v1497, %v1495
        %v1528 = vpack.c.bf16 %v1500, %v1498
        %v1529 = vpack.c.bf16 %v1501, %v1499
        %v1530 = vpack.c.bf16 %v1504, %v1502
        %v1531 = vpack.c.bf16 %v1505, %v1503
        %v1532 = vpack.c.bf16 %v1508, %v1506
        %v1533 = vpack.c.bf16 %v1509, %v1507
        %v1534 = vld [vmem:[%s492] sm:$0xff]
        %v1535 = vld [vmem:[%s492 + $0x8] sm:$0xff]
        %v1536 = vld [vmem:[%s492 + $0x10] sm:$0xff]
        %v1537 = vld [vmem:[%s492 + $0x18] sm:$0xff]
        %v1538 = vld [vmem:[%s492 + $0x20] sm:$0xff]
        %v1539 = vld [vmem:[%s492 + $0x28] sm:$0xff]
        %v1540 = vld [vmem:[%s492 + $0x30] sm:$0xff]
        %v1541 = vld [vmem:[%s492 + $0x38] sm:$0xff]
        %v1542 = vld [vmem:[%s492 + $0x40] sm:$0xff]
        %v1543 = vld [vmem:[%s492 + $0x48] sm:$0xff]
        %v1544 = vld [vmem:[%s492 + $0x50] sm:$0xff]
        %v1545 = vld [vmem:[%s492 + $0x58] sm:$0xff]
        %v1546 = vld [vmem:[%s492 + $0x60] sm:$0xff]
        %v1547 = vld [vmem:[%s492 + $0x68] sm:$0xff]
        %v1548 = vld [vmem:[%s492 + $0x70] sm:$0xff]
        %v1549 = vld [vmem:[%s492 + $0x78] sm:$0xff]
        %v1550 = vld [vmem:[%s492 + $0x80] sm:$0xff]
        %v1551 = vld [vmem:[%s492 + $0x88] sm:$0xff]
        %v1552 = vld [vmem:[%s492 + $0x90] sm:$0xff]
        %v1553 = vld [vmem:[%s492 + $0x98] sm:$0xff]
        %v1554 = vld [vmem:[%s492 + $0xa0] sm:$0xff]
        %v1555 = vld [vmem:[%s492 + $0xa8] sm:$0xff]
        %v1556 = vld [vmem:[%s492 + $0xb0] sm:$0xff]
        %v1557 = vld [vmem:[%s492 + $0xb8] sm:$0xff]
        %v1558 = vld [vmem:[%s492 + $0xc0] sm:$0xff]
        %v1559 = vld [vmem:[%s492 + $0xc8] sm:$0xff]
        %v1560 = vld [vmem:[%s492 + $0xd0] sm:$0xff]
        %v1561 = vld [vmem:[%s492 + $0xd8] sm:$0xff]
        %v1562 = vld [vmem:[%s492 + $0xe0] sm:$0xff]
        %v1563 = vld [vmem:[%s492 + $0xe8] sm:$0xff]
        %v1564 = vld [vmem:[%s492 + $0xf0] sm:$0xff]
        %v1565 = vld [vmem:[%s492 + $0xf8] sm:$0xff]
        %v1598 = vunpack.c.l.b16 %v1534
        %v1599 = vunpack.c.h.b16 %v1534
        %v1600 = vunpack.c.l.b16 %v1535
        %v1601 = vunpack.c.h.b16 %v1535
        %v1602 = vunpack.c.l.b16 %v1536
        %v1603 = vunpack.c.h.b16 %v1536
        %v1604 = vunpack.c.l.b16 %v1537
        %v1605 = vunpack.c.h.b16 %v1537
        %v1606 = vunpack.c.l.b16 %v1538
        %v1607 = vunpack.c.h.b16 %v1538
        %v1608 = vunpack.c.l.b16 %v1539
        %v1609 = vunpack.c.h.b16 %v1539
        %v1610 = vunpack.c.l.b16 %v1540
        %v1611 = vunpack.c.h.b16 %v1540
        %v1612 = vunpack.c.l.b16 %v1541
        %v1613 = vunpack.c.h.b16 %v1541
        %v1614 = vunpack.c.l.b16 %v1542
        %v1615 = vunpack.c.h.b16 %v1542
        %v1616 = vunpack.c.l.b16 %v1543
        %v1617 = vunpack.c.h.b16 %v1543
        %v1618 = vunpack.c.l.b16 %v1544
        %v1619 = vunpack.c.h.b16 %v1544
        %v1620 = vunpack.c.l.b16 %v1545
        %v1621 = vunpack.c.h.b16 %v1545
        %v1622 = vunpack.c.l.b16 %v1546
        %v1623 = vunpack.c.h.b16 %v1546
        %v1624 = vunpack.c.l.b16 %v1547
        %v1625 = vunpack.c.h.b16 %v1547
        %v1626 = vunpack.c.l.b16 %v1548
        %v1627 = vunpack.c.h.b16 %v1548
        %v1628 = vunpack.c.l.b16 %v1549
        %v1629 = vunpack.c.h.b16 %v1549
        %v1630 = vunpack.c.l.b16 %v1550
        %v1631 = vunpack.c.h.b16 %v1550
        %v1632 = vunpack.c.l.b16 %v1551
        %v1633 = vunpack.c.h.b16 %v1551
        %v1634 = vunpack.c.l.b16 %v1552
        %v1635 = vunpack.c.h.b16 %v1552
        %v1636 = vunpack.c.l.b16 %v1553
        %v1637 = vunpack.c.h.b16 %v1553
        %v1638 = vunpack.c.l.b16 %v1554
        %v1639 = vunpack.c.h.b16 %v1554
        %v1640 = vunpack.c.l.b16 %v1555
        %v1641 = vunpack.c.h.b16 %v1555
        %v1642 = vunpack.c.l.b16 %v1556
        %v1643 = vunpack.c.h.b16 %v1556
        %v1644 = vunpack.c.l.b16 %v1557
        %v1645 = vunpack.c.h.b16 %v1557
        %v1646 = vunpack.c.l.b16 %v1558
        %v1647 = vunpack.c.h.b16 %v1558
        %v1648 = vunpack.c.l.b16 %v1559
        %v1649 = vunpack.c.h.b16 %v1559
        %v1650 = vunpack.c.l.b16 %v1560
        %v1651 = vunpack.c.h.b16 %v1560
        %v1652 = vunpack.c.l.b16 %v1561
        %v1653 = vunpack.c.h.b16 %v1561
        %v1654 = vunpack.c.l.b16 %v1562
        %v1655 = vunpack.c.h.b16 %v1562
        %v1656 = vunpack.c.l.b16 %v1563
        %v1657 = vunpack.c.h.b16 %v1563
        %v1658 = vunpack.c.l.b16 %v1564
        %v1659 = vunpack.c.h.b16 %v1564
        %v1660 = vunpack.c.l.b16 %v1565
        %v1661 = vunpack.c.h.b16 %v1565
        %v1662 = vpack.c.b16 %v1600, %v1598
        %v1663 = vpack.c.b16 %v1601, %v1599
        %v1664 = vpack.c.b16 %v1604, %v1602
        %v1665 = vpack.c.b16 %v1605, %v1603
        %v1666 = vpack.c.b16 %v1608, %v1606
        %v1667 = vpack.c.b16 %v1609, %v1607
        %v1668 = vpack.c.b16 %v1612, %v1610
        %v1669 = vpack.c.b16 %v1613, %v1611
        %v1670 = vpack.c.b16 %v1616, %v1614
        %v1671 = vpack.c.b16 %v1617, %v1615
        %v1672 = vpack.c.b16 %v1620, %v1618
        %v1673 = vpack.c.b16 %v1621, %v1619
        %v1674 = vpack.c.b16 %v1624, %v1622
        %v1675 = vpack.c.b16 %v1625, %v1623
        %v1676 = vpack.c.b16 %v1628, %v1626
        %v1677 = vpack.c.b16 %v1629, %v1627
        %v1678 = vpack.c.b16 %v1632, %v1630
        %v1679 = vpack.c.b16 %v1633, %v1631
        %v1680 = vpack.c.b16 %v1636, %v1634
        %v1681 = vpack.c.b16 %v1637, %v1635
        %v1682 = vpack.c.b16 %v1640, %v1638
        %v1683 = vpack.c.b16 %v1641, %v1639
        %v1684 = vpack.c.b16 %v1644, %v1642
        %v1685 = vpack.c.b16 %v1645, %v1643
        %v1686 = vpack.c.b16 %v1648, %v1646
        %v1687 = vpack.c.b16 %v1649, %v1647
        %v1688 = vpack.c.b16 %v1652, %v1650
        %v1689 = vpack.c.b16 %v1653, %v1651
        %v1690 = vpack.c.b16 %v1656, %v1654
        %v1691 = vpack.c.b16 %v1657, %v1655
        %v1692 = vpack.c.b16 %v1660, %v1658
        %v1693 = vpack.c.b16 %v1661, %v1659
        %1726 = vmatprep.subr.bf16.mxu0 %v1663
        %1727 = vmatpush1.bf16.msra.mxu0 %v1662
        %1728 = vmatprep.subr.bf16.mxu0 %v1665
        %1729 = vmatpush1.bf16.msra.mxu0 %v1664
        %1730 = vmatprep.subr.bf16.mxu0 %v1667
        %1731 = vmatpush1.bf16.msra.mxu0 %v1666
        %1732 = vmatprep.subr.bf16.mxu0 %v1669
        %1733 = vmatpush1.bf16.msra.mxu0 %v1668
        %1734 = vmatprep.subr.bf16.mxu0 %v1671
        %1735 = vmatpush1.bf16.msra.mxu0 %v1670
        %1736 = vmatprep.subr.bf16.mxu0 %v1673
        %1737 = vmatpush1.bf16.msra.mxu0 %v1672
        %1738 = vmatprep.subr.bf16.mxu0 %v1675
        %1739 = vmatpush1.bf16.msra.mxu0 %v1674
        %1740 = vmatprep.subr.bf16.mxu0 %v1677
        %1741 = vmatpush1.bf16.msra.mxu0 %v1676
        %1742 = vmatprep.subr.bf16.mxu0 %v1679
        %1743 = vmatpush1.bf16.msra.mxu0 %v1678
        %1744 = vmatprep.subr.bf16.mxu0 %v1681
        %1745 = vmatpush1.bf16.msra.mxu0 %v1680
        %1746 = vmatprep.subr.bf16.mxu0 %v1683
        %1747 = vmatpush1.bf16.msra.mxu0 %v1682
        %1748 = vmatprep.subr.bf16.mxu0 %v1685
        %1749 = vmatpush1.bf16.msra.mxu0 %v1684
        %1750 = vmatprep.subr.bf16.mxu0 %v1687
        %1751 = vmatpush1.bf16.msra.mxu0 %v1686
        %1752 = vmatprep.subr.bf16.mxu0 %v1689
        %1753 = vmatpush1.bf16.msra.mxu0 %v1688
        %1754 = vmatprep.subr.bf16.mxu0 %v1691
        %1755 = vmatpush1.bf16.msra.mxu0 %v1690
        %1756 = vmatprep.subr.bf16.mxu0 %v1693
        %1757 = vmatpush1.bf16.msra.mxu0 %v1692
        %1758 = vmatprep.mubr.bf16.mxu0 %v1527
        %1759 = vmatmul.mubr.bf16.gmra.mrb[0].mxu0 %v1526
        %v1760 = vpop.f32.mrb[0].mxu0
        %v1761 = vadd.f32 0.0, %v1760
        %v1762 = vpop.f32.mrb[0].mxu0
        %v1763 = vadd.f32 0.0, %v1762
        %v1764 = vpop.f32.mrb[0].mxu0
        %v1765 = vadd.f32 0.0, %v1764
        %v1766 = vpop.f32.mrb[0].mxu0
        %v1767 = vadd.f32 0.0, %v1766
        %1768 = vmatprep.mubr.bf16.mxu0 %v1529
        %1769 = vmatmul.mubr.bf16.gmra.mrb[0].mxu0 %v1528
        %v1770 = vpop.f32.mrb[0].mxu0
        %v1771 = vadd.f32 0.0, %v1770
        %v1772 = vpop.f32.mrb[0].mxu0
        %v1773 = vadd.f32 0.0, %v1772
        %v1774 = vpop.f32.mrb[0].mxu0
        %v1775 = vadd.f32 0.0, %v1774
        %v1776 = vpop.f32.mrb[0].mxu0
        %v1777 = vadd.f32 0.0, %v1776
        %1778 = vmatprep.mubr.bf16.mxu0 %v1531
        %1779 = vmatmul.mubr.bf16.gmra.mrb[0].mxu0 %v1530
        %v1780 = vpop.f32.mrb[0].mxu0
        %v1781 = vadd.f32 0.0, %v1780
        %v1782 = vpop.f32.mrb[0].mxu0
        %v1783 = vadd.f32 0.0, %v1782
        %v1784 = vpop.f32.mrb[0].mxu0
        %v1785 = vadd.f32 0.0, %v1784
        %v1786 = vpop.f32.mrb[0].mxu0
        %v1787 = vadd.f32 0.0, %v1786
        %1788 = vmatprep.mubr.bf16.mxu0 %v1533
        %1789 = vmatmul.mubr.bf16.gmra.mrb[0].mxu0 %v1532
        %v1790 = vpop.f32.mrb[0].mxu0
        %v1791 = vadd.f32 0.0, %v1790
        %v1792 = vpop.f32.mrb[0].mxu0
        %v1793 = vadd.f32 0.0, %v1792
        %v1794 = vpop.f32.mrb[0].mxu0
        %v1795 = vadd.f32 0.0, %v1794
        %v1796 = vpop.f32.mrb[0].mxu0
        %v1797 = vadd.f32 0.0, %v1796
        %1798 = vdwg.mxu0
        %v1799 = vadd.f32 %v1510, %v1761
        %v1800 = vadd.f32 %v1511, %v1763
        %v1801 = vadd.f32 %v1512, %v1765
        %v1802 = vadd.f32 %v1513, %v1767
        %v1803 = vadd.f32 %v1514, %v1771
        %v1804 = vadd.f32 %v1515, %v1773
        %v1805 = vadd.f32 %v1516, %v1775
        %v1806 = vadd.f32 %v1517, %v1777
        %v1807 = vadd.f32 %v1518, %v1781
        %v1808 = vadd.f32 %v1519, %v1783
        %v1809 = vadd.f32 %v1520, %v1785
        %v1810 = vadd.f32 %v1521, %v1787
        %v1811 = vadd.f32 %v1522, %v1791
        %v1812 = vadd.f32 %v1523, %v1793
        %v1813 = vadd.f32 %v1524, %v1795
        %v1814 = vadd.f32 %v1525, %v1797
        %1815 = vst [vmem:[#allocation3] sm:$0xff] %v1799
        %1816 = vst [vmem:[#allocation3 + $0x8] sm:$0xff] %v1800
        %1817 = vst [vmem:[#allocation3 + $0x10] sm:$0xff] %v1801
        %1818 = vst [vmem:[#allocation3 + $0x18] sm:$0xff] %v1802
        %1819 = vst [vmem:[#allocation3 + $0x20] sm:$0xff] %v1803
        %1820 = vst [vmem:[#allocation3 + $0x28] sm:$0xff] %v1804
        %1821 = vst [vmem:[#allocation3 + $0x30] sm:$0xff] %v1805
        %1822 = vst [vmem:[#allocation3 + $0x38] sm:$0xff] %v1806
        %1823 = vst [vmem:[#allocation3 + $0x40] sm:$0xff] %v1807
        %1824 = vst [vmem:[#allocation3 + $0x48] sm:$0xff] %v1808
        %1825 = vst [vmem:[#allocation3 + $0x50] sm:$0xff] %v1809
        %1826 = vst [vmem:[#allocation3 + $0x58] sm:$0xff] %v1810
        %1827 = vst [vmem:[#allocation3 + $0x60] sm:$0xff] %v1811
        %1828 = vst [vmem:[#allocation3 + $0x68] sm:$0xff] %v1812
        %1829 = vst [vmem:[#allocation3 + $0x70] sm:$0xff] %v1813
        %1830 = vst [vmem:[#allocation3 + $0x78] sm:$0xff] %v1814
        %p1831 = scmp.eq.s32.totalorder %s26, 1
        // Predicated region
        $region68: #{llama_decoder_layer.7} parent=58 // pred_check
          %p1832 = pneg %p1831
        $region69: #{llama_decoder_layer.7} parent=58 // pred_check_branch
          %1834 = sbr.rel (%p1832) target = $region71
        $region70: #{llama_decoder_layer.7} parent=58 // pred_region
          %v1835 = vld [vmem:[#allocation3] sm:$0xff]
          %v1836 = vld [vmem:[#allocation3 + $0x8] sm:$0xff]
          %v1837 = vld [vmem:[#allocation3 + $0x10] sm:$0xff]
          %v1838 = vld [vmem:[#allocation3 + $0x18] sm:$0xff]
          %v1839 = vld [vmem:[#allocation3 + $0x20] sm:$0xff]
          %v1840 = vld [vmem:[#allocation3 + $0x28] sm:$0xff]
          %v1841 = vld [vmem:[#allocation3 + $0x30] sm:$0xff]
          %v1842 = vld [vmem:[#allocation3 + $0x38] sm:$0xff]
          %v1843 = vld [vmem:[#allocation3 + $0x40] sm:$0xff]
          %v1844 = vld [vmem:[#allocation3 + $0x48] sm:$0xff]
          %v1845 = vld [vmem:[#allocation3 + $0x50] sm:$0xff]
          %v1846 = vld [vmem:[#allocation3 + $0x58] sm:$0xff]
          %v1847 = vld [vmem:[#allocation3 + $0x60] sm:$0xff]
          %v1848 = vld [vmem:[#allocation3 + $0x68] sm:$0xff]
          %v1849 = vld [vmem:[#allocation3 + $0x70] sm:$0xff]
          %v1850 = vld [vmem:[#allocation3 + $0x78] sm:$0xff]
          %v1851 = vld [vmem:[%s484] sm:$0xff]
          %v1852 = vld [vmem:[%s484 + $0x8] sm:$0xff]
          %v1853 = vld [vmem:[%s484 + $0x10] sm:$0xff]
          %v1854 = vld [vmem:[%s484 + $0x18] sm:$0xff]
          %v1855 = vld [vmem:[%s484 + $0x20] sm:$0xff]
          %v1856 = vld [vmem:[%s484 + $0x28] sm:$0xff]
          %v1857 = vld [vmem:[%s484 + $0x30] sm:$0xff]
          %v1858 = vld [vmem:[%s484 + $0x38] sm:$0xff]
          %v1859 = vld [vmem:[%s484 + $0x40] sm:$0xff]
          %v1860 = vld [vmem:[%s484 + $0x48] sm:$0xff]
          %v1861 = vld [vmem:[%s484 + $0x50] sm:$0xff]
          %v1862 = vld [vmem:[%s484 + $0x58] sm:$0xff]
          %v1863 = vld [vmem:[%s484 + $0x60] sm:$0xff]
          %v1864 = vld [vmem:[%s484 + $0x68] sm:$0xff]
          %v1865 = vld [vmem:[%s484 + $0x70] sm:$0xff]
          %v1866 = vld [vmem:[%s484 + $0x78] sm:$0xff]
          %v1867 = vadd.f32 %v1835, %v1851
          %v1868 = vadd.f32 %v1836, %v1852
          %v1869 = vadd.f32 %v1837, %v1853
          %v1870 = vadd.f32 %v1838, %v1854
          %v1871 = vadd.f32 %v1839, %v1855
          %v1872 = vadd.f32 %v1840, %v1856
          %v1873 = vadd.f32 %v1841, %v1857
          %v1874 = vadd.f32 %v1842, %v1858
          %v1875 = vadd.f32 %v1843, %v1859
          %v1876 = vadd.f32 %v1844, %v1860
          %v1877 = vadd.f32 %v1845, %v1861
          %v1878 = vadd.f32 %v1846, %v1862
          %v1879 = vadd.f32 %v1847, %v1863
          %v1880 = vadd.f32 %v1848, %v1864
          %v1881 = vadd.f32 %v1849, %v1865
          %v1882 = vadd.f32 %v1850, %v1866
          %1883 = vst [vmem:[%s463] sm:$0xff] %v1867
          %1884 = vst [vmem:[%s463 + $0x8] sm:$0xff] %v1868
          %1885 = vst [vmem:[%s463 + $0x10] sm:$0xff] %v1869
          %1886 = vst [vmem:[%s463 + $0x18] sm:$0xff] %v1870
          %1887 = vst [vmem:[%s463 + $0x20] sm:$0xff] %v1871
          %1888 = vst [vmem:[%s463 + $0x28] sm:$0xff] %v1872
          %1889 = vst [vmem:[%s463 + $0x30] sm:$0xff] %v1873
          %1890 = vst [vmem:[%s463 + $0x38] sm:$0xff] %v1874
          %1891 = vst [vmem:[%s463 + $0x40] sm:$0xff] %v1875
          %1892 = vst [vmem:[%s463 + $0x48] sm:$0xff] %v1876
          %1893 = vst [vmem:[%s463 + $0x50] sm:$0xff] %v1877
          %1894 = vst [vmem:[%s463 + $0x58] sm:$0xff] %v1878
          %1895 = vst [vmem:[%s463 + $0x60] sm:$0xff] %v1879
          %1896 = vst [vmem:[%s463 + $0x68] sm:$0xff] %v1880
          %1897 = vst [vmem:[%s463 + $0x70] sm:$0xff] %v1881
          %1898 = vst [vmem:[%s463 + $0x78] sm:$0xff] %v1882
        $region71: #{llama_decoder_layer.7} parent=58 // pred_fallthru
          _
        %s1899 = sand.u32 %s177, 1
        %s1900 = scalar_lea.sflag [#allocation6], %s1899
        %s1901 = sand.u32 %s177, 1
        %s1902 = smul.addr %s1901, 128
        %s1903 = scalar_lea.vmem [#allocation5], %s1902
        // Predicated region
        $region72: #{llama_decoder_layer.7} parent=58 // pred_check
          %p1904 = pneg %p187
        $region73: #{llama_decoder_layer.7} parent=58 // pred_check_branch
          %1906 = sbr.rel (%p1904) target = $region75
        $region74: #{llama_decoder_layer.7} parent=58 // pred_region
          %s1907 = smul.u32 8, %s25
          %s1909 = ssub.s32 2048, 2048
          %1910 = vsyncadd %s1900, %s1909
          %s1911 = smul.addr %s1907, 2
          %s1912 = smul.addr %s24, 32
          %s1913 = sadd.s32 %s1911, %s1912
          %s1914 = smul.addr %s1913, 128
          %s1915 = scalar_lea.hbm %s5, %s1914
          %s1916 = sshll.u32 %s1903, 4
          %s1917 = int_to_ptr.vmem [resolvable:$true] %s1916
          %1922 = dma.vmem_to_hbm [thread:$0]  %s1917, 2048, %s1915, %s1900, 256, 256, 16
        $region75: #{llama_decoder_layer.7} parent=58 // pred_fallthru
          _
      $region59: #{llama_decoder_layer.7} parent=5 // pred_fallthru
        _
      %p1923 = scmp.le.s32.totalorder 2, %s14
      // Predicated region
      $region76: #{llama_decoder_layer.7} parent=5 // pred_check
        %p1924 = pneg %p1923
      $region77: #{llama_decoder_layer.7} parent=5 // pred_check_branch
        %1926 = sbr.rel (%p1924) target = $region79
      $region78: #{llama_decoder_layer.7} parent=5 // pred_region
        %s1927 = ssub.s32 %s14, 2
        // Predicated region
        $region80: #{llama_decoder_layer.7} parent=78 // pred_check
          %p1928 = pneg %p193
        $region81: #{llama_decoder_layer.7} parent=78 // pred_check_branch
          %1930 = sbr.rel (%p1928) target = $region83
        $region82: #{llama_decoder_layer.7} parent=78 // pred_region
          %s1931 = sand.u32 %s178, 1
          %s1932 = scalar_lea.sflag [#allocation6], %s1931
          %s1933 = sand.u32 %s178, 1
          %s1934 = smul.addr %s1933, 128
          %s1935 = scalar_lea.vmem [#allocation5], %s1934
          %1936 = dma.done %s1932, 2048
        $region83: #{llama_decoder_layer.7} parent=78 // pred_fallthru
          _
      $region79: #{llama_decoder_layer.7} parent=5 // pred_fallthru
        _
    $region6: #{llama_decoder_layer.7} parent=1 // loop_footer
      %s18 = sadd.s32 1, %s14
    $region7: #{llama_decoder_layer.7} parent=1 // loop_footer_branch
      %13 = sbr.rel target = $region3
    $region8: #{llama_decoder_layer.7} parent=1 // loop_exit
      _
    %1937 = vsyncpa [#allocation6], 1
    %s1938 = scalar_lea.sflag [#allocation6], 1
    %1939 = vsyncpa %s1938, 1

</llo_original>
